<compile_context>
chip_gen: v5e
topology: v5e:2x2
jax: 0.10.0
libtpu: 0.0.40
codegen_flags: <defaults>
</compile_context>

<pallas_src>
import math

import jax
import jax.numpy as jnp
from jax.experimental import pallas as pl
from jax.experimental.pallas import tpu as pltpu

# ----------------------------- configuration ---------------------------------
B = 2              # batch (raise to tens/hundreds per call to approach MXU roofline)
T = 8              # observations per band
NB = 2             # photometric bands (ZTF g, r)
E = 32             # embedding_size
H = 8              # n_harmonics of the time modulation
NH = 4             # attention heads
DH = E // NH
F = 64             # transformer feed-forward width
NUM_LAYERS = 2
TMAX = 1500.0
L = 1 + NB * T     # logical sequence: [CLS] + per-band tokens (= 17)
L_PAD = 24         # padded to 3 x 8 sublanes
SEQ0 = 8           # first band-token row inside a padded per-batch block


# --------------------- packed-operand slab layouts (static) -------------------
def _align(c, a):
    return ((c + a - 1) // a) * a


# bf16 weight slab: stacked along sublanes, every item at lane offset 0, 64 lanes wide.
W_LANES = 64
W_OFF = {}
_c = 0
for _name, _rows in (("A", NB * H), ("Bc", NB * H), ("W", NB * H), ("V", NB * H)):
    _c = _align(_c, 16)
    W_OFF[_name] = _c
    _c += _rows
for _l in range(NUM_LAYERS):
    for _name, _rows in ((f"wq{_l}", E), (f"wk{_l}", E), (f"wv{_l}", E),
                         (f"wo{_l}", E), (f"w1{_l}", E), (f"w2{_l}", F)):
        _c = _align(_c, 16)
        W_OFF[_name] = _c
        _c += _rows
W_ROWS = _align(_c, 16)

# f32 misc slab: 1-row vectors (token, per-band wproj, head masks, biases, LN params).
P_LANES = 64
P_OFF = {}
_c = 0
for _name, _rows in ([("token", 1), ("wproj", NB), ("hmask", NH)] +
                     [(f"{n}{l}", 1) for l in range(NUM_LAYERS)
                      for n in ("bq", "bk", "bv", "bo", "b1", "b2",
                                "ln1g", "ln1b", "ln2g", "ln2b")]):
    P_OFF[_name] = _c
    _c += _rows
P_ROWS = _align(_c, 8)

# f32 input slab: per-band FiLM phases / fluxes + additive key-padding bias.
I_LANES = L_PAD
I_OFF = {"arg0": 0, "arg1": B * T, "x0": 2 * B * T, "x1": 3 * B * T,
         "kbias": 4 * B * T}
I_ROWS = _align(4 * B * T + B, 8)


# ---------------------- fused forward kernel (single call) -------------------
def _fused_forward_kernel(inp_ref, w_ref, p_ref, out_ref, x_scr):
    f32, bf16 = jnp.float32, jnp.bfloat16

    def prow(name, width=E, off=0):
        r = P_OFF[name] + off
        return p_ref[r:r + 1, 0:width]                       # (1, width) f32

    def wblk(name, rows, off=0, width=E):
        r = W_OFF[name] + off
        return w_ref[r:r + rows, 0:width]                    # (rows, width) bf16

    # ------------------------- TimeHandlerMOD (FiLM) --------------------------
    xm = []
    for nb in range(NB):
        r = I_OFF[f"arg{nb}"]
        arg = inp_ref[r:r + B * T, 0:H]                      # (B*T, H) f32 (= t * n_k)
        r = I_OFF[f"x{nb}"]
        xcol = inp_ref[r:r + B * T, 0:1]                     # (B*T, 1) f32
        s = jnp.sin(arg).astype(bf16)
        c = jnp.cos(arg).astype(bf16)
        # four lane-offset-0 matmuls (no [gamma|beta] lane carve-outs)
        gamma = (jnp.dot(s, wblk("A", H, nb * H), preferred_element_type=f32) +
                 jnp.dot(c, wblk("Bc", H, nb * H), preferred_element_type=f32))
        beta = (jnp.dot(s, wblk("W", H, nb * H), preferred_element_type=f32) +
                jnp.dot(c, wblk("V", H, nb * H), preferred_element_type=f32))
        h = xcol * prow("wproj", E, nb)                      # Linear(1 -> E), no bias
        xm.append(gamma * h + beta)                          # (B*T, E) f32

    # --------------- [CLS] token slab built with aligned stores in VMEM --------
    x_scr[...] = jnp.zeros((B * L_PAD, E), f32)
    tok = prow("token")
    for b in range(B):
        x_scr[b * L_PAD:b * L_PAD + 1, :] = tok
        for nb in range(NB):
            dst = b * L_PAD + SEQ0 + nb * T
            x_scr[dst:dst + T, :] = xm[nb][b * T:(b + 1) * T, :]
    x = x_scr[...]                                           # (B*L_PAD, E) f32

    kbias = [inp_ref[I_OFF["kbias"] + b:I_OFF["kbias"] + b + 1, 0:L_PAD]
             for b in range(B)]                              # (1, L_PAD) additive bias
    hmask = [prow("hmask", E, hh) for hh in range(NH)]       # (1, E) head lane masks

    def layer_norm(v, g, bt):                                # one-pass E[x^2]-E[x]^2
        mu = jnp.mean(v, axis=-1, keepdims=True)
        var = jnp.maximum(jnp.mean(v * v, axis=-1, keepdims=True) - mu * mu, 0.0)
        return (v - mu) * jax.lax.rsqrt(var + 1e-5) * g + bt

    # --------------- transformer encoder layers (post-norm, unrolled) ---------
    for l in range(NUM_LAYERS):
        xb = x.astype(bf16)
        # three (E,E) projections; 1/sqrt(d_h) folded into wq/bq at pack time.
        q = jnp.dot(xb, wblk(f"wq{l}", E), preferred_element_type=f32) + prow(f"bq{l}")
        k = jnp.dot(xb, wblk(f"wk{l}", E), preferred_element_type=f32) + prow(f"bk{l}")
        v = jnp.dot(xb, wblk(f"wv{l}", E), preferred_element_type=f32) + prow(f"bv{l}")

        ctx_parts = []
        for b in range(B):                                   # B = 2, unrolled
            sl = slice(b * L_PAD, (b + 1) * L_PAD)
            kb = k[sl, :].astype(bf16)                       # cast once per batch
            vb = v[sl, :].astype(bf16)
            qb = q[sl, :]
            # head-masked queries stacked along sublanes: (NH*L_PAD, E)
            qh = jnp.concatenate([qb * hm for hm in hmask], axis=0).astype(bf16)
            # ONE scores matmul (contract lane dims; K handled once, not per head)
            sc = jax.lax.dot_general(qh, kb, (((1,), (1,)), ((), ())),
                                     preferred_element_type=f32) + kbias[b]
            # ONE softmax over the whole (NH*L_PAD, L_PAD) slab (rows stay per-head)
            sc = sc - jnp.max(sc, axis=-1, keepdims=True)
            pr = jnp.exp(sc)
            pr = pr * pl.reciprocal(jnp.sum(pr, axis=-1, keepdims=True), approx=True)
            # ONE P @ V matmul, then fold head rows back with lane masks (VPU only)
            ctx_h = jnp.dot(pr.astype(bf16), vb, preferred_element_type=f32)
            ctx = ctx_h[0:L_PAD, :] * hmask[0]
            for hh in range(1, NH):
                ctx = ctx + ctx_h[hh * L_PAD:(hh + 1) * L_PAD, :] * hmask[hh]
            ctx_parts.append(ctx)
        ctx_all = jnp.concatenate(ctx_parts, axis=0)         # (B*L_PAD, E)

        attn = jnp.dot(ctx_all.astype(bf16), wblk(f"wo{l}", E),
                       preferred_element_type=f32) + prow(f"bo{l}")
        y = layer_norm(x + attn, prow(f"ln1g{l}"), prow(f"ln1b{l}"))

        ff = jnp.maximum(
            jnp.dot(y.astype(bf16), wblk(f"w1{l}", E, 0, F),
                    preferred_element_type=f32) + prow(f"b1{l}", F), 0.0)
        ff = jnp.dot(ff.astype(bf16), wblk(f"w2{l}", F, 0, E),
                     preferred_element_type=f32) + prow(f"b2{l}")
        x = layer_norm(y + ff, prow(f"ln2g{l}"), prow(f"ln2b{l}"))

    # ------------------------------ [CLS] readout -----------------------------
    for b in range(B):
        out_ref[b:b + 1, :] = x[b * L_PAD:b * L_PAD + 1, :]


# ------------------------------ full forward pass -----------------------------
@jax.jit
def light_curve_transformer_forward(data, times, mask, wslab, pslab):
    """data/times: (B, T, NB) float; mask: (B, T, NB) bool (True = observed)."""
    assert data.shape == (B, T, NB)
    f32 = jnp.float32
    n = (2.0 * jnp.pi * jnp.arange(1, H + 1, dtype=f32) / TMAX)[None, :]    # (1, H)

    # pack per-band FiLM inputs + key-padding bias into one f32 slab (one DMA)
    inp = jnp.zeros((I_ROWS, I_LANES), f32)
    for nb in range(NB):
        t_b = times[:, :, nb].reshape(B * T, 1).astype(f32)
        x_b = data[:, :, nb].reshape(B * T, 1).astype(f32)
        inp = inp.at[I_OFF[f"arg{nb}"]:I_OFF[f"arg{nb}"] + B * T, 0:H].set(t_b * n)
        inp = inp.at[I_OFF[f"x{nb}"]:I_OFF[f"x{nb}"] + B * T, 0:1].set(x_b)

    # additive key bias laid out like the padded token slab:
    #   CLS -> 0, pad rows -> -1e9, band rows -> 0 if observed else -1e9
    kbias = jnp.full((B, L_PAD), -1e9, f32)
    kbias = kbias.at[:, 0].set(0.0)
    for nb in range(NB):
        kbias = kbias.at[:, SEQ0 + nb * T:SEQ0 + (nb + 1) * T].set(
            (mask[:, :, nb].astype(f32) - 1.0) * 1e9)
    inp = inp.at[I_OFF["kbias"]:I_OFF["kbias"] + B, 0:L_PAD].set(kbias)

    return pl.pallas_call(
        _fused_forward_kernel,
        out_shape=jax.ShapeDtypeStruct((B, E), jnp.float32),
        scratch_shapes=[pltpu.VMEM((B * L_PAD, E), jnp.float32)],
    )(inp, wslab, pslab)


# --------------------------- parameter packing --------------------------------
def pack_params(p):
    """Pack all parameters into one bf16 weight slab + one f32 misc slab."""
    scale = 1.0 / math.sqrt(DH)

    w = jnp.zeros((W_ROWS, W_LANES), jnp.float32)

    def wput(slab, name, off, mat):
        r = W_OFF[name] + off
        return slab.at[r:r + mat.shape[0], 0:mat.shape[1]].set(mat)

    for nb in range(NB):
        w = wput(w, "A", nb * H, p["A"][nb])
        w = wput(w, "Bc", nb * H, p["Bc"][nb])
        w = wput(w, "W", nb * H, p["W"][nb])
        w = wput(w, "V", nb * H, p["V"][nb])
    for l in range(NUM_LAYERS):
        w = wput(w, f"wq{l}", 0, p["wq"][l] * scale)   # fold 1/sqrt(d_h)
        w = wput(w, f"wk{l}", 0, p["wk"][l])
        w = wput(w, f"wv{l}", 0, p["wv"][l])
        w = wput(w, f"wo{l}", 0, p["wo"][l])
        w = wput(w, f"w1{l}", 0, p["w1"][l])
        w = wput(w, f"w2{l}", 0, p["w2"][l])
    wslab = w.astype(jnp.bfloat16)

    ps = jnp.zeros((P_ROWS, P_LANES), jnp.float32)

    def pput(slab, name, off, vec):
        r = P_OFF[name] + off
        vec = vec.reshape(1, -1)
        return slab.at[r:r + 1, 0:vec.shape[1]].set(vec)

    ps = pput(ps, "token", 0, p["token"])
    for nb in range(NB):
        ps = pput(ps, "wproj", nb, p["wproj"][nb])
    for hh in range(NH):
        ps = pput(ps, "hmask", hh, (jnp.arange(E) // DH == hh).astype(jnp.float32))
    for l in range(NUM_LAYERS):
        ps = pput(ps, f"bq{l}", 0, p["bq"][l] * scale)     # fold 1/sqrt(d_h)
        ps = pput(ps, f"bk{l}", 0, p["bk"][l])
        ps = pput(ps, f"bv{l}", 0, p["bv"][l])
        ps = pput(ps, f"bo{l}", 0, p["bo"][l])
        ps = pput(ps, f"b1{l}", 0, p["b1"][l])
        ps = pput(ps, f"b2{l}", 0, p["b2"][l])
        ps = pput(ps, f"ln1g{l}", 0, p["ln1g"][l])
        ps = pput(ps, f"ln1b{l}", 0, p["ln1b"][l])
        ps = pput(ps, f"ln2g{l}", 0, p["ln2g"][l])
        ps = pput(ps, f"ln2b{l}", 0, p["ln2b"][l])
    return wslab, ps


# ------------------------------ deterministic init ----------------------------
def init_params(key):
    counter = [0]

    def nrm(shape, scale=1.0):
        counter[0] += 1
        k = jax.random.fold_in(key, counter[0])
        return (scale * jax.random.normal(k, shape)).astype(jnp.float32)

    ws = 1.0 / math.sqrt(E)
    zE = jnp.zeros((NUM_LAYERS, E), jnp.float32)
    return {
        # TimeFilm (per band)
        "A": nrm((NB, H, E), 0.2), "Bc": nrm((NB, H, E), 0.2),
        "W": nrm((NB, H, E), 0.2), "V": nrm((NB, H, E), 0.2),
        "wproj": nrm((NB, E), 0.5),
        # Token
        "token": nrm((1, E), 1.0),
        # Transformer encoder layers
        "wq": nrm((NUM_LAYERS, E, E), ws), "wk": nrm((NUM_LAYERS, E, E), ws),
        "wv": nrm((NUM_LAYERS, E, E), ws), "wo": nrm((NUM_LAYERS, E, E), ws),
        "bq": zE, "bk": zE, "bv": zE, "bo": zE,
        "w1": nrm((NUM_LAYERS, E, F), ws),
        "b1": jnp.zeros((NUM_LAYERS, F), jnp.float32),
        "w2": nrm((NUM_LAYERS, F, E), 1.0 / math.sqrt(F)),
        "b2": zE,
        "ln1g": jnp.ones((NUM_LAYERS, E), jnp.float32), "ln1b": zE,
        "ln2g": jnp.ones((NUM_LAYERS, E), jnp.float32), "ln2b": zE,
    }


# ------------------------------------ main ------------------------------------
if __name__ == "__main__":
    root = jax.random.PRNGKey(0)
    kd, kt, km, kp = jax.random.split(root, 4)

    data = jax.random.normal(kd, (B, T, NB), dtype=jnp.float32)        # fluxes
    times = jnp.sort(jax.random.uniform(kt, (B, T, NB), dtype=jnp.float32,
                                        minval=0.0, maxval=TMAX), axis=1)
    mask = jax.random.uniform(km, (B, T, NB)) > 0.2                    # True = observed

    params = init_params(kp)
    wslab, pslab = pack_params(params)                                 # packed once

    out = light_curve_transformer_forward(data, times, mask, wslab, pslab)
    out = jax.block_until_ready(out)

    assert out.shape == (B, E), out.shape
    assert bool(jnp.all(jnp.isfinite(out)))
    print("KERNEL_OK")
</pallas_src>

<mosaic_0001>
module attributes {stable_mosaic.version = 11 : i64} {
  func.func @_fused_forward_kernel(%arg0: memref<72x24xf32, #tpu.memory_space<vmem>>, %arg1: memref<512x64xbf16, #tpu.memory_space<vmem>>, %arg2: memref<32x64xf32, #tpu.memory_space<vmem>>, %arg3: memref<2x32xf32, #tpu.memory_space<vmem>>, %arg4: memref<48x32xf32, #tpu.memory_space<vmem>>) attributes {dimension_semantics = [], scalar_prefetch = 0 : i64, scratch_operands = 1 : i64, tpu.core_type = #tpu.core_type<tc>} {
    %c0 = arith.constant 0 : index
    %c0_0 = arith.constant 0 : index
    %0 = vector.load %arg0[%c0, %c0_0] : memref<72x24xf32, #tpu.memory_space<vmem>>, vector<16x8xf32>
    %c32 = arith.constant 32 : index
    %c0_1 = arith.constant 0 : index
    %1 = vector.load %arg0[%c32, %c0_1] : memref<72x24xf32, #tpu.memory_space<vmem>>, vector<16x1xf32>
    %2 = math.sin %0 : vector<16x8xf32>
    %3 = arith.truncf %2 : vector<16x8xf32> to vector<16x8xbf16>
    %4 = math.cos %0 : vector<16x8xf32>
    %5 = arith.truncf %4 : vector<16x8xf32> to vector<16x8xbf16>
    %c0_2 = arith.constant 0 : index
    %c0_3 = arith.constant 0 : index
    %6 = vector.load %arg1[%c0_2, %c0_3] : memref<512x64xbf16, #tpu.memory_space<vmem>>, vector<8x32xbf16>
    %cst = arith.constant dense<0.000000e+00> : vector<16x32xf32>
    %7 = tpu.matmul %3, %6, %cst {dimension_numbers = #tpu.dot_dimension_numbers<[1], [0], [0], [1], [0, 0, 1, 1], [], []>} : vector<16x8xbf16>, vector<8x32xbf16>, vector<16x32xf32> -> vector<16x32xf32>
    %c16 = arith.constant 16 : index
    %c0_4 = arith.constant 0 : index
    %8 = vector.load %arg1[%c16, %c0_4] : memref<512x64xbf16, #tpu.memory_space<vmem>>, vector<8x32xbf16>
    %cst_5 = arith.constant dense<0.000000e+00> : vector<16x32xf32>
    %9 = tpu.matmul %5, %8, %cst_5 {dimension_numbers = #tpu.dot_dimension_numbers<[1], [0], [0], [1], [0, 0, 1, 1], [], []>} : vector<16x8xbf16>, vector<8x32xbf16>, vector<16x32xf32> -> vector<16x32xf32>
    %10 = arith.addf %7, %9 : vector<16x32xf32>
    %c32_6 = arith.constant 32 : index
    %c0_7 = arith.constant 0 : index
    %11 = vector.load %arg1[%c32_6, %c0_7] : memref<512x64xbf16, #tpu.memory_space<vmem>>, vector<8x32xbf16>
    %cst_8 = arith.constant dense<0.000000e+00> : vector<16x32xf32>
    %12 = tpu.matmul %3, %11, %cst_8 {dimension_numbers = #tpu.dot_dimension_numbers<[1], [0], [0], [1], [0, 0, 1, 1], [], []>} : vector<16x8xbf16>, vector<8x32xbf16>, vector<16x32xf32> -> vector<16x32xf32>
    %c48 = arith.constant 48 : index
    %c0_9 = arith.constant 0 : index
    %13 = vector.load %arg1[%c48, %c0_9] : memref<512x64xbf16, #tpu.memory_space<vmem>>, vector<8x32xbf16>
    %cst_10 = arith.constant dense<0.000000e+00> : vector<16x32xf32>
    %14 = tpu.matmul %5, %13, %cst_10 {dimension_numbers = #tpu.dot_dimension_numbers<[1], [0], [0], [1], [0, 0, 1, 1], [], []>} : vector<16x8xbf16>, vector<8x32xbf16>, vector<16x32xf32> -> vector<16x32xf32>
    %15 = arith.addf %12, %14 : vector<16x32xf32>
    %c1 = arith.constant 1 : index
    %c0_11 = arith.constant 0 : index
    %16 = vector.load %arg2[%c1, %c0_11] : memref<32x64xf32, #tpu.memory_space<vmem>>, vector<1x32xf32>
    %17 = vector.broadcast %1 : vector<16x1xf32> to vector<16x32xf32>
    %18 = vector.broadcast %16 : vector<1x32xf32> to vector<16x32xf32>
    %19 = arith.mulf %17, %18 : vector<16x32xf32>
    %20 = arith.mulf %10, %19 : vector<16x32xf32>
    %21 = arith.addf %20, %15 : vector<16x32xf32>
    %c16_12 = arith.constant 16 : index
    %c0_13 = arith.constant 0 : index
    %22 = vector.load %arg0[%c16_12, %c0_13] : memref<72x24xf32, #tpu.memory_space<vmem>>, vector<16x8xf32>
    %c48_14 = arith.constant 48 : index
    %c0_15 = arith.constant 0 : index
    %23 = vector.load %arg0[%c48_14, %c0_15] : memref<72x24xf32, #tpu.memory_space<vmem>>, vector<16x1xf32>
    %24 = math.sin %22 : vector<16x8xf32>
    %25 = arith.truncf %24 : vector<16x8xf32> to vector<16x8xbf16>
    %26 = math.cos %22 : vector<16x8xf32>
    %27 = arith.truncf %26 : vector<16x8xf32> to vector<16x8xbf16>
    %c8 = arith.constant 8 : index
    %c0_16 = arith.constant 0 : index
    %28 = vector.load %arg1[%c8, %c0_16] : memref<512x64xbf16, #tpu.memory_space<vmem>>, vector<8x32xbf16>
    %cst_17 = arith.constant dense<0.000000e+00> : vector<16x32xf32>
    %29 = tpu.matmul %25, %28, %cst_17 {dimension_numbers = #tpu.dot_dimension_numbers<[1], [0], [0], [1], [0, 0, 1, 1], [], []>} : vector<16x8xbf16>, vector<8x32xbf16>, vector<16x32xf32> -> vector<16x32xf32>
    %c24 = arith.constant 24 : index
    %c0_18 = arith.constant 0 : index
    %30 = vector.load %arg1[%c24, %c0_18] : memref<512x64xbf16, #tpu.memory_space<vmem>>, vector<8x32xbf16>
    %cst_19 = arith.constant dense<0.000000e+00> : vector<16x32xf32>
    %31 = tpu.matmul %27, %30, %cst_19 {dimension_numbers = #tpu.dot_dimension_numbers<[1], [0], [0], [1], [0, 0, 1, 1], [], []>} : vector<16x8xbf16>, vector<8x32xbf16>, vector<16x32xf32> -> vector<16x32xf32>
    %32 = arith.addf %29, %31 : vector<16x32xf32>
    %c40 = arith.constant 40 : index
    %c0_20 = arith.constant 0 : index
    %33 = vector.load %arg1[%c40, %c0_20] : memref<512x64xbf16, #tpu.memory_space<vmem>>, vector<8x32xbf16>
    %cst_21 = arith.constant dense<0.000000e+00> : vector<16x32xf32>
    %34 = tpu.matmul %25, %33, %cst_21 {dimension_numbers = #tpu.dot_dimension_numbers<[1], [0], [0], [1], [0, 0, 1, 1], [], []>} : vector<16x8xbf16>, vector<8x32xbf16>, vector<16x32xf32> -> vector<16x32xf32>
    %c56 = arith.constant 56 : index
    %c0_22 = arith.constant 0 : index
    %35 = vector.load %arg1[%c56, %c0_22] : memref<512x64xbf16, #tpu.memory_space<vmem>>, vector<8x32xbf16>
    %cst_23 = arith.constant dense<0.000000e+00> : vector<16x32xf32>
    %36 = tpu.matmul %27, %35, %cst_23 {dimension_numbers = #tpu.dot_dimension_numbers<[1], [0], [0], [1], [0, 0, 1, 1], [], []>} : vector<16x8xbf16>, vector<8x32xbf16>, vector<16x32xf32> -> vector<16x32xf32>
    %37 = arith.addf %34, %36 : vector<16x32xf32>
    %c2 = arith.constant 2 : index
    %c0_24 = arith.constant 0 : index
    %38 = vector.load %arg2[%c2, %c0_24] : memref<32x64xf32, #tpu.memory_space<vmem>>, vector<1x32xf32>
    %39 = vector.broadcast %23 : vector<16x1xf32> to vector<16x32xf32>
    %40 = vector.broadcast %38 : vector<1x32xf32> to vector<16x32xf32>
    %41 = arith.mulf %39, %40 : vector<16x32xf32>
    %42 = arith.mulf %32, %41 : vector<16x32xf32>
    %43 = arith.addf %42, %37 : vector<16x32xf32>
    %cst_25 = arith.constant 0.000000e+00 : f32
    %44 = vector.broadcast %cst_25 : f32 to vector<48x32xf32>
    %c0_26 = arith.constant 0 : index
    %c0_27 = arith.constant 0 : index
    %45 = vector.load %arg4[%c0_26, %c0_27] : memref<48x32xf32, #tpu.memory_space<vmem>>, vector<48x32xf32>
    tpu.vector_store %arg4[%c0_26, %c0_27], %44 {strides = array<i32>} : memref<48x32xf32, #tpu.memory_space<vmem>>, vector<48x32xf32>,
    %c0_28 = arith.constant 0 : index
    %c0_29 = arith.constant 0 : index
    %46 = vector.load %arg2[%c0_28, %c0_29] : memref<32x64xf32, #tpu.memory_space<vmem>>, vector<1x32xf32>
    %c0_30 = arith.constant 0 : index
    %c0_31 = arith.constant 0 : index
    %47 = vector.load %arg4[%c0_30, %c0_31] : memref<48x32xf32, #tpu.memory_space<vmem>>, vector<1x32xf32>
    tpu.vector_store %arg4[%c0_30, %c0_31], %46 {strides = array<i32>} : memref<48x32xf32, #tpu.memory_space<vmem>>, vector<1x32xf32>,
    %48 = vector.extract_strided_slice %21 {offsets = [0, 0], sizes = [8, 32], strides = [1, 1]} : vector<16x32xf32> to vector<8x32xf32>
    %c8_32 = arith.constant 8 : index
    %c0_33 = arith.constant 0 : index
    %49 = vector.load %arg4[%c8_32, %c0_33] : memref<48x32xf32, #tpu.memory_space<vmem>>, vector<8x32xf32>
    tpu.vector_store %arg4[%c8_32, %c0_33], %48 {strides = array<i32>} : memref<48x32xf32, #tpu.memory_space<vmem>>, vector<8x32xf32>,
    %50 = vector.extract_strided_slice %43 {offsets = [0, 0], sizes = [8, 32], strides = [1, 1]} : vector<16x32xf32> to vector<8x32xf32>
    %c16_34 = arith.constant 16 : index
    %c0_35 = arith.constant 0 : index
    %51 = vector.load %arg4[%c16_34, %c0_35] : memref<48x32xf32, #tpu.memory_space<vmem>>, vector<8x32xf32>
    tpu.vector_store %arg4[%c16_34, %c0_35], %50 {strides = array<i32>} : memref<48x32xf32, #tpu.memory_space<vmem>>, vector<8x32xf32>,
    %c24_36 = arith.constant 24 : index
    %c0_37 = arith.constant 0 : index
    %52 = vector.load %arg4[%c24_36, %c0_37] : memref<48x32xf32, #tpu.memory_space<vmem>>, vector<1x32xf32>
    tpu.vector_store %arg4[%c24_36, %c0_37], %46 {strides = array<i32>} : memref<48x32xf32, #tpu.memory_space<vmem>>, vector<1x32xf32>,
    %53 = vector.extract_strided_slice %21 {offsets = [8, 0], sizes = [8, 32], strides = [1, 1]} : vector<16x32xf32> to vector<8x32xf32>
    %c32_38 = arith.constant 32 : index
    %c0_39 = arith.constant 0 : index
    %54 = vector.load %arg4[%c32_38, %c0_39] : memref<48x32xf32, #tpu.memory_space<vmem>>, vector<8x32xf32>
    tpu.vector_store %arg4[%c32_38, %c0_39], %53 {strides = array<i32>} : memref<48x32xf32, #tpu.memory_space<vmem>>, vector<8x32xf32>,
    %55 = vector.extract_strided_slice %43 {offsets = [8, 0], sizes = [8, 32], strides = [1, 1]} : vector<16x32xf32> to vector<8x32xf32>
    %c40_40 = arith.constant 40 : index
    %c0_41 = arith.constant 0 : index
    %56 = vector.load %arg4[%c40_40, %c0_41] : memref<48x32xf32, #tpu.memory_space<vmem>>, vector<8x32xf32>
    tpu.vector_store %arg4[%c40_40, %c0_41], %55 {strides = array<i32>} : memref<48x32xf32, #tpu.memory_space<vmem>>, vector<8x32xf32>,
    %c0_42 = arith.constant 0 : index
    %c0_43 = arith.constant 0 : index
    %57 = vector.load %arg4[%c0_42, %c0_43] : memref<48x32xf32, #tpu.memory_space<vmem>>, vector<48x32xf32>
    %c64 = arith.constant 64 : index
    %c0_44 = arith.constant 0 : index
    %58 = vector.load %arg0[%c64, %c0_44] : memref<72x24xf32, #tpu.memory_space<vmem>>, vector<1x24xf32>
    %c65 = arith.constant 65 : index
    %c0_45 = arith.constant 0 : index
    %59 = vector.load %arg0[%c65, %c0_45] : memref<72x24xf32, #tpu.memory_space<vmem>>, vector<1x24xf32>
    %c3 = arith.constant 3 : index
    %c0_46 = arith.constant 0 : index
    %60 = vector.load %arg2[%c3, %c0_46] : memref<32x64xf32, #tpu.memory_space<vmem>>, vector<1x32xf32>
    %c4 = arith.constant 4 : index
    %c0_47 = arith.constant 0 : index
    %61 = vector.load %arg2[%c4, %c0_47] : memref<32x64xf32, #tpu.memory_space<vmem>>, vector<1x32xf32>
    %c5 = arith.constant 5 : index
    %c0_48 = arith.constant 0 : index
    %62 = vector.load %arg2[%c5, %c0_48] : memref<32x64xf32, #tpu.memory_space<vmem>>, vector<1x32xf32>
    %c6 = arith.constant 6 : index
    %c0_49 = arith.constant 0 : index
    %63 = vector.load %arg2[%c6, %c0_49] : memref<32x64xf32, #tpu.memory_space<vmem>>, vector<1x32xf32>
    %64 = arith.truncf %57 : vector<48x32xf32> to vector<48x32xbf16>
    %c64_50 = arith.constant 64 : index
    %c0_51 = arith.constant 0 : index
    %65 = vector.load %arg1[%c64_50, %c0_51] : memref<512x64xbf16, #tpu.memory_space<vmem>>, vector<32x32xbf16>
    %cst_52 = arith.constant dense<0.000000e+00> : vector<48x32xf32>
    %66 = tpu.matmul %64, %65, %cst_52 {dimension_numbers = #tpu.dot_dimension_numbers<[1], [0], [0], [1], [0, 0, 1, 1], [], []>} : vector<48x32xbf16>, vector<32x32xbf16>, vector<48x32xf32> -> vector<48x32xf32>
    %c7 = arith.constant 7 : index
    %c0_53 = arith.constant 0 : index
    %67 = vector.load %arg2[%c7, %c0_53] : memref<32x64xf32, #tpu.memory_space<vmem>>, vector<1x32xf32>
    %68 = vector.broadcast %67 : vector<1x32xf32> to vector<48x32xf32>
    %69 = arith.addf %66, %68 : vector<48x32xf32>
    %c96 = arith.constant 96 : index
    %c0_54 = arith.constant 0 : index
    %70 = vector.load %arg1[%c96, %c0_54] : memref<512x64xbf16, #tpu.memory_space<vmem>>, vector<32x32xbf16>
    %cst_55 = arith.constant dense<0.000000e+00> : vector<48x32xf32>
    %71 = tpu.matmul %64, %70, %cst_55 {dimension_numbers = #tpu.dot_dimension_numbers<[1], [0], [0], [1], [0, 0, 1, 1], [], []>} : vector<48x32xbf16>, vector<32x32xbf16>, vector<48x32xf32> -> vector<48x32xf32>
    %c8_56 = arith.constant 8 : index
    %c0_57 = arith.constant 0 : index
    %72 = vector.load %arg2[%c8_56, %c0_57] : memref<32x64xf32, #tpu.memory_space<vmem>>, vector<1x32xf32>
    %73 = vector.broadcast %72 : vector<1x32xf32> to vector<48x32xf32>
    %74 = arith.addf %71, %73 : vector<48x32xf32>
    %c128 = arith.constant 128 : index
    %c0_58 = arith.constant 0 : index
    %75 = vector.load %arg1[%c128, %c0_58] : memref<512x64xbf16, #tpu.memory_space<vmem>>, vector<32x32xbf16>
    %cst_59 = arith.constant dense<0.000000e+00> : vector<48x32xf32>
    %76 = tpu.matmul %64, %75, %cst_59 {dimension_numbers = #tpu.dot_dimension_numbers<[1], [0], [0], [1], [0, 0, 1, 1], [], []>} : vector<48x32xbf16>, vector<32x32xbf16>, vector<48x32xf32> -> vector<48x32xf32>
    %c9 = arith.constant 9 : index
    %c0_60 = arith.constant 0 : index
    %77 = vector.load %arg2[%c9, %c0_60] : memref<32x64xf32, #tpu.memory_space<vmem>>, vector<1x32xf32>
    %78 = vector.broadcast %77 : vector<1x32xf32> to vector<48x32xf32>
    %79 = arith.addf %76, %78 : vector<48x32xf32>
    %80 = vector.extract_strided_slice %74 {offsets = [0, 0], sizes = [24, 32], strides = [1, 1]} : vector<48x32xf32> to vector<24x32xf32>
    %81 = arith.truncf %80 : vector<24x32xf32> to vector<24x32xbf16>
    %82 = vector.extract_strided_slice %79 {offsets = [0, 0], sizes = [24, 32], strides = [1, 1]} : vector<48x32xf32> to vector<24x32xf32>
    %83 = arith.truncf %82 : vector<24x32xf32> to vector<24x32xbf16>
    %84 = vector.extract_strided_slice %69 {offsets = [0, 0], sizes = [24, 32], strides = [1, 1]} : vector<48x32xf32> to vector<24x32xf32>
    %85 = vector.broadcast %60 : vector<1x32xf32> to vector<24x32xf32>
    %86 = arith.mulf %84, %85 : vector<24x32xf32>
    %87 = vector.broadcast %61 : vector<1x32xf32> to vector<24x32xf32>
    %88 = arith.mulf %84, %87 : vector<24x32xf32>
    %89 = vector.broadcast %62 : vector<1x32xf32> to vector<24x32xf32>
    %90 = arith.mulf %84, %89 : vector<24x32xf32>
    %91 = vector.broadcast %63 : vector<1x32xf32> to vector<24x32xf32>
    %92 = arith.mulf %84, %91 : vector<24x32xf32>
    %93 = tpu.concatenate %86, %88, %90, %92 in 0 : vector<24x32xf32>, vector<24x32xf32>, vector<24x32xf32>, vector<24x32xf32> -> vector<96x32xf32>
    %94 = arith.truncf %93 : vector<96x32xf32> to vector<96x32xbf16>
    %cst_61 = arith.constant dense<0.000000e+00> : vector<96x24xf32>
    %95 = tpu.matmul %94, %81, %cst_61 {dimension_numbers = #tpu.dot_dimension_numbers<[1], [1], [0], [0], [0, 0, 1, 0], [], []>} : vector<96x32xbf16>, vector<24x32xbf16>, vector<96x24xf32> -> vector<96x24xf32>
    %96 = vector.broadcast %58 : vector<1x24xf32> to vector<96x24xf32>
    %97 = arith.addf %95, %96 : vector<96x24xf32>
    %cst_62 = arith.constant dense<0xFF800000> : vector<96xf32>
    %98 = vector.multi_reduction <maximumf>, %97, %cst_62 [1] : vector<96x24xf32> to vector<96xf32>
    %99 = vector.shape_cast %98 : vector<96xf32> to vector<96x1xf32>
    %100 = vector.broadcast %99 : vector<96x1xf32> to vector<96x24xf32>
    %101 = arith.subf %97, %100 : vector<96x24xf32>
    %102 = math.exp %101 : vector<96x24xf32>
    %cst_63 = arith.constant dense<0.000000e+00> : vector<96xf32>
    %103 = vector.multi_reduction <add>, %102, %cst_63 [1] : vector<96x24xf32> to vector<96xf32>
    %104 = vector.shape_cast %103 : vector<96xf32> to vector<96x1xf32>
    %105 = tpu.reciprocal %104 {approx = true} : vector<96x1xf32> -> vector<96x1xf32>
    %106 = vector.broadcast %105 : vector<96x1xf32> to vector<96x24xf32>
    %107 = arith.mulf %102, %106 : vector<96x24xf32>
    %108 = arith.truncf %107 : vector<96x24xf32> to vector<96x24xbf16>
    %cst_64 = arith.constant dense<0.000000e+00> : vector<96x32xf32>
    %109 = tpu.matmul %108, %83, %cst_64 {dimension_numbers = #tpu.dot_dimension_numbers<[1], [0], [0], [1], [0, 0, 1, 1], [], []>} : vector<96x24xbf16>, vector<24x32xbf16>, vector<96x32xf32> -> vector<96x32xf32>
    %110 = vector.extract_strided_slice %109 {offsets = [0, 0], sizes = [24, 32], strides = [1, 1]} : vector<96x32xf32> to vector<24x32xf32>
    %111 = vector.broadcast %60 : vector<1x32xf32> to vector<24x32xf32>
    %112 = arith.mulf %110, %111 : vector<24x32xf32>
    %113 = vector.extract_strided_slice %109 {offsets = [24, 0], sizes = [24, 32], strides = [1, 1]} : vector<96x32xf32> to vector<24x32xf32>
    %114 = vector.broadcast %61 : vector<1x32xf32> to vector<24x32xf32>
    %115 = arith.mulf %113, %114 : vector<24x32xf32>
    %116 = arith.addf %112, %115 : vector<24x32xf32>
    %117 = vector.extract_strided_slice %109 {offsets = [48, 0], sizes = [24, 32], strides = [1, 1]} : vector<96x32xf32> to vector<24x32xf32>
    %118 = vector.broadcast %62 : vector<1x32xf32> to vector<24x32xf32>
    %119 = arith.mulf %117, %118 : vector<24x32xf32>
    %120 = arith.addf %116, %119 : vector<24x32xf32>
    %121 = vector.extract_strided_slice %109 {offsets = [72, 0], sizes = [24, 32], strides = [1, 1]} : vector<96x32xf32> to vector<24x32xf32>
    %122 = vector.broadcast %63 : vector<1x32xf32> to vector<24x32xf32>
    %123 = arith.mulf %121, %122 : vector<24x32xf32>
    %124 = arith.addf %120, %123 : vector<24x32xf32>
    %125 = vector.extract_strided_slice %74 {offsets = [24, 0], sizes = [24, 32], strides = [1, 1]} : vector<48x32xf32> to vector<24x32xf32>
    %126 = arith.truncf %125 : vector<24x32xf32> to vector<24x32xbf16>
    %127 = vector.extract_strided_slice %79 {offsets = [24, 0], sizes = [24, 32], strides = [1, 1]} : vector<48x32xf32> to vector<24x32xf32>
    %128 = arith.truncf %127 : vector<24x32xf32> to vector<24x32xbf16>
    %129 = vector.extract_strided_slice %69 {offsets = [24, 0], sizes = [24, 32], strides = [1, 1]} : vector<48x32xf32> to vector<24x32xf32>
    %130 = vector.broadcast %60 : vector<1x32xf32> to vector<24x32xf32>
    %131 = arith.mulf %129, %130 : vector<24x32xf32>
    %132 = vector.broadcast %61 : vector<1x32xf32> to vector<24x32xf32>
    %133 = arith.mulf %129, %132 : vector<24x32xf32>
    %134 = vector.broadcast %62 : vector<1x32xf32> to vector<24x32xf32>
    %135 = arith.mulf %129, %134 : vector<24x32xf32>
    %136 = vector.broadcast %63 : vector<1x32xf32> to vector<24x32xf32>
    %137 = arith.mulf %129, %136 : vector<24x32xf32>
    %138 = tpu.concatenate %131, %133, %135, %137 in 0 : vector<24x32xf32>, vector<24x32xf32>, vector<24x32xf32>, vector<24x32xf32> -> vector<96x32xf32>
    %139 = arith.truncf %138 : vector<96x32xf32> to vector<96x32xbf16>
    %cst_65 = arith.constant dense<0.000000e+00> : vector<96x24xf32>
    %140 = tpu.matmul %139, %126, %cst_65 {dimension_numbers = #tpu.dot_dimension_numbers<[1], [1], [0], [0], [0, 0, 1, 0], [], []>} : vector<96x32xbf16>, vector<24x32xbf16>, vector<96x24xf32> -> vector<96x24xf32>
    %141 = vector.broadcast %59 : vector<1x24xf32> to vector<96x24xf32>
    %142 = arith.addf %140, %141 : vector<96x24xf32>
    %cst_66 = arith.constant dense<0xFF800000> : vector<96xf32>
    %143 = vector.multi_reduction <maximumf>, %142, %cst_66 [1] : vector<96x24xf32> to vector<96xf32>
    %144 = vector.shape_cast %143 : vector<96xf32> to vector<96x1xf32>
    %145 = vector.broadcast %144 : vector<96x1xf32> to vector<96x24xf32>
    %146 = arith.subf %142, %145 : vector<96x24xf32>
    %147 = math.exp %146 : vector<96x24xf32>
    %cst_67 = arith.constant dense<0.000000e+00> : vector<96xf32>
    %148 = vector.multi_reduction <add>, %147, %cst_67 [1] : vector<96x24xf32> to vector<96xf32>
    %149 = vector.shape_cast %148 : vector<96xf32> to vector<96x1xf32>
    %150 = tpu.reciprocal %149 {approx = true} : vector<96x1xf32> -> vector<96x1xf32>
    %151 = vector.broadcast %150 : vector<96x1xf32> to vector<96x24xf32>
    %152 = arith.mulf %147, %151 : vector<96x24xf32>
    %153 = arith.truncf %152 : vector<96x24xf32> to vector<96x24xbf16>
    %cst_68 = arith.constant dense<0.000000e+00> : vector<96x32xf32>
    %154 = tpu.matmul %153, %128, %cst_68 {dimension_numbers = #tpu.dot_dimension_numbers<[1], [0], [0], [1], [0, 0, 1, 1], [], []>} : vector<96x24xbf16>, vector<24x32xbf16>, vector<96x32xf32> -> vector<96x32xf32>
    %155 = vector.extract_strided_slice %154 {offsets = [0, 0], sizes = [24, 32], strides = [1, 1]} : vector<96x32xf32> to vector<24x32xf32>
    %156 = vector.broadcast %60 : vector<1x32xf32> to vector<24x32xf32>
    %157 = arith.mulf %155, %156 : vector<24x32xf32>
    %158 = vector.extract_strided_slice %154 {offsets = [24, 0], sizes = [24, 32], strides = [1, 1]} : vector<96x32xf32> to vector<24x32xf32>
    %159 = vector.broadcast %61 : vector<1x32xf32> to vector<24x32xf32>
    %160 = arith.mulf %158, %159 : vector<24x32xf32>
    %161 = arith.addf %157, %160 : vector<24x32xf32>
    %162 = vector.extract_strided_slice %154 {offsets = [48, 0], sizes = [24, 32], strides = [1, 1]} : vector<96x32xf32> to vector<24x32xf32>
    %163 = vector.broadcast %62 : vector<1x32xf32> to vector<24x32xf32>
    %164 = arith.mulf %162, %163 : vector<24x32xf32>
    %165 = arith.addf %161, %164 : vector<24x32xf32>
    %166 = vector.extract_strided_slice %154 {offsets = [72, 0], sizes = [24, 32], strides = [1, 1]} : vector<96x32xf32> to vector<24x32xf32>
    %167 = vector.broadcast %63 : vector<1x32xf32> to vector<24x32xf32>
    %168 = arith.mulf %166, %167 : vector<24x32xf32>
    %169 = arith.addf %165, %168 : vector<24x32xf32>
    %170 = tpu.concatenate %124, %169 in 0 : vector<24x32xf32>, vector<24x32xf32> -> vector<48x32xf32>
    %171 = arith.truncf %170 : vector<48x32xf32> to vector<48x32xbf16>
    %c160 = arith.constant 160 : index
    %c0_69 = arith.constant 0 : index
    %172 = vector.load %arg1[%c160, %c0_69] : memref<512x64xbf16, #tpu.memory_space<vmem>>, vector<32x32xbf16>
    %cst_70 = arith.constant dense<0.000000e+00> : vector<48x32xf32>
    %173 = tpu.matmul %171, %172, %cst_70 {dimension_numbers = #tpu.dot_dimension_numbers<[1], [0], [0], [1], [0, 0, 1, 1], [], []>} : vector<48x32xbf16>, vector<32x32xbf16>, vector<48x32xf32> -> vector<48x32xf32>
    %c10 = arith.constant 10 : index
    %c0_71 = arith.constant 0 : index
    %174 = vector.load %arg2[%c10, %c0_71] : memref<32x64xf32, #tpu.memory_space<vmem>>, vector<1x32xf32>
    %175 = vector.broadcast %174 : vector<1x32xf32> to vector<48x32xf32>
    %176 = arith.addf %173, %175 : vector<48x32xf32>
    %177 = arith.addf %57, %176 : vector<48x32xf32>
    %c13 = arith.constant 13 : index
    %c0_72 = arith.constant 0 : index
    %178 = vector.load %arg2[%c13, %c0_72] : memref<32x64xf32, #tpu.memory_space<vmem>>, vector<1x32xf32>
    %c14 = arith.constant 14 : index
    %c0_73 = arith.constant 0 : index
    %179 = vector.load %arg2[%c14, %c0_73] : memref<32x64xf32, #tpu.memory_space<vmem>>, vector<1x32xf32>
    %cst_74 = arith.constant dense<0.000000e+00> : vector<48xf32>
    %180 = vector.multi_reduction <add>, %177, %cst_74 [1] : vector<48x32xf32> to vector<48xf32>
    %181 = vector.shape_cast %180 : vector<48xf32> to vector<48x1xf32>
    %cst_75 = arith.constant 3.200000e+01 : f32
    %182 = vector.broadcast %cst_75 : f32 to vector<48x1xf32>
    %183 = arith.divf %181, %182 : vector<48x1xf32>
    %184 = arith.mulf %177, %177 : vector<48x32xf32>
    %cst_76 = arith.constant dense<0.000000e+00> : vector<48xf32>
    %185 = vector.multi_reduction <add>, %184, %cst_76 [1] : vector<48x32xf32> to vector<48xf32>
    %186 = vector.shape_cast %185 : vector<48xf32> to vector<48x1xf32>
    %cst_77 = arith.constant 3.200000e+01 : f32
    %187 = vector.broadcast %cst_77 : f32 to vector<48x1xf32>
    %188 = arith.divf %186, %187 : vector<48x1xf32>
    %189 = arith.mulf %183, %183 : vector<48x1xf32>
    %190 = arith.subf %188, %189 : vector<48x1xf32>
    %cst_78 = arith.constant 0.000000e+00 : f32
    %191 = vector.broadcast %cst_78 : f32 to vector<48x1xf32>
    %192 = arith.maximumf %190, %191 : vector<48x1xf32>
    %193 = vector.broadcast %183 : vector<48x1xf32> to vector<48x32xf32>
    %194 = arith.subf %177, %193 : vector<48x32xf32>
    %cst_79 = arith.constant 9.99999974E-6 : f32
    %195 = vector.broadcast %cst_79 : f32 to vector<48x1xf32>
    %196 = arith.addf %192, %195 : vector<48x1xf32>
    %197 = math.rsqrt %196 : vector<48x1xf32>
    %198 = vector.broadcast %197 : vector<48x1xf32> to vector<48x32xf32>
    %199 = arith.mulf %194, %198 : vector<48x32xf32>
    %200 = vector.broadcast %178 : vector<1x32xf32> to vector<48x32xf32>
    %201 = arith.mulf %199, %200 : vector<48x32xf32>
    %202 = vector.broadcast %179 : vector<1x32xf32> to vector<48x32xf32>
    %203 = arith.addf %201, %202 : vector<48x32xf32>
    %204 = arith.truncf %203 : vector<48x32xf32> to vector<48x32xbf16>
    %c192 = arith.constant 192 : index
    %c0_80 = arith.constant 0 : index
    %205 = vector.load %arg1[%c192, %c0_80] : memref<512x64xbf16, #tpu.memory_space<vmem>>, vector<32x64xbf16>
    %cst_81 = arith.constant dense<0.000000e+00> : vector<48x64xf32>
    %206 = tpu.matmul %204, %205, %cst_81 {dimension_numbers = #tpu.dot_dimension_numbers<[1], [0], [0], [1], [0, 0, 1, 1], [], []>} : vector<48x32xbf16>, vector<32x64xbf16>, vector<48x64xf32> -> vector<48x64xf32>
    %c11 = arith.constant 11 : index
    %c0_82 = arith.constant 0 : index
    %207 = vector.load %arg2[%c11, %c0_82] : memref<32x64xf32, #tpu.memory_space<vmem>>, vector<1x64xf32>
    %208 = vector.broadcast %207 : vector<1x64xf32> to vector<48x64xf32>
    %209 = arith.addf %206, %208 : vector<48x64xf32>
    %cst_83 = arith.constant 0.000000e+00 : f32
    %210 = vector.broadcast %cst_83 : f32 to vector<48x64xf32>
    %211 = arith.maximumf %209, %210 : vector<48x64xf32>
    %212 = arith.truncf %211 : vector<48x64xf32> to vector<48x64xbf16>
    %c224 = arith.constant 224 : index
    %c0_84 = arith.constant 0 : index
    %213 = vector.load %arg1[%c224, %c0_84] : memref<512x64xbf16, #tpu.memory_space<vmem>>, vector<64x32xbf16>
    %cst_85 = arith.constant dense<0.000000e+00> : vector<48x32xf32>
    %214 = tpu.matmul %212, %213, %cst_85 {dimension_numbers = #tpu.dot_dimension_numbers<[1], [0], [0], [1], [0, 0, 1, 1], [], []>} : vector<48x64xbf16>, vector<64x32xbf16>, vector<48x32xf32> -> vector<48x32xf32>
    %c12 = arith.constant 12 : index
    %c0_86 = arith.constant 0 : index
    %215 = vector.load %arg2[%c12, %c0_86] : memref<32x64xf32, #tpu.memory_space<vmem>>, vector<1x32xf32>
    %216 = vector.broadcast %215 : vector<1x32xf32> to vector<48x32xf32>
    %217 = arith.addf %214, %216 : vector<48x32xf32>
    %218 = arith.addf %203, %217 : vector<48x32xf32>
    %c15 = arith.constant 15 : index
    %c0_87 = arith.constant 0 : index
    %219 = vector.load %arg2[%c15, %c0_87] : memref<32x64xf32, #tpu.memory_space<vmem>>, vector<1x32xf32>
    %c16_88 = arith.constant 16 : index
    %c0_89 = arith.constant 0 : index
    %220 = vector.load %arg2[%c16_88, %c0_89] : memref<32x64xf32, #tpu.memory_space<vmem>>, vector<1x32xf32>
    %cst_90 = arith.constant dense<0.000000e+00> : vector<48xf32>
    %221 = vector.multi_reduction <add>, %218, %cst_90 [1] : vector<48x32xf32> to vector<48xf32>
    %222 = vector.shape_cast %221 : vector<48xf32> to vector<48x1xf32>
    %cst_91 = arith.constant 3.200000e+01 : f32
    %223 = vector.broadcast %cst_91 : f32 to vector<48x1xf32>
    %224 = arith.divf %222, %223 : vector<48x1xf32>
    %225 = arith.mulf %218, %218 : vector<48x32xf32>
    %cst_92 = arith.constant dense<0.000000e+00> : vector<48xf32>
    %226 = vector.multi_reduction <add>, %225, %cst_92 [1] : vector<48x32xf32> to vector<48xf32>
    %227 = vector.shape_cast %226 : vector<48xf32> to vector<48x1xf32>
    %cst_93 = arith.constant 3.200000e+01 : f32
    %228 = vector.broadcast %cst_93 : f32 to vector<48x1xf32>
    %229 = arith.divf %227, %228 : vector<48x1xf32>
    %230 = arith.mulf %224, %224 : vector<48x1xf32>
    %231 = arith.subf %229, %230 : vector<48x1xf32>
    %cst_94 = arith.constant 0.000000e+00 : f32
    %232 = vector.broadcast %cst_94 : f32 to vector<48x1xf32>
    %233 = arith.maximumf %231, %232 : vector<48x1xf32>
    %234 = vector.broadcast %224 : vector<48x1xf32> to vector<48x32xf32>
    %235 = arith.subf %218, %234 : vector<48x32xf32>
    %cst_95 = arith.constant 9.99999974E-6 : f32
    %236 = vector.broadcast %cst_95 : f32 to vector<48x1xf32>
    %237 = arith.addf %233, %236 : vector<48x1xf32>
    %238 = math.rsqrt %237 : vector<48x1xf32>
    %239 = vector.broadcast %238 : vector<48x1xf32> to vector<48x32xf32>
    %240 = arith.mulf %235, %239 : vector<48x32xf32>
    %241 = vector.broadcast %219 : vector<1x32xf32> to vector<48x32xf32>
    %242 = arith.mulf %240, %241 : vector<48x32xf32>
    %243 = vector.broadcast %220 : vector<1x32xf32> to vector<48x32xf32>
    %244 = arith.addf %242, %243 : vector<48x32xf32>
    %245 = arith.truncf %244 : vector<48x32xf32> to vector<48x32xbf16>
    %c288 = arith.constant 288 : index
    %c0_96 = arith.constant 0 : index
    %246 = vector.load %arg1[%c288, %c0_96] : memref<512x64xbf16, #tpu.memory_space<vmem>>, vector<32x32xbf16>
    %cst_97 = arith.constant dense<0.000000e+00> : vector<48x32xf32>
    %247 = tpu.matmul %245, %246, %cst_97 {dimension_numbers = #tpu.dot_dimension_numbers<[1], [0], [0], [1], [0, 0, 1, 1], [], []>} : vector<48x32xbf16>, vector<32x32xbf16>, vector<48x32xf32> -> vector<48x32xf32>
    %c17 = arith.constant 17 : index
    %c0_98 = arith.constant 0 : index
    %248 = vector.load %arg2[%c17, %c0_98] : memref<32x64xf32, #tpu.memory_space<vmem>>, vector<1x32xf32>
    %249 = vector.broadcast %248 : vector<1x32xf32> to vector<48x32xf32>
    %250 = arith.addf %247, %249 : vector<48x32xf32>
    %c320 = arith.constant 320 : index
    %c0_99 = arith.constant 0 : index
    %251 = vector.load %arg1[%c320, %c0_99] : memref<512x64xbf16, #tpu.memory_space<vmem>>, vector<32x32xbf16>
    %cst_100 = arith.constant dense<0.000000e+00> : vector<48x32xf32>
    %252 = tpu.matmul %245, %251, %cst_100 {dimension_numbers = #tpu.dot_dimension_numbers<[1], [0], [0], [1], [0, 0, 1, 1], [], []>} : vector<48x32xbf16>, vector<32x32xbf16>, vector<48x32xf32> -> vector<48x32xf32>
    %c18 = arith.constant 18 : index
    %c0_101 = arith.constant 0 : index
    %253 = vector.load %arg2[%c18, %c0_101] : memref<32x64xf32, #tpu.memory_space<vmem>>, vector<1x32xf32>
    %254 = vector.broadcast %253 : vector<1x32xf32> to vector<48x32xf32>
    %255 = arith.addf %252, %254 : vector<48x32xf32>
    %c352 = arith.constant 352 : index
    %c0_102 = arith.constant 0 : index
    %256 = vector.load %arg1[%c352, %c0_102] : memref<512x64xbf16, #tpu.memory_space<vmem>>, vector<32x32xbf16>
    %cst_103 = arith.constant dense<0.000000e+00> : vector<48x32xf32>
    %257 = tpu.matmul %245, %256, %cst_103 {dimension_numbers = #tpu.dot_dimension_numbers<[1], [0], [0], [1], [0, 0, 1, 1], [], []>} : vector<48x32xbf16>, vector<32x32xbf16>, vector<48x32xf32> -> vector<48x32xf32>
    %c19 = arith.constant 19 : index
    %c0_104 = arith.constant 0 : index
    %258 = vector.load %arg2[%c19, %c0_104] : memref<32x64xf32, #tpu.memory_space<vmem>>, vector<1x32xf32>
    %259 = vector.broadcast %258 : vector<1x32xf32> to vector<48x32xf32>
    %260 = arith.addf %257, %259 : vector<48x32xf32>
    %261 = vector.extract_strided_slice %255 {offsets = [0, 0], sizes = [24, 32], strides = [1, 1]} : vector<48x32xf32> to vector<24x32xf32>
    %262 = arith.truncf %261 : vector<24x32xf32> to vector<24x32xbf16>
    %263 = vector.extract_strided_slice %260 {offsets = [0, 0], sizes = [24, 32], strides = [1, 1]} : vector<48x32xf32> to vector<24x32xf32>
    %264 = arith.truncf %263 : vector<24x32xf32> to vector<24x32xbf16>
    %265 = vector.extract_strided_slice %250 {offsets = [0, 0], sizes = [24, 32], strides = [1, 1]} : vector<48x32xf32> to vector<24x32xf32>
    %266 = vector.broadcast %60 : vector<1x32xf32> to vector<24x32xf32>
    %267 = arith.mulf %265, %266 : vector<24x32xf32>
    %268 = vector.broadcast %61 : vector<1x32xf32> to vector<24x32xf32>
    %269 = arith.mulf %265, %268 : vector<24x32xf32>
    %270 = vector.broadcast %62 : vector<1x32xf32> to vector<24x32xf32>
    %271 = arith.mulf %265, %270 : vector<24x32xf32>
    %272 = vector.broadcast %63 : vector<1x32xf32> to vector<24x32xf32>
    %273 = arith.mulf %265, %272 : vector<24x32xf32>
    %274 = tpu.concatenate %267, %269, %271, %273 in 0 : vector<24x32xf32>, vector<24x32xf32>, vector<24x32xf32>, vector<24x32xf32> -> vector<96x32xf32>
    %275 = arith.truncf %274 : vector<96x32xf32> to vector<96x32xbf16>
    %cst_105 = arith.constant dense<0.000000e+00> : vector<96x24xf32>
    %276 = tpu.matmul %275, %262, %cst_105 {dimension_numbers = #tpu.dot_dimension_numbers<[1], [1], [0], [0], [0, 0, 1, 0], [], []>} : vector<96x32xbf16>, vector<24x32xbf16>, vector<96x24xf32> -> vector<96x24xf32>
    %277 = vector.broadcast %58 : vector<1x24xf32> to vector<96x24xf32>
    %278 = arith.addf %276, %277 : vector<96x24xf32>
    %cst_106 = arith.constant dense<0xFF800000> : vector<96xf32>
    %279 = vector.multi_reduction <maximumf>, %278, %cst_106 [1] : vector<96x24xf32> to vector<96xf32>
    %280 = vector.shape_cast %279 : vector<96xf32> to vector<96x1xf32>
    %281 = vector.broadcast %280 : vector<96x1xf32> to vector<96x24xf32>
    %282 = arith.subf %278, %281 : vector<96x24xf32>
    %283 = math.exp %282 : vector<96x24xf32>
    %cst_107 = arith.constant dense<0.000000e+00> : vector<96xf32>
    %284 = vector.multi_reduction <add>, %283, %cst_107 [1] : vector<96x24xf32> to vector<96xf32>
    %285 = vector.shape_cast %284 : vector<96xf32> to vector<96x1xf32>
    %286 = tpu.reciprocal %285 {approx = true} : vector<96x1xf32> -> vector<96x1xf32>
    %287 = vector.broadcast %286 : vector<96x1xf32> to vector<96x24xf32>
    %288 = arith.mulf %283, %287 : vector<96x24xf32>
    %289 = arith.truncf %288 : vector<96x24xf32> to vector<96x24xbf16>
    %cst_108 = arith.constant dense<0.000000e+00> : vector<96x32xf32>
    %290 = tpu.matmul %289, %264, %cst_108 {dimension_numbers = #tpu.dot_dimension_numbers<[1], [0], [0], [1], [0, 0, 1, 1], [], []>} : vector<96x24xbf16>, vector<24x32xbf16>, vector<96x32xf32> -> vector<96x32xf32>
    %291 = vector.extract_strided_slice %290 {offsets = [0, 0], sizes = [24, 32], strides = [1, 1]} : vector<96x32xf32> to vector<24x32xf32>
    %292 = vector.broadcast %60 : vector<1x32xf32> to vector<24x32xf32>
    %293 = arith.mulf %291, %292 : vector<24x32xf32>
    %294 = vector.extract_strided_slice %290 {offsets = [24, 0], sizes = [24, 32], strides = [1, 1]} : vector<96x32xf32> to vector<24x32xf32>
    %295 = vector.broadcast %61 : vector<1x32xf32> to vector<24x32xf32>
    %296 = arith.mulf %294, %295 : vector<24x32xf32>
    %297 = arith.addf %293, %296 : vector<24x32xf32>
    %298 = vector.extract_strided_slice %290 {offsets = [48, 0], sizes = [24, 32], strides = [1, 1]} : vector<96x32xf32> to vector<24x32xf32>
    %299 = vector.broadcast %62 : vector<1x32xf32> to vector<24x32xf32>
    %300 = arith.mulf %298, %299 : vector<24x32xf32>
    %301 = arith.addf %297, %300 : vector<24x32xf32>
    %302 = vector.extract_strided_slice %290 {offsets = [72, 0], sizes = [24, 32], strides = [1, 1]} : vector<96x32xf32> to vector<24x32xf32>
    %303 = vector.broadcast %63 : vector<1x32xf32> to vector<24x32xf32>
    %304 = arith.mulf %302, %303 : vector<24x32xf32>
    %305 = arith.addf %301, %304 : vector<24x32xf32>
    %306 = vector.extract_strided_slice %255 {offsets = [24, 0], sizes = [24, 32], strides = [1, 1]} : vector<48x32xf32> to vector<24x32xf32>
    %307 = arith.truncf %306 : vector<24x32xf32> to vector<24x32xbf16>
    %308 = vector.extract_strided_slice %260 {offsets = [24, 0], sizes = [24, 32], strides = [1, 1]} : vector<48x32xf32> to vector<24x32xf32>
    %309 = arith.truncf %308 : vector<24x32xf32> to vector<24x32xbf16>
    %310 = vector.extract_strided_slice %250 {offsets = [24, 0], sizes = [24, 32], strides = [1, 1]} : vector<48x32xf32> to vector<24x32xf32>
    %311 = vector.broadcast %60 : vector<1x32xf32> to vector<24x32xf32>
    %312 = arith.mulf %310, %311 : vector<24x32xf32>
    %313 = vector.broadcast %61 : vector<1x32xf32> to vector<24x32xf32>
    %314 = arith.mulf %310, %313 : vector<24x32xf32>
    %315 = vector.broadcast %62 : vector<1x32xf32> to vector<24x32xf32>
    %316 = arith.mulf %310, %315 : vector<24x32xf32>
    %317 = vector.broadcast %63 : vector<1x32xf32> to vector<24x32xf32>
    %318 = arith.mulf %310, %317 : vector<24x32xf32>
    %319 = tpu.concatenate %312, %314, %316, %318 in 0 : vector<24x32xf32>, vector<24x32xf32>, vector<24x32xf32>, vector<24x32xf32> -> vector<96x32xf32>
    %320 = arith.truncf %319 : vector<96x32xf32> to vector<96x32xbf16>
    %cst_109 = arith.constant dense<0.000000e+00> : vector<96x24xf32>
    %321 = tpu.matmul %320, %307, %cst_109 {dimension_numbers = #tpu.dot_dimension_numbers<[1], [1], [0], [0], [0, 0, 1, 0], [], []>} : vector<96x32xbf16>, vector<24x32xbf16>, vector<96x24xf32> -> vector<96x24xf32>
    %322 = vector.broadcast %59 : vector<1x24xf32> to vector<96x24xf32>
    %323 = arith.addf %321, %322 : vector<96x24xf32>
    %cst_110 = arith.constant dense<0xFF800000> : vector<96xf32>
    %324 = vector.multi_reduction <maximumf>, %323, %cst_110 [1] : vector<96x24xf32> to vector<96xf32>
    %325 = vector.shape_cast %324 : vector<96xf32> to vector<96x1xf32>
    %326 = vector.broadcast %325 : vector<96x1xf32> to vector<96x24xf32>
    %327 = arith.subf %323, %326 : vector<96x24xf32>
    %328 = math.exp %327 : vector<96x24xf32>
    %cst_111 = arith.constant dense<0.000000e+00> : vector<96xf32>
    %329 = vector.multi_reduction <add>, %328, %cst_111 [1] : vector<96x24xf32> to vector<96xf32>
    %330 = vector.shape_cast %329 : vector<96xf32> to vector<96x1xf32>
    %331 = tpu.reciprocal %330 {approx = true} : vector<96x1xf32> -> vector<96x1xf32>
    %332 = vector.broadcast %331 : vector<96x1xf32> to vector<96x24xf32>
    %333 = arith.mulf %328, %332 : vector<96x24xf32>
    %334 = arith.truncf %333 : vector<96x24xf32> to vector<96x24xbf16>
    %cst_112 = arith.constant dense<0.000000e+00> : vector<96x32xf32>
    %335 = tpu.matmul %334, %309, %cst_112 {dimension_numbers = #tpu.dot_dimension_numbers<[1], [0], [0], [1], [0, 0, 1, 1], [], []>} : vector<96x24xbf16>, vector<24x32xbf16>, vector<96x32xf32> -> vector<96x32xf32>
    %336 = vector.extract_strided_slice %335 {offsets = [0, 0], sizes = [24, 32], strides = [1, 1]} : vector<96x32xf32> to vector<24x32xf32>
    %337 = vector.broadcast %60 : vector<1x32xf32> to vector<24x32xf32>
    %338 = arith.mulf %336, %337 : vector<24x32xf32>
    %339 = vector.extract_strided_slice %335 {offsets = [24, 0], sizes = [24, 32], strides = [1, 1]} : vector<96x32xf32> to vector<24x32xf32>
    %340 = vector.broadcast %61 : vector<1x32xf32> to vector<24x32xf32>
    %341 = arith.mulf %339, %340 : vector<24x32xf32>
    %342 = arith.addf %338, %341 : vector<24x32xf32>
    %343 = vector.extract_strided_slice %335 {offsets = [48, 0], sizes = [24, 32], strides = [1, 1]} : vector<96x32xf32> to vector<24x32xf32>
    %344 = vector.broadcast %62 : vector<1x32xf32> to vector<24x32xf32>
    %345 = arith.mulf %343, %344 : vector<24x32xf32>
    %346 = arith.addf %342, %345 : vector<24x32xf32>
    %347 = vector.extract_strided_slice %335 {offsets = [72, 0], sizes = [24, 32], strides = [1, 1]} : vector<96x32xf32> to vector<24x32xf32>
    %348 = vector.broadcast %63 : vector<1x32xf32> to vector<24x32xf32>
    %349 = arith.mulf %347, %348 : vector<24x32xf32>
    %350 = arith.addf %346, %349 : vector<24x32xf32>
    %351 = tpu.concatenate %305, %350 in 0 : vector<24x32xf32>, vector<24x32xf32> -> vector<48x32xf32>
    %352 = arith.truncf %351 : vector<48x32xf32> to vector<48x32xbf16>
    %c384 = arith.constant 384 : index
    %c0_113 = arith.constant 0 : index
    %353 = vector.load %arg1[%c384, %c0_113] : memref<512x64xbf16, #tpu.memory_space<vmem>>, vector<32x32xbf16>
    %cst_114 = arith.constant dense<0.000000e+00> : vector<48x32xf32>
    %354 = tpu.matmul %352, %353, %cst_114 {dimension_numbers = #tpu.dot_dimension_numbers<[1], [0], [0], [1], [0, 0, 1, 1], [], []>} : vector<48x32xbf16>, vector<32x32xbf16>, vector<48x32xf32> -> vector<48x32xf32>
    %c20 = arith.constant 20 : index
    %c0_115 = arith.constant 0 : index
    %355 = vector.load %arg2[%c20, %c0_115] : memref<32x64xf32, #tpu.memory_space<vmem>>, vector<1x32xf32>
    %356 = vector.broadcast %355 : vector<1x32xf32> to vector<48x32xf32>
    %357 = arith.addf %354, %356 : vector<48x32xf32>
    %358 = arith.addf %244, %357 : vector<48x32xf32>
    %c23 = arith.constant 23 : index
    %c0_116 = arith.constant 0 : index
    %359 = vector.load %arg2[%c23, %c0_116] : memref<32x64xf32, #tpu.memory_space<vmem>>, vector<1x32xf32>
    %c24_117 = arith.constant 24 : index
    %c0_118 = arith.constant 0 : index
    %360 = vector.load %arg2[%c24_117, %c0_118] : memref<32x64xf32, #tpu.memory_space<vmem>>, vector<1x32xf32>
    %cst_119 = arith.constant dense<0.000000e+00> : vector<48xf32>
    %361 = vector.multi_reduction <add>, %358, %cst_119 [1] : vector<48x32xf32> to vector<48xf32>
    %362 = vector.shape_cast %361 : vector<48xf32> to vector<48x1xf32>
    %cst_120 = arith.constant 3.200000e+01 : f32
    %363 = vector.broadcast %cst_120 : f32 to vector<48x1xf32>
    %364 = arith.divf %362, %363 : vector<48x1xf32>
    %365 = arith.mulf %358, %358 : vector<48x32xf32>
    %cst_121 = arith.constant dense<0.000000e+00> : vector<48xf32>
    %366 = vector.multi_reduction <add>, %365, %cst_121 [1] : vector<48x32xf32> to vector<48xf32>
    %367 = vector.shape_cast %366 : vector<48xf32> to vector<48x1xf32>
    %cst_122 = arith.constant 3.200000e+01 : f32
    %368 = vector.broadcast %cst_122 : f32 to vector<48x1xf32>
    %369 = arith.divf %367, %368 : vector<48x1xf32>
    %370 = arith.mulf %364, %364 : vector<48x1xf32>
    %371 = arith.subf %369, %370 : vector<48x1xf32>
    %cst_123 = arith.constant 0.000000e+00 : f32
    %372 = vector.broadcast %cst_123 : f32 to vector<48x1xf32>
    %373 = arith.maximumf %371, %372 : vector<48x1xf32>
    %374 = vector.broadcast %364 : vector<48x1xf32> to vector<48x32xf32>
    %375 = arith.subf %358, %374 : vector<48x32xf32>
    %cst_124 = arith.constant 9.99999974E-6 : f32
    %376 = vector.broadcast %cst_124 : f32 to vector<48x1xf32>
    %377 = arith.addf %373, %376 : vector<48x1xf32>
    %378 = math.rsqrt %377 : vector<48x1xf32>
    %379 = vector.broadcast %378 : vector<48x1xf32> to vector<48x32xf32>
    %380 = arith.mulf %375, %379 : vector<48x32xf32>
    %381 = vector.broadcast %359 : vector<1x32xf32> to vector<48x32xf32>
    %382 = arith.mulf %380, %381 : vector<48x32xf32>
    %383 = vector.broadcast %360 : vector<1x32xf32> to vector<48x32xf32>
    %384 = arith.addf %382, %383 : vector<48x32xf32>
    %385 = arith.truncf %384 : vector<48x32xf32> to vector<48x32xbf16>
    %c416 = arith.constant 416 : index
    %c0_125 = arith.constant 0 : index
    %386 = vector.load %arg1[%c416, %c0_125] : memref<512x64xbf16, #tpu.memory_space<vmem>>, vector<32x64xbf16>
    %cst_126 = arith.constant dense<0.000000e+00> : vector<48x64xf32>
    %387 = tpu.matmul %385, %386, %cst_126 {dimension_numbers = #tpu.dot_dimension_numbers<[1], [0], [0], [1], [0, 0, 1, 1], [], []>} : vector<48x32xbf16>, vector<32x64xbf16>, vector<48x64xf32> -> vector<48x64xf32>
    %c21 = arith.constant 21 : index
    %c0_127 = arith.constant 0 : index
    %388 = vector.load %arg2[%c21, %c0_127] : memref<32x64xf32, #tpu.memory_space<vmem>>, vector<1x64xf32>
    %389 = vector.broadcast %388 : vector<1x64xf32> to vector<48x64xf32>
    %390 = arith.addf %387, %389 : vector<48x64xf32>
    %cst_128 = arith.constant 0.000000e+00 : f32
    %391 = vector.broadcast %cst_128 : f32 to vector<48x64xf32>
    %392 = arith.maximumf %390, %391 : vector<48x64xf32>
    %393 = arith.truncf %392 : vector<48x64xf32> to vector<48x64xbf16>
    %c448 = arith.constant 448 : index
    %c0_129 = arith.constant 0 : index
    %394 = vector.load %arg1[%c448, %c0_129] : memref<512x64xbf16, #tpu.memory_space<vmem>>, vector<64x32xbf16>
    %cst_130 = arith.constant dense<0.000000e+00> : vector<48x32xf32>
    %395 = tpu.matmul %393, %394, %cst_130 {dimension_numbers = #tpu.dot_dimension_numbers<[1], [0], [0], [1], [0, 0, 1, 1], [], []>} : vector<48x64xbf16>, vector<64x32xbf16>, vector<48x32xf32> -> vector<48x32xf32>
    %c22 = arith.constant 22 : index
    %c0_131 = arith.constant 0 : index
    %396 = vector.load %arg2[%c22, %c0_131] : memref<32x64xf32, #tpu.memory_space<vmem>>, vector<1x32xf32>
    %397 = vector.broadcast %396 : vector<1x32xf32> to vector<48x32xf32>
    %398 = arith.addf %395, %397 : vector<48x32xf32>
    %399 = arith.addf %384, %398 : vector<48x32xf32>
    %c25 = arith.constant 25 : index
    %c0_132 = arith.constant 0 : index
    %400 = vector.load %arg2[%c25, %c0_132] : memref<32x64xf32, #tpu.memory_space<vmem>>, vector<1x32xf32>
    %c26 = arith.constant 26 : index
    %c0_133 = arith.constant 0 : index
    %401 = vector.load %arg2[%c26, %c0_133] : memref<32x64xf32, #tpu.memory_space<vmem>>, vector<1x32xf32>
    %cst_134 = arith.constant dense<0.000000e+00> : vector<48xf32>
    %402 = vector.multi_reduction <add>, %399, %cst_134 [1] : vector<48x32xf32> to vector<48xf32>
    %403 = vector.shape_cast %402 : vector<48xf32> to vector<48x1xf32>
    %cst_135 = arith.constant 3.200000e+01 : f32
    %404 = vector.broadcast %cst_135 : f32 to vector<48x1xf32>
    %405 = arith.divf %403, %404 : vector<48x1xf32>
    %406 = arith.mulf %399, %399 : vector<48x32xf32>
    %cst_136 = arith.constant dense<0.000000e+00> : vector<48xf32>
    %407 = vector.multi_reduction <add>, %406, %cst_136 [1] : vector<48x32xf32> to vector<48xf32>
    %408 = vector.shape_cast %407 : vector<48xf32> to vector<48x1xf32>
    %cst_137 = arith.constant 3.200000e+01 : f32
    %409 = vector.broadcast %cst_137 : f32 to vector<48x1xf32>
    %410 = arith.divf %408, %409 : vector<48x1xf32>
    %411 = arith.mulf %405, %405 : vector<48x1xf32>
    %412 = arith.subf %410, %411 : vector<48x1xf32>
    %cst_138 = arith.constant 0.000000e+00 : f32
    %413 = vector.broadcast %cst_138 : f32 to vector<48x1xf32>
    %414 = arith.maximumf %412, %413 : vector<48x1xf32>
    %415 = vector.broadcast %405 : vector<48x1xf32> to vector<48x32xf32>
    %416 = arith.subf %399, %415 : vector<48x32xf32>
    %cst_139 = arith.constant 9.99999974E-6 : f32
    %417 = vector.broadcast %cst_139 : f32 to vector<48x1xf32>
    %418 = arith.addf %414, %417 : vector<48x1xf32>
    %419 = math.rsqrt %418 : vector<48x1xf32>
    %420 = vector.broadcast %419 : vector<48x1xf32> to vector<48x32xf32>
    %421 = arith.mulf %416, %420 : vector<48x32xf32>
    %422 = vector.broadcast %400 : vector<1x32xf32> to vector<48x32xf32>
    %423 = arith.mulf %421, %422 : vector<48x32xf32>
    %424 = vector.broadcast %401 : vector<1x32xf32> to vector<48x32xf32>
    %425 = arith.addf %423, %424 : vector<48x32xf32>
    %426 = vector.extract_strided_slice %425 {offsets = [0, 0], sizes = [1, 32], strides = [1, 1]} : vector<48x32xf32> to vector<1x32xf32>
    %c0_140 = arith.constant 0 : index
    %c0_141 = arith.constant 0 : index
    %427 = vector.load %arg3[%c0_140, %c0_141] : memref<2x32xf32, #tpu.memory_space<vmem>>, vector<1x32xf32>
    tpu.vector_store %arg3[%c0_140, %c0_141], %426 {strides = array<i32>} : memref<2x32xf32, #tpu.memory_space<vmem>>, vector<1x32xf32>,
    %428 = vector.extract_strided_slice %425 {offsets = [24, 0], sizes = [1, 32], strides = [1, 1]} : vector<48x32xf32> to vector<1x32xf32>
    %c1_142 = arith.constant 1 : index
    %c0_143 = arith.constant 0 : index
    %429 = vector.load %arg3[%c1_142, %c0_143] : memref<2x32xf32, #tpu.memory_space<vmem>>, vector<1x32xf32>
    tpu.vector_store %arg3[%c1_142, %c0_143], %428 {strides = array<i32>} : memref<2x32xf32, #tpu.memory_space<vmem>>, vector<1x32xf32>,
    return
  }
}

</mosaic_0001>

<llo_original>
// kernel: mul.26
$region0: #{mul.26}
  %s0 = inlined_call_operand.vmem [shape: f32[2,8], index: 0, kind: input, shape index: {}]
  %s1 = inlined_call_operand.vmem [shape: f32[16], index: 1, kind: output, shape index: {}]
  $region1: #{mul.26} parent=0
    #allocation0 [shape = 'u8[4096]{0}', space=vmem, size = 0x1000, scoped, tag = 'scoped mem for output reshape']
    #allocation1 [shape = 'u8[4096]{0}', space=vmem, size = 0x1000, scoped, tag = 'scoped mem for input reshape']
    %s3 = ssub.s32 4, 1
    %v4 = vld [vmem:[%s0] sm:%s3]
    %5 = vst [vmem:[#allocation1] sm:%s3] %v4
    %v6 = vld [vmem:[#allocation1] sm:$0x1]
    %vm7 = vcmask 64512
    %8 = vst.msk [vmem:[#allocation0] sm:$0x1] %vm7, %v6
    %s9 = scalar_lea.vmem [#allocation1], 1
    %v10 = vld [vmem:[%s9] sm:$0x1]
    %11 = vrot.lane.b32.xlu0 %v10, 8
    %v12 = vpop.permute.xlu0 %11
    %vm13 = vcmask 130112
    %14 = vst.msk [vmem:[#allocation0] sm:$0x1] %vm13, %v12
    %s16 = ssub.s32 2, 1
    %v17 = vld [vmem:[#allocation0] sm:%s16]
    %s19 = ssub.s32 2, 1
    %20 = vst [vmem:[%s1] sm:%s19] %v17

// kernel: light_curve_transformer_forward.1
$region0: #{light_curve_transformer_forward.1}
  #allocation0 [shape = 'u32[]', space=smem, size = 0x4, offset = 0x4, fixed_abs, tag = 'smem constant byte address 0x4 - core index']
  #allocation1 [shape = 'u32[72,128]{1,0:T(1,128)}', space=vmem, size = 0x9000, scoped, tag = 'internal scratch']
  #allocation2 [shape = 'f32[48,32]{1,0:T(8,128)}', space=vmem, size = 0x6000, scoped, tag = 'scratch operand']
  %s0 = inlined_call_operand.vmem [shape: f32[72,24], index: 0, kind: input, shape index: {}]
  %s1 = inlined_call_operand.vmem [shape: bf16[512,64], index: 1, kind: input, shape index: {}]
  %s2 = inlined_call_operand.vmem [shape: f32[32,64], index: 2, kind: input, shape index: {}]
  %s3 = inlined_call_operand.hbm [shape: f32[2,32], index: 3, kind: output, shape index: {}]
  %s4 = sld [smem:[#allocation0]]
  $region22: #{light_curve_transformer_forward.1} parent=0
    _
  %s6 = ssub.s32 1, %s4
  %s7 = scalar_select 0, %s6, %s4
  $region1: #{light_curve_transformer_forward.1} parent=0
    #allocation3 [shape = 'u8[1024]{0}', space=vmem, size = 0x400, scoped, tag = 'output window, operand 0, single buffered']
    #allocation4 [shape = 's32[1]{0}', space=sflag, size = 0x4, scoped, tag = 'scoped memory for light_curve_transformer_forward.1']
    %8 = vsyncpa [#allocation4], 0
    // Predicated region
    $region2: #{light_curve_transformer_forward.1} parent=1 // pred_check
      _
    $region3: #{light_curve_transformer_forward.1} parent=1 // pred_check_branch
      %10 = sbr.rel (0) target = $region5
    $region4: #{light_curve_transformer_forward.1} parent=1 // pred_region
      _
    $region5: #{light_curve_transformer_forward.1} parent=1 // pred_fallthru
      _
    // Predicated region
    $region6: #{light_curve_transformer_forward.1} parent=1 // pred_check
      _
    $region7: #{light_curve_transformer_forward.1} parent=1 // pred_check_branch
      %12 = sbr.rel (0) target = $region9
    $region8: #{light_curve_transformer_forward.1} parent=1 // pred_region
      _
    $region9: #{light_curve_transformer_forward.1} parent=1 // pred_fallthru
      _
    // Predicated region
    $region10: #{light_curve_transformer_forward.1} parent=1 // pred_check
      _
    $region11: #{light_curve_transformer_forward.1} parent=1 // pred_check_branch
      %14 = sbr.rel (0) target = $region13
    $region12: #{light_curve_transformer_forward.1} parent=1 // pred_region
      _
    $region13: #{light_curve_transformer_forward.1} parent=1 // pred_fallthru
      _
    %v16 = vld [vmem:[%s0] sm:$0xff]
    %v17 = vld [vmem:[%s0 + $0x8] sm:$0xff]
    %v18 = vld [vmem:[%s0 + $0x20] sm:$0xff]
    %v19 = vld [vmem:[%s0 + $0x28] sm:$0xff]
    %v20 = vand.u32 2147483647, %v16
    %vm21 = vcmp.le.f32.partialorder %v20, 0.7853982
    %vm22 = vcmp.lt.s32.totalorder %v16, 0
    %v23 = vand.u32 %v16, 2139095040
    %v24 = vshrl.u32 %v23, 23
    %v25 = vsub.s32 %v24, 127
    %v26 = vand.u32 2147483647, %v16
    %v27 = vand.u32 %v26, 8388607
    %v28 = vor.u32 %v27, 8388608
    %v29 = vsub.s32 0, %v28
    %v30 = vadd.s32 %v25, 1
    %vm31 = vcmp.gt.s32.totalorder %v30, 0
    %v32 = vsel %vm31, %v30, 0
    %v33 = vshrl.u32 %v32, 5
    %v34 = vand.u32 %v32, 31
    %v35 = vsub.s32 32, %v34
    %v36 = vshrl.u32 683565275, %v35
    %v37 = vshll.u32 683565275, %v34
    %v38 = vshrl.u32 2475754826, %v35
    %v39 = vor.u32 %v37, %v38
    %v40 = vshll.u32 2475754826, %v34
    %v41 = vshrl.u32 2131351028, %v35
    %v42 = vor.u32 %v40, %v41
    %v43 = vshll.u32 2131351028, %v34
    %v44 = vshrl.u32 2102212464, %v35
    %v45 = vor.u32 %v43, %v44
    %v46 = vshll.u32 2102212464, %v34
    %v47 = vshrl.u32 920167782, %v35
    %v48 = vor.u32 %v46, %v47
    %v49 = vshll.u32 920167782, %v34
    %v50 = vshrl.u32 1326507024, %v35
    %v51 = vor.u32 %v49, %v50
    %vm52 = vcmp.lt.s32.totalorder %v33, 1
    %vm53 = vcmp.lt.s32.totalorder %v33, 2
    %vm54 = vcmp.lt.s32.totalorder %v33, 3
    %vm55 = vcmp.lt.s32.totalorder %v33, 4
    %v56 = vsel %vm52, %v36, %v39
    %v57 = vsel %vm55, %v45, 2102212464
    %v58 = vsel %vm54, %v42, %v57
    %v59 = vsel %vm53, %v56, %v58
    %v60 = vsel %vm52, %v39, %v42
    %v61 = vsel %vm55, %v48, 920167782
    %v62 = vsel %vm54, %v45, %v61
    %v63 = vsel %vm53, %v60, %v62
    %v64 = vsel %vm52, %v42, %v45
    %v65 = vsel %vm55, %v51, 1326507024
    %v66 = vsel %vm54, %v48, %v65
    %v67 = vsel %vm53, %v64, %v66
    %v68 = vshll.u32 %v28, 8
    %v69 = vand.u32 %v68, 65535
    %v70 = vshrl.u32 %v68, 16
    %v71 = vand.u32 %v67, 65535
    %v72 = vshrl.u32 %v67, 16
    %v73 = vmul.u32 %v69, %v71
    %v74 = vmul.u32 %v69, %v72
    %v75 = vmul.u32 %v70, %v71
    %v76 = vmul.u32 %v70, %v72
    %v77 = vshll.u32 %v74, 16
    %v78 = vshrl.u32 %v74, 16
    %v79 = vshll.u32 %v75, 16
    %v80 = vshrl.u32 %v75, 16
    %vm81 = vc.u32 %v73, %v77
    %v82 = vsel %vm81, 1, 0
    %v83 = vadd.s32 %v73, %v77
    %v84 = vadd.s32 %v76, %v82
    %vm85 = vc.u32 %v83, %v79
    %v86 = vsel %vm85, 1, 0
    %v87 = vadd.s32 %v83, %v79
    %v88 = vadd.s32 %v84, %v86
    %v89 = vadd.s32 %v88, %v78
    %v90 = vadd.s32 %v89, %v80
    %v91 = vand.u32 %v68, 65535
    %v92 = vshrl.u32 %v68, 16
    %v93 = vand.u32 %v63, 65535
    %v94 = vshrl.u32 %v63, 16
    %v95 = vmul.u32 %v91, %v93
    %v96 = vmul.u32 %v91, %v94
    %v97 = vmul.u32 %v92, %v93
    %v98 = vmul.u32 %v92, %v94
    %v99 = vshll.u32 %v96, 16
    %v100 = vshrl.u32 %v96, 16
    %v101 = vshll.u32 %v97, 16
    %v102 = vshrl.u32 %v97, 16
    %vm103 = vc.u32 %v95, %v99
    %v104 = vsel %vm103, 1, 0
    %v105 = vadd.s32 %v95, %v99
    %v106 = vadd.s32 %v98, %v104
    %vm107 = vc.u32 %v105, %v101
    %v108 = vsel %vm107, 1, 0
    %v109 = vadd.s32 %v105, %v101
    %v110 = vadd.s32 %v106, %v108
    %v111 = vadd.s32 %v110, %v100
    %v112 = vadd.s32 %v111, %v102
    %v113 = vmul.u32 %v68, %v59
    %v114 = vadd.s32 %v90, %v109
    %vm115 = vc.u32 %v90, %v109
    %v116 = vadd.s32 %v112, 1
    %v117 = vsel %vm115, %v116, %v112
    %v118 = vadd.s32 %v113, %v117
    %v119 = vadd.s32 %v118, 536870912
    %v120 = vshrl.u32 %v119, 30
    %v121 = vshll.u32 %v120, 30
    %v122 = vsub.s32 %v118, %v121
    %vm123 = vcmp.lt.s32.totalorder %v122, 0
    %v124 = vsub.s32 0, %v122
    %v125 = vsel %vm123, %v124, %v122
    %v126 = vclz %v125
    %v127 = vsub.s32 %v126, 2
    %vm128 = vcmp.gt.s32.totalorder 0, %v127
    %v129 = vsel %vm128, 0, %v127
    %v130 = vsub.s32 32, %v129
    %v131 = vshll.u32 %v122, %v129
    %v132 = vshrl.u32 %v114, %v130
    %v133 = vor.u32 %v131, %v132
    %v134 = vsub.s32 4294967266, %v129
    %v135 = vadd.s32 %v134, 127
    %v136 = vshll.u32 %v135, 23
    %v137 = vor.u32 4788187, %v136
    %v138 = vand.u32 2147483647, %v137
    %v140 = vcvt.s32.f32 %v133
    %v141 = vmul.f32 %v140, %v138
    %v142 = vxor.u32 %v141, 2147483648
    %v143 = vsel %vm22, %v142, %v141
    %v144 = vsub.s32 4, %v120
    %v145 = vsel %vm22, %v144, %v120
    %v146 = vsel %vm21, %v16, %v143
    %v147 = vsel %vm21, 0, %v145
    %v148 = vmul.f32 %v146, %v146
    %v149 = vmul.f32 %v148, -0.001358992
    %v150 = vadd.f32 %v149, 0.041655596
    %v151 = vmul.f32 %v148, %v150
    %v152 = vadd.f32 %v151, -0.4999988
    %v153 = vmul.f32 %v148, %v152
    %v154 = vadd.f32 1.0, %v153
    %v155 = vmul.f32 %v146, %v146
    %v156 = vmul.f32 %v155, -0.00019511016
    %v157 = vadd.f32 %v156, 0.008332121
    %v158 = vmul.f32 %v155, %v157
    %v159 = vadd.f32 %v158, -0.16666654
    %v160 = vmul.f32 %v155, %v159
    %v161 = vadd.f32 %v160, 1.0
    %v162 = vmul.f32 %v161, %v146
    %vm163 = vweird.f32 %v16
    %v164 = vadd.s32 %v147, 3
    %v165 = vand.u32 %v164, 3
    %vm166 = vcmp.lt.s32.totalorder %v165, 2
    %vm167 = vcmp.eq.s32.totalorder %v165, 0
    %v168 = vxor.u32 %v162, 2147483648
    %v169 = vsel %vm167, %v154, %v168
    %vm170 = vcmp.eq.s32.totalorder %v165, 2
    %v171 = vxor.u32 %v154, 2147483648
    %v172 = vsel %vm170, %v171, %v162
    %v173 = vsel %vm166, %v169, %v172
    %v174 = vsel %vm163, nan, %v173
    %v175 = vand.u32 2147483647, %v17
    %vm176 = vcmp.le.f32.partialorder %v175, 0.7853982
    %vm177 = vcmp.lt.s32.totalorder %v17, 0
    %v178 = vand.u32 %v17, 2139095040
    %v179 = vshrl.u32 %v178, 23
    %v180 = vsub.s32 %v179, 127
    %v181 = vand.u32 2147483647, %v17
    %v182 = vand.u32 %v181, 8388607
    %v183 = vor.u32 %v182, 8388608
    %v184 = vsub.s32 0, %v183
    %v185 = vadd.s32 %v180, 1
    %vm186 = vcmp.gt.s32.totalorder %v185, 0
    %v187 = vsel %vm186, %v185, 0
    %v188 = vshrl.u32 %v187, 5
    %v189 = vand.u32 %v187, 31
    %v190 = vsub.s32 32, %v189
    %v191 = vshrl.u32 683565275, %v190
    %v192 = vshll.u32 683565275, %v189
    %v193 = vshrl.u32 2475754826, %v190
    %v194 = vor.u32 %v192, %v193
    %v195 = vshll.u32 2475754826, %v189
    %v196 = vshrl.u32 2131351028, %v190
    %v197 = vor.u32 %v195, %v196
    %v198 = vshll.u32 2131351028, %v189
    %v199 = vshrl.u32 2102212464, %v190
    %v200 = vor.u32 %v198, %v199
    %v201 = vshll.u32 2102212464, %v189
    %v202 = vshrl.u32 920167782, %v190
    %v203 = vor.u32 %v201, %v202
    %v204 = vshll.u32 920167782, %v189
    %v205 = vshrl.u32 1326507024, %v190
    %v206 = vor.u32 %v204, %v205
    %vm207 = vcmp.lt.s32.totalorder %v188, 1
    %vm208 = vcmp.lt.s32.totalorder %v188, 2
    %vm209 = vcmp.lt.s32.totalorder %v188, 3
    %vm210 = vcmp.lt.s32.totalorder %v188, 4
    %v211 = vsel %vm207, %v191, %v194
    %v212 = vsel %vm210, %v200, 2102212464
    %v213 = vsel %vm209, %v197, %v212
    %v214 = vsel %vm208, %v211, %v213
    %v215 = vsel %vm207, %v194, %v197
    %v216 = vsel %vm210, %v203, 920167782
    %v217 = vsel %vm209, %v200, %v216
    %v218 = vsel %vm208, %v215, %v217
    %v219 = vsel %vm207, %v197, %v200
    %v220 = vsel %vm210, %v206, 1326507024
    %v221 = vsel %vm209, %v203, %v220
    %v222 = vsel %vm208, %v219, %v221
    %v223 = vshll.u32 %v183, 8
    %v224 = vand.u32 %v223, 65535
    %v225 = vshrl.u32 %v223, 16
    %v226 = vand.u32 %v222, 65535
    %v227 = vshrl.u32 %v222, 16
    %v228 = vmul.u32 %v224, %v226
    %v229 = vmul.u32 %v224, %v227
    %v230 = vmul.u32 %v225, %v226
    %v231 = vmul.u32 %v225, %v227
    %v232 = vshll.u32 %v229, 16
    %v233 = vshrl.u32 %v229, 16
    %v234 = vshll.u32 %v230, 16
    %v235 = vshrl.u32 %v230, 16
    %vm236 = vc.u32 %v228, %v232
    %v237 = vsel %vm236, 1, 0
    %v238 = vadd.s32 %v228, %v232
    %v239 = vadd.s32 %v231, %v237
    %vm240 = vc.u32 %v238, %v234
    %v241 = vsel %vm240, 1, 0
    %v242 = vadd.s32 %v238, %v234
    %v243 = vadd.s32 %v239, %v241
    %v244 = vadd.s32 %v243, %v233
    %v245 = vadd.s32 %v244, %v235
    %v246 = vand.u32 %v223, 65535
    %v247 = vshrl.u32 %v223, 16
    %v248 = vand.u32 %v218, 65535
    %v249 = vshrl.u32 %v218, 16
    %v250 = vmul.u32 %v246, %v248
    %v251 = vmul.u32 %v246, %v249
    %v252 = vmul.u32 %v247, %v248
    %v253 = vmul.u32 %v247, %v249
    %v254 = vshll.u32 %v251, 16
    %v255 = vshrl.u32 %v251, 16
    %v256 = vshll.u32 %v252, 16
    %v257 = vshrl.u32 %v252, 16
    %vm258 = vc.u32 %v250, %v254
    %v259 = vsel %vm258, 1, 0
    %v260 = vadd.s32 %v250, %v254
    %v261 = vadd.s32 %v253, %v259
    %vm262 = vc.u32 %v260, %v256
    %v263 = vsel %vm262, 1, 0
    %v264 = vadd.s32 %v260, %v256
    %v265 = vadd.s32 %v261, %v263
    %v266 = vadd.s32 %v265, %v255
    %v267 = vadd.s32 %v266, %v257
    %v268 = vmul.u32 %v223, %v214
    %v269 = vadd.s32 %v245, %v264
    %vm270 = vc.u32 %v245, %v264
    %v271 = vadd.s32 %v267, 1
    %v272 = vsel %vm270, %v271, %v267
    %v273 = vadd.s32 %v268, %v272
    %v274 = vadd.s32 %v273, 536870912
    %v275 = vshrl.u32 %v274, 30
    %v276 = vshll.u32 %v275, 30
    %v277 = vsub.s32 %v273, %v276
    %vm278 = vcmp.lt.s32.totalorder %v277, 0
    %v279 = vsub.s32 0, %v277
    %v280 = vsel %vm278, %v279, %v277
    %v281 = vclz %v280
    %v282 = vsub.s32 %v281, 2
    %vm283 = vcmp.gt.s32.totalorder 0, %v282
    %v284 = vsel %vm283, 0, %v282
    %v285 = vsub.s32 32, %v284
    %v286 = vshll.u32 %v277, %v284
    %v287 = vshrl.u32 %v269, %v285
    %v288 = vor.u32 %v286, %v287
    %v289 = vsub.s32 4294967266, %v284
    %v290 = vadd.s32 %v289, 127
    %v291 = vshll.u32 %v290, 23
    %v292 = vor.u32 4788187, %v291
    %v293 = vand.u32 2147483647, %v292
    %v295 = vcvt.s32.f32 %v288
    %v296 = vmul.f32 %v295, %v293
    %v297 = vxor.u32 %v296, 2147483648
    %v298 = vsel %vm177, %v297, %v296
    %v299 = vsub.s32 4, %v275
    %v300 = vsel %vm177, %v299, %v275
    %v301 = vsel %vm176, %v17, %v298
    %v302 = vsel %vm176, 0, %v300
    %v303 = vmul.f32 %v301, %v301
    %v304 = vmul.f32 %v303, -0.001358992
    %v305 = vadd.f32 %v304, 0.041655596
    %v306 = vmul.f32 %v303, %v305
    %v307 = vadd.f32 %v306, -0.4999988
    %v308 = vmul.f32 %v303, %v307
    %v309 = vadd.f32 1.0, %v308
    %v310 = vmul.f32 %v301, %v301
    %v311 = vmul.f32 %v310, -0.00019511016
    %v312 = vadd.f32 %v311, 0.008332121
    %v313 = vmul.f32 %v310, %v312
    %v314 = vadd.f32 %v313, -0.16666654
    %v315 = vmul.f32 %v310, %v314
    %v316 = vadd.f32 %v315, 1.0
    %v317 = vmul.f32 %v316, %v301
    %vm318 = vweird.f32 %v17
    %v319 = vadd.s32 %v302, 3
    %v320 = vand.u32 %v319, 3
    %vm321 = vcmp.lt.s32.totalorder %v320, 2
    %vm322 = vcmp.eq.s32.totalorder %v320, 0
    %v323 = vxor.u32 %v317, 2147483648
    %v324 = vsel %vm322, %v309, %v323
    %vm325 = vcmp.eq.s32.totalorder %v320, 2
    %v326 = vxor.u32 %v309, 2147483648
    %v327 = vsel %vm325, %v326, %v317
    %v328 = vsel %vm321, %v324, %v327
    %v329 = vsel %vm318, nan, %v328
    %v330 = vpack.c.bf16 %v329, %v174
    %v331 = vand.u32 2147483647, %v16
    %vm332 = vcmp.le.f32.partialorder %v331, 0.7853982
    %vm333 = vcmp.lt.s32.totalorder %v16, 0
    %v334 = vand.u32 %v16, 2139095040
    %v335 = vshrl.u32 %v334, 23
    %v336 = vsub.s32 %v335, 127
    %v337 = vand.u32 2147483647, %v16
    %v338 = vand.u32 %v337, 8388607
    %v339 = vor.u32 %v338, 8388608
    %v340 = vsub.s32 0, %v339
    %v341 = vadd.s32 %v336, 1
    %vm342 = vcmp.gt.s32.totalorder %v341, 0
    %v343 = vsel %vm342, %v341, 0
    %v344 = vshrl.u32 %v343, 5
    %v345 = vand.u32 %v343, 31
    %v346 = vsub.s32 32, %v345
    %v347 = vshrl.u32 683565275, %v346
    %v348 = vshll.u32 683565275, %v345
    %v349 = vshrl.u32 2475754826, %v346
    %v350 = vor.u32 %v348, %v349
    %v351 = vshll.u32 2475754826, %v345
    %v352 = vshrl.u32 2131351028, %v346
    %v353 = vor.u32 %v351, %v352
    %v354 = vshll.u32 2131351028, %v345
    %v355 = vshrl.u32 2102212464, %v346
    %v356 = vor.u32 %v354, %v355
    %v357 = vshll.u32 2102212464, %v345
    %v358 = vshrl.u32 920167782, %v346
    %v359 = vor.u32 %v357, %v358
    %v360 = vshll.u32 920167782, %v345
    %v361 = vshrl.u32 1326507024, %v346
    %v362 = vor.u32 %v360, %v361
    %vm363 = vcmp.lt.s32.totalorder %v344, 1
    %vm364 = vcmp.lt.s32.totalorder %v344, 2
    %vm365 = vcmp.lt.s32.totalorder %v344, 3
    %vm366 = vcmp.lt.s32.totalorder %v344, 4
    %v367 = vsel %vm363, %v347, %v350
    %v368 = vsel %vm366, %v356, 2102212464
    %v369 = vsel %vm365, %v353, %v368
    %v370 = vsel %vm364, %v367, %v369
    %v371 = vsel %vm363, %v350, %v353
    %v372 = vsel %vm366, %v359, 920167782
    %v373 = vsel %vm365, %v356, %v372
    %v374 = vsel %vm364, %v371, %v373
    %v375 = vsel %vm363, %v353, %v356
    %v376 = vsel %vm366, %v362, 1326507024
    %v377 = vsel %vm365, %v359, %v376
    %v378 = vsel %vm364, %v375, %v377
    %v379 = vshll.u32 %v339, 8
    %v380 = vand.u32 %v379, 65535
    %v381 = vshrl.u32 %v379, 16
    %v382 = vand.u32 %v378, 65535
    %v383 = vshrl.u32 %v378, 16
    %v384 = vmul.u32 %v380, %v382
    %v385 = vmul.u32 %v380, %v383
    %v386 = vmul.u32 %v381, %v382
    %v387 = vmul.u32 %v381, %v383
    %v388 = vshll.u32 %v385, 16
    %v389 = vshrl.u32 %v385, 16
    %v390 = vshll.u32 %v386, 16
    %v391 = vshrl.u32 %v386, 16
    %vm392 = vc.u32 %v384, %v388
    %v393 = vsel %vm392, 1, 0
    %v394 = vadd.s32 %v384, %v388
    %v395 = vadd.s32 %v387, %v393
    %vm396 = vc.u32 %v394, %v390
    %v397 = vsel %vm396, 1, 0
    %v398 = vadd.s32 %v394, %v390
    %v399 = vadd.s32 %v395, %v397
    %v400 = vadd.s32 %v399, %v389
    %v401 = vadd.s32 %v400, %v391
    %v402 = vand.u32 %v379, 65535
    %v403 = vshrl.u32 %v379, 16
    %v404 = vand.u32 %v374, 65535
    %v405 = vshrl.u32 %v374, 16
    %v406 = vmul.u32 %v402, %v404
    %v407 = vmul.u32 %v402, %v405
    %v408 = vmul.u32 %v403, %v404
    %v409 = vmul.u32 %v403, %v405
    %v410 = vshll.u32 %v407, 16
    %v411 = vshrl.u32 %v407, 16
    %v412 = vshll.u32 %v408, 16
    %v413 = vshrl.u32 %v408, 16
    %vm414 = vc.u32 %v406, %v410
    %v415 = vsel %vm414, 1, 0
    %v416 = vadd.s32 %v406, %v410
    %v417 = vadd.s32 %v409, %v415
    %vm418 = vc.u32 %v416, %v412
    %v419 = vsel %vm418, 1, 0
    %v420 = vadd.s32 %v416, %v412
    %v421 = vadd.s32 %v417, %v419
    %v422 = vadd.s32 %v421, %v411
    %v423 = vadd.s32 %v422, %v413
    %v424 = vmul.u32 %v379, %v370
    %v425 = vadd.s32 %v401, %v420
    %vm426 = vc.u32 %v401, %v420
    %v427 = vadd.s32 %v423, 1
    %v428 = vsel %vm426, %v427, %v423
    %v429 = vadd.s32 %v424, %v428
    %v430 = vadd.s32 %v429, 536870912
    %v431 = vshrl.u32 %v430, 30
    %v432 = vshll.u32 %v431, 30
    %v433 = vsub.s32 %v429, %v432
    %vm434 = vcmp.lt.s32.totalorder %v433, 0
    %v435 = vsub.s32 0, %v433
    %v436 = vsel %vm434, %v435, %v433
    %v437 = vclz %v436
    %v438 = vsub.s32 %v437, 2
    %vm439 = vcmp.gt.s32.totalorder 0, %v438
    %v440 = vsel %vm439, 0, %v438
    %v441 = vsub.s32 32, %v440
    %v442 = vshll.u32 %v433, %v440
    %v443 = vshrl.u32 %v425, %v441
    %v444 = vor.u32 %v442, %v443
    %v445 = vsub.s32 4294967266, %v440
    %v446 = vadd.s32 %v445, 127
    %v447 = vshll.u32 %v446, 23
    %v448 = vor.u32 4788187, %v447
    %v449 = vand.u32 2147483647, %v448
    %v451 = vcvt.s32.f32 %v444
    %v452 = vmul.f32 %v451, %v449
    %v453 = vxor.u32 %v452, 2147483648
    %v454 = vsel %vm333, %v453, %v452
    %v455 = vsub.s32 4, %v431
    %v456 = vsel %vm333, %v455, %v431
    %v457 = vsel %vm332, %v16, %v454
    %v458 = vsel %vm332, 0, %v456
    %v459 = vmul.f32 %v457, %v457
    %v460 = vmul.f32 %v459, -0.001358992
    %v461 = vadd.f32 %v460, 0.041655596
    %v462 = vmul.f32 %v459, %v461
    %v463 = vadd.f32 %v462, -0.4999988
    %v464 = vmul.f32 %v459, %v463
    %v465 = vadd.f32 1.0, %v464
    %v466 = vmul.f32 %v457, %v457
    %v467 = vmul.f32 %v466, -0.00019511016
    %v468 = vadd.f32 %v467, 0.008332121
    %v469 = vmul.f32 %v466, %v468
    %v470 = vadd.f32 %v469, -0.16666654
    %v471 = vmul.f32 %v466, %v470
    %v472 = vadd.f32 %v471, 1.0
    %v473 = vmul.f32 %v472, %v457
    %vm474 = vweird.f32 %v16
    %v475 = vand.u32 %v458, 3
    %vm476 = vcmp.lt.s32.totalorder %v475, 2
    %vm477 = vcmp.eq.s32.totalorder %v475, 0
    %v478 = vxor.u32 %v473, 2147483648
    %v479 = vsel %vm477, %v465, %v478
    %vm480 = vcmp.eq.s32.totalorder %v475, 2
    %v481 = vxor.u32 %v465, 2147483648
    %v482 = vsel %vm480, %v481, %v473
    %v483 = vsel %vm476, %v479, %v482
    %v484 = vsel %vm474, nan, %v483
    %v485 = vand.u32 2147483647, %v17
    %vm486 = vcmp.le.f32.partialorder %v485, 0.7853982
    %vm487 = vcmp.lt.s32.totalorder %v17, 0
    %v488 = vand.u32 %v17, 2139095040
    %v489 = vshrl.u32 %v488, 23
    %v490 = vsub.s32 %v489, 127
    %v491 = vand.u32 2147483647, %v17
    %v492 = vand.u32 %v491, 8388607
    %v493 = vor.u32 %v492, 8388608
    %v494 = vsub.s32 0, %v493
    %v495 = vadd.s32 %v490, 1
    %vm496 = vcmp.gt.s32.totalorder %v495, 0
    %v497 = vsel %vm496, %v495, 0
    %v498 = vshrl.u32 %v497, 5
    %v499 = vand.u32 %v497, 31
    %v500 = vsub.s32 32, %v499
    %v501 = vshrl.u32 683565275, %v500
    %v502 = vshll.u32 683565275, %v499
    %v503 = vshrl.u32 2475754826, %v500
    %v504 = vor.u32 %v502, %v503
    %v505 = vshll.u32 2475754826, %v499
    %v506 = vshrl.u32 2131351028, %v500
    %v507 = vor.u32 %v505, %v506
    %v508 = vshll.u32 2131351028, %v499
    %v509 = vshrl.u32 2102212464, %v500
    %v510 = vor.u32 %v508, %v509
    %v511 = vshll.u32 2102212464, %v499
    %v512 = vshrl.u32 920167782, %v500
    %v513 = vor.u32 %v511, %v512
    %v514 = vshll.u32 920167782, %v499
    %v515 = vshrl.u32 1326507024, %v500
    %v516 = vor.u32 %v514, %v515
    %vm517 = vcmp.lt.s32.totalorder %v498, 1
    %vm518 = vcmp.lt.s32.totalorder %v498, 2
    %vm519 = vcmp.lt.s32.totalorder %v498, 3
    %vm520 = vcmp.lt.s32.totalorder %v498, 4
    %v521 = vsel %vm517, %v501, %v504
    %v522 = vsel %vm520, %v510, 2102212464
    %v523 = vsel %vm519, %v507, %v522
    %v524 = vsel %vm518, %v521, %v523
    %v525 = vsel %vm517, %v504, %v507
    %v526 = vsel %vm520, %v513, 920167782
    %v527 = vsel %vm519, %v510, %v526
    %v528 = vsel %vm518, %v525, %v527
    %v529 = vsel %vm517, %v507, %v510
    %v530 = vsel %vm520, %v516, 1326507024
    %v531 = vsel %vm519, %v513, %v530
    %v532 = vsel %vm518, %v529, %v531
    %v533 = vshll.u32 %v493, 8
    %v534 = vand.u32 %v533, 65535
    %v535 = vshrl.u32 %v533, 16
    %v536 = vand.u32 %v532, 65535
    %v537 = vshrl.u32 %v532, 16
    %v538 = vmul.u32 %v534, %v536
    %v539 = vmul.u32 %v534, %v537
    %v540 = vmul.u32 %v535, %v536
    %v541 = vmul.u32 %v535, %v537
    %v542 = vshll.u32 %v539, 16
    %v543 = vshrl.u32 %v539, 16
    %v544 = vshll.u32 %v540, 16
    %v545 = vshrl.u32 %v540, 16
    %vm546 = vc.u32 %v538, %v542
    %v547 = vsel %vm546, 1, 0
    %v548 = vadd.s32 %v538, %v542
    %v549 = vadd.s32 %v541, %v547
    %vm550 = vc.u32 %v548, %v544
    %v551 = vsel %vm550, 1, 0
    %v552 = vadd.s32 %v548, %v544
    %v553 = vadd.s32 %v549, %v551
    %v554 = vadd.s32 %v553, %v543
    %v555 = vadd.s32 %v554, %v545
    %v556 = vand.u32 %v533, 65535
    %v557 = vshrl.u32 %v533, 16
    %v558 = vand.u32 %v528, 65535
    %v559 = vshrl.u32 %v528, 16
    %v560 = vmul.u32 %v556, %v558
    %v561 = vmul.u32 %v556, %v559
    %v562 = vmul.u32 %v557, %v558
    %v563 = vmul.u32 %v557, %v559
    %v564 = vshll.u32 %v561, 16
    %v565 = vshrl.u32 %v561, 16
    %v566 = vshll.u32 %v562, 16
    %v567 = vshrl.u32 %v562, 16
    %vm568 = vc.u32 %v560, %v564
    %v569 = vsel %vm568, 1, 0
    %v570 = vadd.s32 %v560, %v564
    %v571 = vadd.s32 %v563, %v569
    %vm572 = vc.u32 %v570, %v566
    %v573 = vsel %vm572, 1, 0
    %v574 = vadd.s32 %v570, %v566
    %v575 = vadd.s32 %v571, %v573
    %v576 = vadd.s32 %v575, %v565
    %v577 = vadd.s32 %v576, %v567
    %v578 = vmul.u32 %v533, %v524
    %v579 = vadd.s32 %v555, %v574
    %vm580 = vc.u32 %v555, %v574
    %v581 = vadd.s32 %v577, 1
    %v582 = vsel %vm580, %v581, %v577
    %v583 = vadd.s32 %v578, %v582
    %v584 = vadd.s32 %v583, 536870912
    %v585 = vshrl.u32 %v584, 30
    %v586 = vshll.u32 %v585, 30
    %v587 = vsub.s32 %v583, %v586
    %vm588 = vcmp.lt.s32.totalorder %v587, 0
    %v589 = vsub.s32 0, %v587
    %v590 = vsel %vm588, %v589, %v587
    %v591 = vclz %v590
    %v592 = vsub.s32 %v591, 2
    %vm593 = vcmp.gt.s32.totalorder 0, %v592
    %v594 = vsel %vm593, 0, %v592
    %v595 = vsub.s32 32, %v594
    %v596 = vshll.u32 %v587, %v594
    %v597 = vshrl.u32 %v579, %v595
    %v598 = vor.u32 %v596, %v597
    %v599 = vsub.s32 4294967266, %v594
    %v600 = vadd.s32 %v599, 127
    %v601 = vshll.u32 %v600, 23
    %v602 = vor.u32 4788187, %v601
    %v603 = vand.u32 2147483647, %v602
    %v605 = vcvt.s32.f32 %v598
    %v606 = vmul.f32 %v605, %v603
    %v607 = vxor.u32 %v606, 2147483648
    %v608 = vsel %vm487, %v607, %v606
    %v609 = vsub.s32 4, %v585
    %v610 = vsel %vm487, %v609, %v585
    %v611 = vsel %vm486, %v17, %v608
    %v612 = vsel %vm486, 0, %v610
    %v613 = vmul.f32 %v611, %v611
    %v614 = vmul.f32 %v613, -0.001358992
    %v615 = vadd.f32 %v614, 0.041655596
    %v616 = vmul.f32 %v613, %v615
    %v617 = vadd.f32 %v616, -0.4999988
    %v618 = vmul.f32 %v613, %v617
    %v619 = vadd.f32 1.0, %v618
    %v620 = vmul.f32 %v611, %v611
    %v621 = vmul.f32 %v620, -0.00019511016
    %v622 = vadd.f32 %v621, 0.008332121
    %v623 = vmul.f32 %v620, %v622
    %v624 = vadd.f32 %v623, -0.16666654
    %v625 = vmul.f32 %v620, %v624
    %v626 = vadd.f32 %v625, 1.0
    %v627 = vmul.f32 %v626, %v611
    %vm628 = vweird.f32 %v17
    %v629 = vand.u32 %v612, 3
    %vm630 = vcmp.lt.s32.totalorder %v629, 2
    %vm631 = vcmp.eq.s32.totalorder %v629, 0
    %v632 = vxor.u32 %v627, 2147483648
    %v633 = vsel %vm631, %v619, %v632
    %vm634 = vcmp.eq.s32.totalorder %v629, 2
    %v635 = vxor.u32 %v619, 2147483648
    %v636 = vsel %vm634, %v635, %v627
    %v637 = vsel %vm630, %v633, %v636
    %v638 = vsel %vm628, nan, %v637
    %v639 = vpack.c.bf16 %v638, %v484
    %v640 = vld [vmem:[%s1] sm:$0xf]
    %v641 = vld [vmem:[%s1 + $0x8] sm:$0xf]
    %vm642 = vcmask 64512
    %v644 = vsel %vm642, %v639, 0
    %vm646 = vcmask 1043456
    %v648 = vsel %vm646, %v641, 0
    %650 = vmatpush.bf16.msra.mxu0 0
    %651 = vmatpush.bf16.msra.mxu0 0
    %652 = vmatpush.bf16.msra.mxu0 0
    %653 = vmatpush.bf16.msra.mxu0 0
    %654 = vmatpush.bf16.msra.mxu0 0
    %655 = vmatpush.bf16.msra.mxu0 0
    %656 = vmatpush.bf16.msra.mxu0 0
    %657 = vmatpush.bf16.msra.mxu0 %v648
    %658 = vmatmul.bf16.gmra.mxu0 %v644
    %v659 = vpop.f32.mrf.mxu0
    %v660 = vadd.f32 0.0, %v659
    %v661 = vpop.f32.mrf.mxu0
    %v662 = vadd.f32 0.0, %v661
    %663 = vdwg.mxu0
    %v665 = vsel %vm642, %v330, 0
    %v668 = vsel %vm646, %v640, 0
    %670 = vmatpush.bf16.msra.mxu0 0
    %671 = vmatpush.bf16.msra.mxu0 0
    %672 = vmatpush.bf16.msra.mxu0 0
    %673 = vmatpush.bf16.msra.mxu0 0
    %674 = vmatpush.bf16.msra.mxu0 0
    %675 = vmatpush.bf16.msra.mxu0 0
    %676 = vmatpush.bf16.msra.mxu0 0
    %677 = vmatpush.bf16.msra.mxu0 %v668
    %678 = vmatmul.bf16.gmra.mxu0 %v665
    %v679 = vpop.f32.mrf.mxu0
    %v680 = vadd.f32 %v660, %v679
    %v681 = vpop.f32.mrf.mxu0
    %v682 = vadd.f32 %v662, %v681
    %683 = vdwg.mxu0
    %v684 = vld [vmem:[%s1 + $0x10] sm:$0xf]
    %v685 = vld [vmem:[%s1 + $0x18] sm:$0xf]
    %v687 = vsel %vm646, %v685, 0
    %689 = vmatpush.bf16.msra.mxu0 0
    %690 = vmatpush.bf16.msra.mxu0 0
    %691 = vmatpush.bf16.msra.mxu0 0
    %692 = vmatpush.bf16.msra.mxu0 0
    %693 = vmatpush.bf16.msra.mxu0 0
    %694 = vmatpush.bf16.msra.mxu0 0
    %695 = vmatpush.bf16.msra.mxu0 0
    %696 = vmatpush.bf16.msra.mxu0 %v687
    %697 = vmatmul.bf16.gmra.mxu0 %v644
    %v698 = vpop.f32.mrf.mxu0
    %v699 = vadd.f32 0.0, %v698
    %v700 = vpop.f32.mrf.mxu0
    %v701 = vadd.f32 0.0, %v700
    %702 = vdwg.mxu0
    %v704 = vsel %vm646, %v684, 0
    %706 = vmatpush.bf16.msra.mxu0 0
    %707 = vmatpush.bf16.msra.mxu0 0
    %708 = vmatpush.bf16.msra.mxu0 0
    %709 = vmatpush.bf16.msra.mxu0 0
    %710 = vmatpush.bf16.msra.mxu0 0
    %711 = vmatpush.bf16.msra.mxu0 0
    %712 = vmatpush.bf16.msra.mxu0 0
    %713 = vmatpush.bf16.msra.mxu0 %v704
    %714 = vmatmul.bf16.gmra.mxu0 %v665
    %v715 = vpop.f32.mrf.mxu0
    %v716 = vadd.f32 %v699, %v715
    %v717 = vpop.f32.mrf.mxu0
    %v718 = vadd.f32 %v701, %v717
    %719 = vdwg.mxu0
    %v720 = vld [vmem:[%s2 + $0x1] sm:$0x1]
    %722 = vset.pattern.permute.xlu0 0
    %723 = vperm.xlu0 %722, %v18
    %v724 = vpop.permute.xlu0 %723
    %727 = vset.pattern.permute.xlu0 0
    %728 = vperm.xlu0 %727, %v19
    %v729 = vpop.permute.xlu0 %728
    %v731 = vperm.slane %v720, 0
    %v732 = vmul.f32 %v724, %v731
    %v733 = vmul.f32 %v729, %v731
    %v734 = vmul.f32 %v680, %v732
    %v735 = vmul.f32 %v682, %v733
    %v736 = vadd.f32 %v734, %v716
    %v737 = vadd.f32 %v735, %v718
    %v738 = vld [vmem:[%s0 + $0x10] sm:$0xff]
    %v739 = vld [vmem:[%s0 + $0x18] sm:$0xff]
    %v740 = vld [vmem:[%s0 + $0x30] sm:$0xff]
    %v741 = vld [vmem:[%s0 + $0x38] sm:$0xff]
    %v742 = vand.u32 2147483647, %v738
    %vm743 = vcmp.le.f32.partialorder %v742, 0.7853982
    %vm744 = vcmp.lt.s32.totalorder %v738, 0
    %v745 = vand.u32 %v738, 2139095040
    %v746 = vshrl.u32 %v745, 23
    %v747 = vsub.s32 %v746, 127
    %v748 = vand.u32 2147483647, %v738
    %v749 = vand.u32 %v748, 8388607
    %v750 = vor.u32 %v749, 8388608
    %v751 = vsub.s32 0, %v750
    %v752 = vadd.s32 %v747, 1
    %vm753 = vcmp.gt.s32.totalorder %v752, 0
    %v754 = vsel %vm753, %v752, 0
    %v755 = vshrl.u32 %v754, 5
    %v756 = vand.u32 %v754, 31
    %v757 = vsub.s32 32, %v756
    %v758 = vshrl.u32 683565275, %v757
    %v759 = vshll.u32 683565275, %v756
    %v760 = vshrl.u32 2475754826, %v757
    %v761 = vor.u32 %v759, %v760
    %v762 = vshll.u32 2475754826, %v756
    %v763 = vshrl.u32 2131351028, %v757
    %v764 = vor.u32 %v762, %v763
    %v765 = vshll.u32 2131351028, %v756
    %v766 = vshrl.u32 2102212464, %v757
    %v767 = vor.u32 %v765, %v766
    %v768 = vshll.u32 2102212464, %v756
    %v769 = vshrl.u32 920167782, %v757
    %v770 = vor.u32 %v768, %v769
    %v771 = vshll.u32 920167782, %v756
    %v772 = vshrl.u32 1326507024, %v757
    %v773 = vor.u32 %v771, %v772
    %vm774 = vcmp.lt.s32.totalorder %v755, 1
    %vm775 = vcmp.lt.s32.totalorder %v755, 2
    %vm776 = vcmp.lt.s32.totalorder %v755, 3
    %vm777 = vcmp.lt.s32.totalorder %v755, 4
    %v778 = vsel %vm774, %v758, %v761
    %v779 = vsel %vm777, %v767, 2102212464
    %v780 = vsel %vm776, %v764, %v779
    %v781 = vsel %vm775, %v778, %v780
    %v782 = vsel %vm774, %v761, %v764
    %v783 = vsel %vm777, %v770, 920167782
    %v784 = vsel %vm776, %v767, %v783
    %v785 = vsel %vm775, %v782, %v784
    %v786 = vsel %vm774, %v764, %v767
    %v787 = vsel %vm777, %v773, 1326507024
    %v788 = vsel %vm776, %v770, %v787
    %v789 = vsel %vm775, %v786, %v788
    %v790 = vshll.u32 %v750, 8
    %v791 = vand.u32 %v790, 65535
    %v792 = vshrl.u32 %v790, 16
    %v793 = vand.u32 %v789, 65535
    %v794 = vshrl.u32 %v789, 16
    %v795 = vmul.u32 %v791, %v793
    %v796 = vmul.u32 %v791, %v794
    %v797 = vmul.u32 %v792, %v793
    %v798 = vmul.u32 %v792, %v794
    %v799 = vshll.u32 %v796, 16
    %v800 = vshrl.u32 %v796, 16
    %v801 = vshll.u32 %v797, 16
    %v802 = vshrl.u32 %v797, 16
    %vm803 = vc.u32 %v795, %v799
    %v804 = vsel %vm803, 1, 0
    %v805 = vadd.s32 %v795, %v799
    %v806 = vadd.s32 %v798, %v804
    %vm807 = vc.u32 %v805, %v801
    %v808 = vsel %vm807, 1, 0
    %v809 = vadd.s32 %v805, %v801
    %v810 = vadd.s32 %v806, %v808
    %v811 = vadd.s32 %v810, %v800
    %v812 = vadd.s32 %v811, %v802
    %v813 = vand.u32 %v790, 65535
    %v814 = vshrl.u32 %v790, 16
    %v815 = vand.u32 %v785, 65535
    %v816 = vshrl.u32 %v785, 16
    %v817 = vmul.u32 %v813, %v815
    %v818 = vmul.u32 %v813, %v816
    %v819 = vmul.u32 %v814, %v815
    %v820 = vmul.u32 %v814, %v816
    %v821 = vshll.u32 %v818, 16
    %v822 = vshrl.u32 %v818, 16
    %v823 = vshll.u32 %v819, 16
    %v824 = vshrl.u32 %v819, 16
    %vm825 = vc.u32 %v817, %v821
    %v826 = vsel %vm825, 1, 0
    %v827 = vadd.s32 %v817, %v821
    %v828 = vadd.s32 %v820, %v826
    %vm829 = vc.u32 %v827, %v823
    %v830 = vsel %vm829, 1, 0
    %v831 = vadd.s32 %v827, %v823
    %v832 = vadd.s32 %v828, %v830
    %v833 = vadd.s32 %v832, %v822
    %v834 = vadd.s32 %v833, %v824
    %v835 = vmul.u32 %v790, %v781
    %v836 = vadd.s32 %v812, %v831
    %vm837 = vc.u32 %v812, %v831
    %v838 = vadd.s32 %v834, 1
    %v839 = vsel %vm837, %v838, %v834
    %v840 = vadd.s32 %v835, %v839
    %v841 = vadd.s32 %v840, 536870912
    %v842 = vshrl.u32 %v841, 30
    %v843 = vshll.u32 %v842, 30
    %v844 = vsub.s32 %v840, %v843
    %vm845 = vcmp.lt.s32.totalorder %v844, 0
    %v846 = vsub.s32 0, %v844
    %v847 = vsel %vm845, %v846, %v844
    %v848 = vclz %v847
    %v849 = vsub.s32 %v848, 2
    %vm850 = vcmp.gt.s32.totalorder 0, %v849
    %v851 = vsel %vm850, 0, %v849
    %v852 = vsub.s32 32, %v851
    %v853 = vshll.u32 %v844, %v851
    %v854 = vshrl.u32 %v836, %v852
    %v855 = vor.u32 %v853, %v854
    %v856 = vsub.s32 4294967266, %v851
    %v857 = vadd.s32 %v856, 127
    %v858 = vshll.u32 %v857, 23
    %v859 = vor.u32 4788187, %v858
    %v860 = vand.u32 2147483647, %v859
    %v862 = vcvt.s32.f32 %v855
    %v863 = vmul.f32 %v862, %v860
    %v864 = vxor.u32 %v863, 2147483648
    %v865 = vsel %vm744, %v864, %v863
    %v866 = vsub.s32 4, %v842
    %v867 = vsel %vm744, %v866, %v842
    %v868 = vsel %vm743, %v738, %v865
    %v869 = vsel %vm743, 0, %v867
    %v870 = vmul.f32 %v868, %v868
    %v871 = vmul.f32 %v870, -0.001358992
    %v872 = vadd.f32 %v871, 0.041655596
    %v873 = vmul.f32 %v870, %v872
    %v874 = vadd.f32 %v873, -0.4999988
    %v875 = vmul.f32 %v870, %v874
    %v876 = vadd.f32 1.0, %v875
    %v877 = vmul.f32 %v868, %v868
    %v878 = vmul.f32 %v877, -0.00019511016
    %v879 = vadd.f32 %v878, 0.008332121
    %v880 = vmul.f32 %v877, %v879
    %v881 = vadd.f32 %v880, -0.16666654
    %v882 = vmul.f32 %v877, %v881
    %v883 = vadd.f32 %v882, 1.0
    %v884 = vmul.f32 %v883, %v868
    %vm885 = vweird.f32 %v738
    %v886 = vadd.s32 %v869, 3
    %v887 = vand.u32 %v886, 3
    %vm888 = vcmp.lt.s32.totalorder %v887, 2
    %vm889 = vcmp.eq.s32.totalorder %v887, 0
    %v890 = vxor.u32 %v884, 2147483648
    %v891 = vsel %vm889, %v876, %v890
    %vm892 = vcmp.eq.s32.totalorder %v887, 2
    %v893 = vxor.u32 %v876, 2147483648
    %v894 = vsel %vm892, %v893, %v884
    %v895 = vsel %vm888, %v891, %v894
    %v896 = vsel %vm885, nan, %v895
    %v897 = vand.u32 2147483647, %v739
    %vm898 = vcmp.le.f32.partialorder %v897, 0.7853982
    %vm899 = vcmp.lt.s32.totalorder %v739, 0
    %v900 = vand.u32 %v739, 2139095040
    %v901 = vshrl.u32 %v900, 23
    %v902 = vsub.s32 %v901, 127
    %v903 = vand.u32 2147483647, %v739
    %v904 = vand.u32 %v903, 8388607
    %v905 = vor.u32 %v904, 8388608
    %v906 = vsub.s32 0, %v905
    %v907 = vadd.s32 %v902, 1
    %vm908 = vcmp.gt.s32.totalorder %v907, 0
    %v909 = vsel %vm908, %v907, 0
    %v910 = vshrl.u32 %v909, 5
    %v911 = vand.u32 %v909, 31
    %v912 = vsub.s32 32, %v911
    %v913 = vshrl.u32 683565275, %v912
    %v914 = vshll.u32 683565275, %v911
    %v915 = vshrl.u32 2475754826, %v912
    %v916 = vor.u32 %v914, %v915
    %v917 = vshll.u32 2475754826, %v911
    %v918 = vshrl.u32 2131351028, %v912
    %v919 = vor.u32 %v917, %v918
    %v920 = vshll.u32 2131351028, %v911
    %v921 = vshrl.u32 2102212464, %v912
    %v922 = vor.u32 %v920, %v921
    %v923 = vshll.u32 2102212464, %v911
    %v924 = vshrl.u32 920167782, %v912
    %v925 = vor.u32 %v923, %v924
    %v926 = vshll.u32 920167782, %v911
    %v927 = vshrl.u32 1326507024, %v912
    %v928 = vor.u32 %v926, %v927
    %vm929 = vcmp.lt.s32.totalorder %v910, 1
    %vm930 = vcmp.lt.s32.totalorder %v910, 2
    %vm931 = vcmp.lt.s32.totalorder %v910, 3
    %vm932 = vcmp.lt.s32.totalorder %v910, 4
    %v933 = vsel %vm929, %v913, %v916
    %v934 = vsel %vm932, %v922, 2102212464
    %v935 = vsel %vm931, %v919, %v934
    %v936 = vsel %vm930, %v933, %v935
    %v937 = vsel %vm929, %v916, %v919
    %v938 = vsel %vm932, %v925, 920167782
    %v939 = vsel %vm931, %v922, %v938
    %v940 = vsel %vm930, %v937, %v939
    %v941 = vsel %vm929, %v919, %v922
    %v942 = vsel %vm932, %v928, 1326507024
    %v943 = vsel %vm931, %v925, %v942
    %v944 = vsel %vm930, %v941, %v943
    %v945 = vshll.u32 %v905, 8
    %v946 = vand.u32 %v945, 65535
    %v947 = vshrl.u32 %v945, 16
    %v948 = vand.u32 %v944, 65535
    %v949 = vshrl.u32 %v944, 16
    %v950 = vmul.u32 %v946, %v948
    %v951 = vmul.u32 %v946, %v949
    %v952 = vmul.u32 %v947, %v948
    %v953 = vmul.u32 %v947, %v949
    %v954 = vshll.u32 %v951, 16
    %v955 = vshrl.u32 %v951, 16
    %v956 = vshll.u32 %v952, 16
    %v957 = vshrl.u32 %v952, 16
    %vm958 = vc.u32 %v950, %v954
    %v959 = vsel %vm958, 1, 0
    %v960 = vadd.s32 %v950, %v954
    %v961 = vadd.s32 %v953, %v959
    %vm962 = vc.u32 %v960, %v956
    %v963 = vsel %vm962, 1, 0
    %v964 = vadd.s32 %v960, %v956
    %v965 = vadd.s32 %v961, %v963
    %v966 = vadd.s32 %v965, %v955
    %v967 = vadd.s32 %v966, %v957
    %v968 = vand.u32 %v945, 65535
    %v969 = vshrl.u32 %v945, 16
    %v970 = vand.u32 %v940, 65535
    %v971 = vshrl.u32 %v940, 16
    %v972 = vmul.u32 %v968, %v970
    %v973 = vmul.u32 %v968, %v971
    %v974 = vmul.u32 %v969, %v970
    %v975 = vmul.u32 %v969, %v971
    %v976 = vshll.u32 %v973, 16
    %v977 = vshrl.u32 %v973, 16
    %v978 = vshll.u32 %v974, 16
    %v979 = vshrl.u32 %v974, 16
    %vm980 = vc.u32 %v972, %v976
    %v981 = vsel %vm980, 1, 0
    %v982 = vadd.s32 %v972, %v976
    %v983 = vadd.s32 %v975, %v981
    %vm984 = vc.u32 %v982, %v978
    %v985 = vsel %vm984, 1, 0
    %v986 = vadd.s32 %v982, %v978
    %v987 = vadd.s32 %v983, %v985
    %v988 = vadd.s32 %v987, %v977
    %v989 = vadd.s32 %v988, %v979
    %v990 = vmul.u32 %v945, %v936
    %v991 = vadd.s32 %v967, %v986
    %vm992 = vc.u32 %v967, %v986
    %v993 = vadd.s32 %v989, 1
    %v994 = vsel %vm992, %v993, %v989
    %v995 = vadd.s32 %v990, %v994
    %v996 = vadd.s32 %v995, 536870912
    %v997 = vshrl.u32 %v996, 30
    %v998 = vshll.u32 %v997, 30
    %v999 = vsub.s32 %v995, %v998
    %vm1000 = vcmp.lt.s32.totalorder %v999, 0
    %v1001 = vsub.s32 0, %v999
    %v1002 = vsel %vm1000, %v1001, %v999
    %v1003 = vclz %v1002
    %v1004 = vsub.s32 %v1003, 2
    %vm1005 = vcmp.gt.s32.totalorder 0, %v1004
    %v1006 = vsel %vm1005, 0, %v1004
    %v1007 = vsub.s32 32, %v1006
    %v1008 = vshll.u32 %v999, %v1006
    %v1009 = vshrl.u32 %v991, %v1007
    %v1010 = vor.u32 %v1008, %v1009
    %v1011 = vsub.s32 4294967266, %v1006
    %v1012 = vadd.s32 %v1011, 127
    %v1013 = vshll.u32 %v1012, 23
    %v1014 = vor.u32 4788187, %v1013
    %v1015 = vand.u32 2147483647, %v1014
    %v1017 = vcvt.s32.f32 %v1010
    %v1018 = vmul.f32 %v1017, %v1015
    %v1019 = vxor.u32 %v1018, 2147483648
    %v1020 = vsel %vm899, %v1019, %v1018
    %v1021 = vsub.s32 4, %v997
    %v1022 = vsel %vm899, %v1021, %v997
    %v1023 = vsel %vm898, %v739, %v1020
    %v1024 = vsel %vm898, 0, %v1022
    %v1025 = vmul.f32 %v1023, %v1023
    %v1026 = vmul.f32 %v1025, -0.001358992
    %v1027 = vadd.f32 %v1026, 0.041655596
    %v1028 = vmul.f32 %v1025, %v1027
    %v1029 = vadd.f32 %v1028, -0.4999988
    %v1030 = vmul.f32 %v1025, %v1029
    %v1031 = vadd.f32 1.0, %v1030
    %v1032 = vmul.f32 %v1023, %v1023
    %v1033 = vmul.f32 %v1032, -0.00019511016
    %v1034 = vadd.f32 %v1033, 0.008332121
    %v1035 = vmul.f32 %v1032, %v1034
    %v1036 = vadd.f32 %v1035, -0.16666654
    %v1037 = vmul.f32 %v1032, %v1036
    %v1038 = vadd.f32 %v1037, 1.0
    %v1039 = vmul.f32 %v1038, %v1023
    %vm1040 = vweird.f32 %v739
    %v1041 = vadd.s32 %v1024, 3
    %v1042 = vand.u32 %v1041, 3
    %vm1043 = vcmp.lt.s32.totalorder %v1042, 2
    %vm1044 = vcmp.eq.s32.totalorder %v1042, 0
    %v1045 = vxor.u32 %v1039, 2147483648
    %v1046 = vsel %vm1044, %v1031, %v1045
    %vm1047 = vcmp.eq.s32.totalorder %v1042, 2
    %v1048 = vxor.u32 %v1031, 2147483648
    %v1049 = vsel %vm1047, %v1048, %v1039
    %v1050 = vsel %vm1043, %v1046, %v1049
    %v1051 = vsel %vm1040, nan, %v1050
    %v1052 = vpack.c.bf16 %v1051, %v896
    %v1053 = vand.u32 2147483647, %v738
    %vm1054 = vcmp.le.f32.partialorder %v1053, 0.7853982
    %vm1055 = vcmp.lt.s32.totalorder %v738, 0
    %v1056 = vand.u32 %v738, 2139095040
    %v1057 = vshrl.u32 %v1056, 23
    %v1058 = vsub.s32 %v1057, 127
    %v1059 = vand.u32 2147483647, %v738
    %v1060 = vand.u32 %v1059, 8388607
    %v1061 = vor.u32 %v1060, 8388608
    %v1062 = vsub.s32 0, %v1061
    %v1063 = vadd.s32 %v1058, 1
    %vm1064 = vcmp.gt.s32.totalorder %v1063, 0
    %v1065 = vsel %vm1064, %v1063, 0
    %v1066 = vshrl.u32 %v1065, 5
    %v1067 = vand.u32 %v1065, 31
    %v1068 = vsub.s32 32, %v1067
    %v1069 = vshrl.u32 683565275, %v1068
    %v1070 = vshll.u32 683565275, %v1067
    %v1071 = vshrl.u32 2475754826, %v1068
    %v1072 = vor.u32 %v1070, %v1071
    %v1073 = vshll.u32 2475754826, %v1067
    %v1074 = vshrl.u32 2131351028, %v1068
    %v1075 = vor.u32 %v1073, %v1074
    %v1076 = vshll.u32 2131351028, %v1067
    %v1077 = vshrl.u32 2102212464, %v1068
    %v1078 = vor.u32 %v1076, %v1077
    %v1079 = vshll.u32 2102212464, %v1067
    %v1080 = vshrl.u32 920167782, %v1068
    %v1081 = vor.u32 %v1079, %v1080
    %v1082 = vshll.u32 920167782, %v1067
    %v1083 = vshrl.u32 1326507024, %v1068
    %v1084 = vor.u32 %v1082, %v1083
    %vm1085 = vcmp.lt.s32.totalorder %v1066, 1
    %vm1086 = vcmp.lt.s32.totalorder %v1066, 2
    %vm1087 = vcmp.lt.s32.totalorder %v1066, 3
    %vm1088 = vcmp.lt.s32.totalorder %v1066, 4
    %v1089 = vsel %vm1085, %v1069, %v1072
    %v1090 = vsel %vm1088, %v1078, 2102212464
    %v1091 = vsel %vm1087, %v1075, %v1090
    %v1092 = vsel %vm1086, %v1089, %v1091
    %v1093 = vsel %vm1085, %v1072, %v1075
    %v1094 = vsel %vm1088, %v1081, 920167782
    %v1095 = vsel %vm1087, %v1078, %v1094
    %v1096 = vsel %vm1086, %v1093, %v1095
    %v1097 = vsel %vm1085, %v1075, %v1078
    %v1098 = vsel %vm1088, %v1084, 1326507024
    %v1099 = vsel %vm1087, %v1081, %v1098
    %v1100 = vsel %vm1086, %v1097, %v1099
    %v1101 = vshll.u32 %v1061, 8
    %v1102 = vand.u32 %v1101, 65535
    %v1103 = vshrl.u32 %v1101, 16
    %v1104 = vand.u32 %v1100, 65535
    %v1105 = vshrl.u32 %v1100, 16
    %v1106 = vmul.u32 %v1102, %v1104
    %v1107 = vmul.u32 %v1102, %v1105
    %v1108 = vmul.u32 %v1103, %v1104
    %v1109 = vmul.u32 %v1103, %v1105
    %v1110 = vshll.u32 %v1107, 16
    %v1111 = vshrl.u32 %v1107, 16
    %v1112 = vshll.u32 %v1108, 16
    %v1113 = vshrl.u32 %v1108, 16
    %vm1114 = vc.u32 %v1106, %v1110
    %v1115 = vsel %vm1114, 1, 0
    %v1116 = vadd.s32 %v1106, %v1110
    %v1117 = vadd.s32 %v1109, %v1115
    %vm1118 = vc.u32 %v1116, %v1112
    %v1119 = vsel %vm1118, 1, 0
    %v1120 = vadd.s32 %v1116, %v1112
    %v1121 = vadd.s32 %v1117, %v1119
    %v1122 = vadd.s32 %v1121, %v1111
    %v1123 = vadd.s32 %v1122, %v1113
    %v1124 = vand.u32 %v1101, 65535
    %v1125 = vshrl.u32 %v1101, 16
    %v1126 = vand.u32 %v1096, 65535
    %v1127 = vshrl.u32 %v1096, 16
    %v1128 = vmul.u32 %v1124, %v1126
    %v1129 = vmul.u32 %v1124, %v1127
    %v1130 = vmul.u32 %v1125, %v1126
    %v1131 = vmul.u32 %v1125, %v1127
    %v1132 = vshll.u32 %v1129, 16
    %v1133 = vshrl.u32 %v1129, 16
    %v1134 = vshll.u32 %v1130, 16
    %v1135 = vshrl.u32 %v1130, 16
    %vm1136 = vc.u32 %v1128, %v1132
    %v1137 = vsel %vm1136, 1, 0
    %v1138 = vadd.s32 %v1128, %v1132
    %v1139 = vadd.s32 %v1131, %v1137
    %vm1140 = vc.u32 %v1138, %v1134
    %v1141 = vsel %vm1140, 1, 0
    %v1142 = vadd.s32 %v1138, %v1134
    %v1143 = vadd.s32 %v1139, %v1141
    %v1144 = vadd.s32 %v1143, %v1133
    %v1145 = vadd.s32 %v1144, %v1135
    %v1146 = vmul.u32 %v1101, %v1092
    %v1147 = vadd.s32 %v1123, %v1142
    %vm1148 = vc.u32 %v1123, %v1142
    %v1149 = vadd.s32 %v1145, 1
    %v1150 = vsel %vm1148, %v1149, %v1145
    %v1151 = vadd.s32 %v1146, %v1150
    %v1152 = vadd.s32 %v1151, 536870912
    %v1153 = vshrl.u32 %v1152, 30
    %v1154 = vshll.u32 %v1153, 30
    %v1155 = vsub.s32 %v1151, %v1154
    %vm1156 = vcmp.lt.s32.totalorder %v1155, 0
    %v1157 = vsub.s32 0, %v1155
    %v1158 = vsel %vm1156, %v1157, %v1155
    %v1159 = vclz %v1158
    %v1160 = vsub.s32 %v1159, 2
    %vm1161 = vcmp.gt.s32.totalorder 0, %v1160
    %v1162 = vsel %vm1161, 0, %v1160
    %v1163 = vsub.s32 32, %v1162
    %v1164 = vshll.u32 %v1155, %v1162
    %v1165 = vshrl.u32 %v1147, %v1163
    %v1166 = vor.u32 %v1164, %v1165
    %v1167 = vsub.s32 4294967266, %v1162
    %v1168 = vadd.s32 %v1167, 127
    %v1169 = vshll.u32 %v1168, 23
    %v1170 = vor.u32 4788187, %v1169
    %v1171 = vand.u32 2147483647, %v1170
    %v1173 = vcvt.s32.f32 %v1166
    %v1174 = vmul.f32 %v1173, %v1171
    %v1175 = vxor.u32 %v1174, 2147483648
    %v1176 = vsel %vm1055, %v1175, %v1174
    %v1177 = vsub.s32 4, %v1153
    %v1178 = vsel %vm1055, %v1177, %v1153
    %v1179 = vsel %vm1054, %v738, %v1176
    %v1180 = vsel %vm1054, 0, %v1178
    %v1181 = vmul.f32 %v1179, %v1179
    %v1182 = vmul.f32 %v1181, -0.001358992
    %v1183 = vadd.f32 %v1182, 0.041655596
    %v1184 = vmul.f32 %v1181, %v1183
    %v1185 = vadd.f32 %v1184, -0.4999988
    %v1186 = vmul.f32 %v1181, %v1185
    %v1187 = vadd.f32 1.0, %v1186
    %v1188 = vmul.f32 %v1179, %v1179
    %v1189 = vmul.f32 %v1188, -0.00019511016
    %v1190 = vadd.f32 %v1189, 0.008332121
    %v1191 = vmul.f32 %v1188, %v1190
    %v1192 = vadd.f32 %v1191, -0.16666654
    %v1193 = vmul.f32 %v1188, %v1192
    %v1194 = vadd.f32 %v1193, 1.0
    %v1195 = vmul.f32 %v1194, %v1179
    %vm1196 = vweird.f32 %v738
    %v1197 = vand.u32 %v1180, 3
    %vm1198 = vcmp.lt.s32.totalorder %v1197, 2
    %vm1199 = vcmp.eq.s32.totalorder %v1197, 0
    %v1200 = vxor.u32 %v1195, 2147483648
    %v1201 = vsel %vm1199, %v1187, %v1200
    %vm1202 = vcmp.eq.s32.totalorder %v1197, 2
    %v1203 = vxor.u32 %v1187, 2147483648
    %v1204 = vsel %vm1202, %v1203, %v1195
    %v1205 = vsel %vm1198, %v1201, %v1204
    %v1206 = vsel %vm1196, nan, %v1205
    %v1207 = vand.u32 2147483647, %v739
    %vm1208 = vcmp.le.f32.partialorder %v1207, 0.7853982
    %vm1209 = vcmp.lt.s32.totalorder %v739, 0
    %v1210 = vand.u32 %v739, 2139095040
    %v1211 = vshrl.u32 %v1210, 23
    %v1212 = vsub.s32 %v1211, 127
    %v1213 = vand.u32 2147483647, %v739
    %v1214 = vand.u32 %v1213, 8388607
    %v1215 = vor.u32 %v1214, 8388608
    %v1216 = vsub.s32 0, %v1215
    %v1217 = vadd.s32 %v1212, 1
    %vm1218 = vcmp.gt.s32.totalorder %v1217, 0
    %v1219 = vsel %vm1218, %v1217, 0
    %v1220 = vshrl.u32 %v1219, 5
    %v1221 = vand.u32 %v1219, 31
    %v1222 = vsub.s32 32, %v1221
    %v1223 = vshrl.u32 683565275, %v1222
    %v1224 = vshll.u32 683565275, %v1221
    %v1225 = vshrl.u32 2475754826, %v1222
    %v1226 = vor.u32 %v1224, %v1225
    %v1227 = vshll.u32 2475754826, %v1221
    %v1228 = vshrl.u32 2131351028, %v1222
    %v1229 = vor.u32 %v1227, %v1228
    %v1230 = vshll.u32 2131351028, %v1221
    %v1231 = vshrl.u32 2102212464, %v1222
    %v1232 = vor.u32 %v1230, %v1231
    %v1233 = vshll.u32 2102212464, %v1221
    %v1234 = vshrl.u32 920167782, %v1222
    %v1235 = vor.u32 %v1233, %v1234
    %v1236 = vshll.u32 920167782, %v1221
    %v1237 = vshrl.u32 1326507024, %v1222
    %v1238 = vor.u32 %v1236, %v1237
    %vm1239 = vcmp.lt.s32.totalorder %v1220, 1
    %vm1240 = vcmp.lt.s32.totalorder %v1220, 2
    %vm1241 = vcmp.lt.s32.totalorder %v1220, 3
    %vm1242 = vcmp.lt.s32.totalorder %v1220, 4
    %v1243 = vsel %vm1239, %v1223, %v1226
    %v1244 = vsel %vm1242, %v1232, 2102212464
    %v1245 = vsel %vm1241, %v1229, %v1244
    %v1246 = vsel %vm1240, %v1243, %v1245
    %v1247 = vsel %vm1239, %v1226, %v1229
    %v1248 = vsel %vm1242, %v1235, 920167782
    %v1249 = vsel %vm1241, %v1232, %v1248
    %v1250 = vsel %vm1240, %v1247, %v1249
    %v1251 = vsel %vm1239, %v1229, %v1232
    %v1252 = vsel %vm1242, %v1238, 1326507024
    %v1253 = vsel %vm1241, %v1235, %v1252
    %v1254 = vsel %vm1240, %v1251, %v1253
    %v1255 = vshll.u32 %v1215, 8
    %v1256 = vand.u32 %v1255, 65535
    %v1257 = vshrl.u32 %v1255, 16
    %v1258 = vand.u32 %v1254, 65535
    %v1259 = vshrl.u32 %v1254, 16
    %v1260 = vmul.u32 %v1256, %v1258
    %v1261 = vmul.u32 %v1256, %v1259
    %v1262 = vmul.u32 %v1257, %v1258
    %v1263 = vmul.u32 %v1257, %v1259
    %v1264 = vshll.u32 %v1261, 16
    %v1265 = vshrl.u32 %v1261, 16
    %v1266 = vshll.u32 %v1262, 16
    %v1267 = vshrl.u32 %v1262, 16
    %vm1268 = vc.u32 %v1260, %v1264
    %v1269 = vsel %vm1268, 1, 0
    %v1270 = vadd.s32 %v1260, %v1264
    %v1271 = vadd.s32 %v1263, %v1269
    %vm1272 = vc.u32 %v1270, %v1266
    %v1273 = vsel %vm1272, 1, 0
    %v1274 = vadd.s32 %v1270, %v1266
    %v1275 = vadd.s32 %v1271, %v1273
    %v1276 = vadd.s32 %v1275, %v1265
    %v1277 = vadd.s32 %v1276, %v1267
    %v1278 = vand.u32 %v1255, 65535
    %v1279 = vshrl.u32 %v1255, 16
    %v1280 = vand.u32 %v1250, 65535
    %v1281 = vshrl.u32 %v1250, 16
    %v1282 = vmul.u32 %v1278, %v1280
    %v1283 = vmul.u32 %v1278, %v1281
    %v1284 = vmul.u32 %v1279, %v1280
    %v1285 = vmul.u32 %v1279, %v1281
    %v1286 = vshll.u32 %v1283, 16
    %v1287 = vshrl.u32 %v1283, 16
    %v1288 = vshll.u32 %v1284, 16
    %v1289 = vshrl.u32 %v1284, 16
    %vm1290 = vc.u32 %v1282, %v1286
    %v1291 = vsel %vm1290, 1, 0
    %v1292 = vadd.s32 %v1282, %v1286
    %v1293 = vadd.s32 %v1285, %v1291
    %vm1294 = vc.u32 %v1292, %v1288
    %v1295 = vsel %vm1294, 1, 0
    %v1296 = vadd.s32 %v1292, %v1288
    %v1297 = vadd.s32 %v1293, %v1295
    %v1298 = vadd.s32 %v1297, %v1287
    %v1299 = vadd.s32 %v1298, %v1289
    %v1300 = vmul.u32 %v1255, %v1246
    %v1301 = vadd.s32 %v1277, %v1296
    %vm1302 = vc.u32 %v1277, %v1296
    %v1303 = vadd.s32 %v1299, 1
    %v1304 = vsel %vm1302, %v1303, %v1299
    %v1305 = vadd.s32 %v1300, %v1304
    %v1306 = vadd.s32 %v1305, 536870912
    %v1307 = vshrl.u32 %v1306, 30
    %v1308 = vshll.u32 %v1307, 30
    %v1309 = vsub.s32 %v1305, %v1308
    %vm1310 = vcmp.lt.s32.totalorder %v1309, 0
    %v1311 = vsub.s32 0, %v1309
    %v1312 = vsel %vm1310, %v1311, %v1309
    %v1313 = vclz %v1312
    %v1314 = vsub.s32 %v1313, 2
    %vm1315 = vcmp.gt.s32.totalorder 0, %v1314
    %v1316 = vsel %vm1315, 0, %v1314
    %v1317 = vsub.s32 32, %v1316
    %v1318 = vshll.u32 %v1309, %v1316
    %v1319 = vshrl.u32 %v1301, %v1317
    %v1320 = vor.u32 %v1318, %v1319
    %v1321 = vsub.s32 4294967266, %v1316
    %v1322 = vadd.s32 %v1321, 127
    %v1323 = vshll.u32 %v1322, 23
    %v1324 = vor.u32 4788187, %v1323
    %v1325 = vand.u32 2147483647, %v1324
    %v1327 = vcvt.s32.f32 %v1320
    %v1328 = vmul.f32 %v1327, %v1325
    %v1329 = vxor.u32 %v1328, 2147483648
    %v1330 = vsel %vm1209, %v1329, %v1328
    %v1331 = vsub.s32 4, %v1307
    %v1332 = vsel %vm1209, %v1331, %v1307
    %v1333 = vsel %vm1208, %v739, %v1330
    %v1334 = vsel %vm1208, 0, %v1332
    %v1335 = vmul.f32 %v1333, %v1333
    %v1336 = vmul.f32 %v1335, -0.001358992
    %v1337 = vadd.f32 %v1336, 0.041655596
    %v1338 = vmul.f32 %v1335, %v1337
    %v1339 = vadd.f32 %v1338, -0.4999988
    %v1340 = vmul.f32 %v1335, %v1339
    %v1341 = vadd.f32 1.0, %v1340
    %v1342 = vmul.f32 %v1333, %v1333
    %v1343 = vmul.f32 %v1342, -0.00019511016
    %v1344 = vadd.f32 %v1343, 0.008332121
    %v1345 = vmul.f32 %v1342, %v1344
    %v1346 = vadd.f32 %v1345, -0.16666654
    %v1347 = vmul.f32 %v1342, %v1346
    %v1348 = vadd.f32 %v1347, 1.0
    %v1349 = vmul.f32 %v1348, %v1333
    %vm1350 = vweird.f32 %v739
    %v1351 = vand.u32 %v1334, 3
    %vm1352 = vcmp.lt.s32.totalorder %v1351, 2
    %vm1353 = vcmp.eq.s32.totalorder %v1351, 0
    %v1354 = vxor.u32 %v1349, 2147483648
    %v1355 = vsel %vm1353, %v1341, %v1354
    %vm1356 = vcmp.eq.s32.totalorder %v1351, 2
    %v1357 = vxor.u32 %v1341, 2147483648
    %v1358 = vsel %vm1356, %v1357, %v1349
    %v1359 = vsel %vm1352, %v1355, %v1358
    %v1360 = vsel %vm1350, nan, %v1359
    %v1361 = vpack.c.bf16 %v1360, %v1206
    %v1362 = vld [vmem:[%s1 + $0x4] sm:$0xf]
    %v1363 = vld [vmem:[%s1 + $0xc] sm:$0xf]
    %v1365 = vsel %vm642, %v1361, 0
    %v1368 = vsel %vm646, %v1363, 0
    %1370 = vmatpush.bf16.msra.mxu0 0
    %1371 = vmatpush.bf16.msra.mxu0 0
    %1372 = vmatpush.bf16.msra.mxu0 0
    %1373 = vmatpush.bf16.msra.mxu0 0
    %1374 = vmatpush.bf16.msra.mxu0 0
    %1375 = vmatpush.bf16.msra.mxu0 0
    %1376 = vmatpush.bf16.msra.mxu0 0
    %1377 = vmatpush.bf16.msra.mxu0 %v1368
    %1378 = vmatmul.bf16.gmra.mxu0 %v1365
    %v1379 = vpop.f32.mrf.mxu0
    %v1380 = vadd.f32 0.0, %v1379
    %v1381 = vpop.f32.mrf.mxu0
    %v1382 = vadd.f32 0.0, %v1381
    %1383 = vdwg.mxu0
    %v1385 = vsel %vm642, %v1052, 0
    %v1388 = vsel %vm646, %v1362, 0
    %1390 = vmatpush.bf16.msra.mxu0 0
    %1391 = vmatpush.bf16.msra.mxu0 0
    %1392 = vmatpush.bf16.msra.mxu0 0
    %1393 = vmatpush.bf16.msra.mxu0 0
    %1394 = vmatpush.bf16.msra.mxu0 0
    %1395 = vmatpush.bf16.msra.mxu0 0
    %1396 = vmatpush.bf16.msra.mxu0 0
    %1397 = vmatpush.bf16.msra.mxu0 %v1388
    %1398 = vmatmul.bf16.gmra.mxu0 %v1385
    %v1399 = vpop.f32.mrf.mxu0
    %v1400 = vadd.f32 %v1380, %v1399
    %v1401 = vpop.f32.mrf.mxu0
    %v1402 = vadd.f32 %v1382, %v1401
    %1403 = vdwg.mxu0
    %v1404 = vld [vmem:[%s1 + $0x14] sm:$0xf]
    %v1405 = vld [vmem:[%s1 + $0x1c] sm:$0xf]
    %v1407 = vsel %vm646, %v1405, 0
    %1409 = vmatpush.bf16.msra.mxu0 0
    %1410 = vmatpush.bf16.msra.mxu0 0
    %1411 = vmatpush.bf16.msra.mxu0 0
    %1412 = vmatpush.bf16.msra.mxu0 0
    %1413 = vmatpush.bf16.msra.mxu0 0
    %1414 = vmatpush.bf16.msra.mxu0 0
    %1415 = vmatpush.bf16.msra.mxu0 0
    %1416 = vmatpush.bf16.msra.mxu0 %v1407
    %1417 = vmatmul.bf16.gmra.mxu0 %v1365
    %v1418 = vpop.f32.mrf.mxu0
    %v1419 = vadd.f32 0.0, %v1418
    %v1420 = vpop.f32.mrf.mxu0
    %v1421 = vadd.f32 0.0, %v1420
    %1422 = vdwg.mxu0
    %v1424 = vsel %vm646, %v1404, 0
    %1426 = vmatpush.bf16.msra.mxu0 0
    %1427 = vmatpush.bf16.msra.mxu0 0
    %1428 = vmatpush.bf16.msra.mxu0 0
    %1429 = vmatpush.bf16.msra.mxu0 0
    %1430 = vmatpush.bf16.msra.mxu0 0
    %1431 = vmatpush.bf16.msra.mxu0 0
    %1432 = vmatpush.bf16.msra.mxu0 0
    %1433 = vmatpush.bf16.msra.mxu0 %v1424
    %1434 = vmatmul.bf16.gmra.mxu0 %v1385
    %v1435 = vpop.f32.mrf.mxu0
    %v1436 = vadd.f32 %v1419, %v1435
    %v1437 = vpop.f32.mrf.mxu0
    %v1438 = vadd.f32 %v1421, %v1437
    %1439 = vdwg.mxu0
    %v1440 = vld [vmem:[%s2 + $0x2] sm:$0x1]
    %1442 = vset.pattern.permute.xlu0 0
    %1443 = vperm.xlu0 %1442, %v740
    %v1444 = vpop.permute.xlu0 %1443
    %1447 = vset.pattern.permute.xlu0 0
    %1448 = vperm.xlu0 %1447, %v741
    %v1449 = vpop.permute.xlu0 %1448
    %v1451 = vperm.slane %v1440, 0
    %v1452 = vmul.f32 %v1444, %v1451
    %v1453 = vmul.f32 %v1449, %v1451
    %v1454 = vmul.f32 %v1400, %v1452
    %v1455 = vmul.f32 %v1402, %v1453
    %v1456 = vadd.f32 %v1454, %v1436
    %v1457 = vadd.f32 %v1455, %v1438
    %vm1458 = vcmask 261120
    %1459 = vst.msk [vmem:[#allocation2] sm:$0xff] %vm1458, 0.0
    %1460 = vst.msk [vmem:[#allocation2 + $0x8] sm:$0xff] %vm1458, 0.0
    %1461 = vst.msk [vmem:[#allocation2 + $0x10] sm:$0xff] %vm1458, 0.0
    %1462 = vst.msk [vmem:[#allocation2 + $0x18] sm:$0xff] %vm1458, 0.0
    %1463 = vst.msk [vmem:[#allocation2 + $0x20] sm:$0xff] %vm1458, 0.0
    %1464 = vst.msk [vmem:[#allocation2 + $0x28] sm:$0xff] %vm1458, 0.0
    %v1465 = vld [vmem:[%s2] sm:$0x1]
    %vm1466 = vcmask 253952
    %1467 = vst.msk [vmem:[#allocation2] sm:$0x1] %vm1466, %v1465
    %1468 = vst.msk [vmem:[#allocation2 + $0x8] sm:$0xff] %vm1458, %v736
    %1469 = vst.msk [vmem:[#allocation2 + $0x10] sm:$0xff] %vm1458, %v1456
    %1470 = vst.msk [vmem:[#allocation2 + $0x18] sm:$0x1] %vm1466, %v1465
    %1471 = vst.msk [vmem:[#allocation2 + $0x20] sm:$0xff] %vm1458, %v737
    %1472 = vst.msk [vmem:[#allocation2 + $0x28] sm:$0xff] %vm1458, %v1457
    %v1473 = vld [vmem:[#allocation2] sm:$0xff]
    %v1474 = vld [vmem:[#allocation2 + $0x8] sm:$0xff]
    %v1475 = vld [vmem:[#allocation2 + $0x10] sm:$0xff]
    %v1476 = vld [vmem:[#allocation2 + $0x18] sm:$0xff]
    %v1477 = vld [vmem:[#allocation2 + $0x20] sm:$0xff]
    %v1478 = vld [vmem:[#allocation2 + $0x28] sm:$0xff]
    %v1479 = vld [vmem:[%s0 + $0x40] sm:$0x1]
    %v1480 = vld [vmem:[%s0 + $0x41] sm:$0x1]
    %v1481 = vld [vmem:[%s2 + $0x3] sm:$0x1]
    %v1482 = vld [vmem:[%s2 + $0x4] sm:$0x1]
    %v1483 = vld [vmem:[%s2 + $0x5] sm:$0x1]
    %v1484 = vld [vmem:[%s2 + $0x6] sm:$0x1]
    %v1485 = vpack.c.bf16 %v1474, %v1473
    %v1486 = vpack.c.bf16 %v1476, %v1475
    %v1487 = vpack.c.bf16 %v1478, %v1477
    %v1488 = vld [vmem:[%s1 + $0x20] sm:$0xf]
    %v1489 = vld [vmem:[%s1 + $0x24] sm:$0xf]
    %v1490 = vld [vmem:[%s1 + $0x28] sm:$0xf]
    %v1491 = vld [vmem:[%s1 + $0x2c] sm:$0xf]
    %v1492 = vld [vmem:[%s2 + $0x7] sm:$0x1]
    %v1493 = vperm.slane %v1492, 0
    %v1498 = vunpack.c.l.b16 %v1488
    %v1499 = vunpack.c.l.b16 %v1489
    %v1500 = vunpack.c.l.b16 %v1490
    %v1501 = vunpack.c.l.b16 %v1491
    %v1502 = vpack.c.b16 %v1499, %v1498
    %v1503 = vpack.c.b16 %v1501, %v1500
    %v1507 = vsel %vm1458, %v1485, 0
    %v1510 = vsel %vm1458, %v1486, 0
    %v1513 = vsel %vm1458, %v1487, 0
    %1515 = vmatpush.bf16.msra.mxu0 0
    %1516 = vmatpush.bf16.msra.mxu0 0
    %1517 = vmatpush.bf16.msra.mxu0 0
    %1518 = vmatpush.bf16.msra.mxu0 0
    %1519 = vmatpush.bf16.msra.mxu0 0
    %1520 = vmatpush.bf16.msra.mxu0 0
    %1521 = vmatpush.bf16.msra.mxu0 %v1503
    %1522 = vmatpush.bf16.msra.mxu0 %v1502
    %1523 = vmatmul.bf16.gmra.mxu0 %v1507
    %v1524 = vpop.f32.mrf.mxu0
    %v1525 = vadd.f32 %v1493, %v1524
    %v1526 = vpop.f32.mrf.mxu0
    %v1527 = vadd.f32 %v1493, %v1526
    %1528 = vmatmul.bf16.gmra.mxu0 %v1510
    %v1529 = vpop.f32.mrf.mxu0
    %v1530 = vadd.f32 %v1493, %v1529
    %v1531 = vpop.f32.mrf.mxu0
    %v1532 = vadd.f32 %v1493, %v1531
    %1533 = vmatmul.bf16.gmra.mxu0 %v1513
    %v1534 = vpop.f32.mrf.mxu0
    %v1535 = vadd.f32 %v1493, %v1534
    %v1536 = vpop.f32.mrf.mxu0
    %v1537 = vadd.f32 %v1493, %v1536
    %1538 = vdwg.mxu0
    %v1539 = vld [vmem:[%s1 + $0x30] sm:$0xf]
    %v1540 = vld [vmem:[%s1 + $0x34] sm:$0xf]
    %v1541 = vld [vmem:[%s1 + $0x38] sm:$0xf]
    %v1542 = vld [vmem:[%s1 + $0x3c] sm:$0xf]
    %v1543 = vld [vmem:[%s2 + $0x8] sm:$0x1]
    %v1544 = vperm.slane %v1543, 0
    %v1549 = vunpack.c.l.b16 %v1539
    %v1550 = vunpack.c.l.b16 %v1540
    %v1551 = vunpack.c.l.b16 %v1541
    %v1552 = vunpack.c.l.b16 %v1542
    %v1553 = vpack.c.b16 %v1550, %v1549
    %v1554 = vpack.c.b16 %v1552, %v1551
    %1557 = vmatpush.bf16.msra.mxu0 0
    %1558 = vmatpush.bf16.msra.mxu0 0
    %1559 = vmatpush.bf16.msra.mxu0 0
    %1560 = vmatpush.bf16.msra.mxu0 0
    %1561 = vmatpush.bf16.msra.mxu0 0
    %1562 = vmatpush.bf16.msra.mxu0 0
    %1563 = vmatpush.bf16.msra.mxu0 %v1554
    %1564 = vmatpush.bf16.msra.mxu0 %v1553
    %1565 = vmatmul.bf16.gmra.mxu0 %v1507
    %v1566 = vpop.f32.mrf.mxu0
    %v1567 = vadd.f32 %v1544, %v1566
    %v1568 = vpop.f32.mrf.mxu0
    %v1569 = vadd.f32 %v1544, %v1568
    %1570 = vmatmul.bf16.gmra.mxu0 %v1510
    %v1571 = vpop.f32.mrf.mxu0
    %v1572 = vadd.f32 %v1544, %v1571
    %v1573 = vpop.f32.mrf.mxu0
    %v1574 = vadd.f32 %v1544, %v1573
    %1575 = vmatmul.bf16.gmra.mxu0 %v1513
    %v1576 = vpop.f32.mrf.mxu0
    %v1577 = vadd.f32 %v1544, %v1576
    %v1578 = vpop.f32.mrf.mxu0
    %v1579 = vadd.f32 %v1544, %v1578
    %1580 = vdwg.mxu0
    %v1581 = vld [vmem:[%s1 + $0x40] sm:$0xf]
    %v1582 = vld [vmem:[%s1 + $0x44] sm:$0xf]
    %v1583 = vld [vmem:[%s1 + $0x48] sm:$0xf]
    %v1584 = vld [vmem:[%s1 + $0x4c] sm:$0xf]
    %v1585 = vld [vmem:[%s2 + $0x9] sm:$0x1]
    %v1586 = vperm.slane %v1585, 0
    %v1591 = vunpack.c.l.b16 %v1581
    %v1592 = vunpack.c.l.b16 %v1582
    %v1593 = vunpack.c.l.b16 %v1583
    %v1594 = vunpack.c.l.b16 %v1584
    %v1595 = vpack.c.b16 %v1592, %v1591
    %v1596 = vpack.c.b16 %v1594, %v1593
    %1599 = vmatpush.bf16.msra.mxu0 0
    %1600 = vmatpush.bf16.msra.mxu0 0
    %1601 = vmatpush.bf16.msra.mxu0 0
    %1602 = vmatpush.bf16.msra.mxu0 0
    %1603 = vmatpush.bf16.msra.mxu0 0
    %1604 = vmatpush.bf16.msra.mxu0 0
    %1605 = vmatpush.bf16.msra.mxu0 %v1596
    %1606 = vmatpush.bf16.msra.mxu0 %v1595
    %1607 = vmatmul.bf16.gmra.mxu0 %v1507
    %v1608 = vpop.f32.mrf.mxu0
    %v1609 = vadd.f32 %v1586, %v1608
    %v1610 = vpop.f32.mrf.mxu0
    %v1611 = vadd.f32 %v1586, %v1610
    %1612 = vmatmul.bf16.gmra.mxu0 %v1510
    %v1613 = vpop.f32.mrf.mxu0
    %v1614 = vadd.f32 %v1586, %v1613
    %v1615 = vpop.f32.mrf.mxu0
    %v1616 = vadd.f32 %v1586, %v1615
    %1617 = vmatmul.bf16.gmra.mxu0 %v1513
    %v1618 = vpop.f32.mrf.mxu0
    %v1619 = vadd.f32 %v1586, %v1618
    %v1620 = vpop.f32.mrf.mxu0
    %v1621 = vadd.f32 %v1586, %v1620
    %1622 = vdwg.mxu0
    %v1623 = vpack.c.bf16 %v1569, %v1567
    %v1624 = vpack.c.bf16 %v1572, %v1572
    %v1625 = vpack.c.bf16 %v1611, %v1609
    %v1626 = vpack.c.bf16 %v1614, %v1614
    %v1627 = vperm.slane %v1481, 0
    %v1628 = vmul.f32 %v1525, %v1627
    %v1629 = vmul.f32 %v1527, %v1627
    %v1630 = vmul.f32 %v1530, %v1627
    %v1631 = vperm.slane %v1482, 0
    %v1632 = vmul.f32 %v1525, %v1631
    %v1633 = vmul.f32 %v1527, %v1631
    %v1634 = vmul.f32 %v1530, %v1631
    %v1635 = vperm.slane %v1483, 0
    %v1636 = vmul.f32 %v1525, %v1635
    %v1637 = vmul.f32 %v1527, %v1635
    %v1638 = vmul.f32 %v1530, %v1635
    %v1639 = vperm.slane %v1484, 0
    %v1640 = vmul.f32 %v1525, %v1639
    %v1641 = vmul.f32 %v1527, %v1639
    %v1642 = vmul.f32 %v1530, %v1639
    %v1643 = vpack.c.bf16 %v1629, %v1628
    %v1644 = vpack.c.bf16 %v1632, %v1630
    %v1645 = vpack.c.bf16 %v1634, %v1633
    %v1646 = vpack.c.bf16 %v1637, %v1636
    %v1647 = vpack.c.bf16 %v1640, %v1638
    %v1648 = vpack.c.bf16 %v1642, %v1641
    %v1649 = vperm.slane %v1479, 0
    %v1651 = vsel %vm1458, %v1643, 0
    %v1654 = vsel %vm1458, %v1644, 0
    %v1657 = vsel %vm1458, %v1645, 0
    %v1660 = vsel %vm1458, %v1646, 0
    %v1663 = vsel %vm1458, %v1647, 0
    %v1666 = vsel %vm1458, %v1648, 0
    %v1669 = vsel %vm1458, %v1623, 0
    %v1672 = vsel %vm1458, %v1624, 0
    %1674 = vmatpush.bf16.xpose.msra.mxu0 0
    %1675 = vmatpush.bf16.xpose.msra.mxu0 0
    %1676 = vmatpush.bf16.xpose.msra.mxu0 0
    %1677 = vmatpush.bf16.xpose.msra.mxu0 0
    %1678 = vmatpush.bf16.xpose.msra.mxu0 0
    %1679 = vmatpush.bf16.xpose.msra.mxu0 0
    %1680 = vmatpush.bf16.xpose.msra.mxu0 %v1672
    %1681 = vmatpush.bf16.xpose.msra.mxu0 %v1669
    %1682 = vmatmul.bf16.gmra.mxu0 %v1651
    %v1683 = vpop.f32.mrf.mxu0
    %v1684 = vadd.f32 %v1649, %v1683
    %v1685 = vpop.f32.mrf.mxu0
    %v1686 = vadd.f32 %v1649, %v1685
    %1687 = vmatmul.bf16.gmra.mxu0 %v1654
    %v1688 = vpop.f32.mrf.mxu0
    %v1689 = vadd.f32 %v1649, %v1688
    %v1690 = vpop.f32.mrf.mxu0
    %v1691 = vadd.f32 %v1649, %v1690
    %1692 = vmatmul.bf16.gmra.mxu0 %v1657
    %v1693 = vpop.f32.mrf.mxu0
    %v1694 = vadd.f32 %v1649, %v1693
    %v1695 = vpop.f32.mrf.mxu0
    %v1696 = vadd.f32 %v1649, %v1695
    %1697 = vmatmul.bf16.gmra.mxu0 %v1660
    %v1698 = vpop.f32.mrf.mxu0
    %v1699 = vadd.f32 %v1649, %v1698
    %v1700 = vpop.f32.mrf.mxu0
    %v1701 = vadd.f32 %v1649, %v1700
    %1702 = vmatmul.bf16.gmra.mxu0 %v1663
    %v1703 = vpop.f32.mrf.mxu0
    %v1704 = vadd.f32 %v1649, %v1703
    %v1705 = vpop.f32.mrf.mxu0
    %v1706 = vadd.f32 %v1649, %v1705
    %1707 = vmatmul.bf16.gmra.mxu0 %v1666
    %v1708 = vpop.f32.mrf.mxu0
    %v1709 = vadd.f32 %v1649, %v1708
    %v1710 = vpop.f32.mrf.mxu0
    %v1711 = vadd.f32 %v1649, %v1710
    %1712 = vdwg.mxu0
    %vm1713 = vcmask 195584
    %v1714 = vsel %vm1713, %v1684, -inf
    %1715 = vmax.xlane.f32.xlu0 %v1714
    %v1716 = vpop.xlane.xlu0 %1715
    %v1717 = vsel %vm1713, %v1686, -inf
    %1718 = vmax.xlane.f32.xlu0 %v1717
    %v1719 = vpop.xlane.xlu0 %1718
    %v1720 = vsel %vm1713, %v1689, -inf
    %1721 = vmax.xlane.f32.xlu0 %v1720
    %v1722 = vpop.xlane.xlu0 %1721
    %v1723 = vsel %vm1713, %v1691, -inf
    %1724 = vmax.xlane.f32.xlu0 %v1723
    %v1725 = vpop.xlane.xlu0 %1724
    %v1726 = vsel %vm1713, %v1694, -inf
    %1727 = vmax.xlane.f32.xlu0 %v1726
    %v1728 = vpop.xlane.xlu0 %1727
    %v1729 = vsel %vm1713, %v1696, -inf
    %1730 = vmax.xlane.f32.xlu0 %v1729
    %v1731 = vpop.xlane.xlu0 %1730
    %v1732 = vsel %vm1713, %v1699, -inf
    %1733 = vmax.xlane.f32.xlu0 %v1732
    %v1734 = vpop.xlane.xlu0 %1733
    %v1735 = vsel %vm1713, %v1701, -inf
    %1736 = vmax.xlane.f32.xlu0 %v1735
    %v1737 = vpop.xlane.xlu0 %1736
    %v1738 = vsel %vm1713, %v1704, -inf
    %1739 = vmax.xlane.f32.xlu0 %v1738
    %v1740 = vpop.xlane.xlu0 %1739
    %v1741 = vsel %vm1713, %v1706, -inf
    %1742 = vmax.xlane.f32.xlu0 %v1741
    %v1743 = vpop.xlane.xlu0 %1742
    %v1744 = vsel %vm1713, %v1709, -inf
    %1745 = vmax.xlane.f32.xlu0 %v1744
    %v1746 = vpop.xlane.xlu0 %1745
    %v1747 = vsel %vm1713, %v1711, -inf
    %1748 = vmax.xlane.f32.xlu0 %v1747
    %v1749 = vpop.xlane.xlu0 %1748
    %v1750 = vsub.f32 %v1684, %v1716
    %v1751 = vsub.f32 %v1686, %v1719
    %v1752 = vsub.f32 %v1689, %v1722
    %v1753 = vsub.f32 %v1691, %v1725
    %v1754 = vsub.f32 %v1694, %v1728
    %v1755 = vsub.f32 %v1696, %v1731
    %v1756 = vsub.f32 %v1699, %v1734
    %v1757 = vsub.f32 %v1701, %v1737
    %v1758 = vsub.f32 %v1704, %v1740
    %v1759 = vsub.f32 %v1706, %v1743
    %v1760 = vsub.f32 %v1709, %v1746
    %v1761 = vsub.f32 %v1711, %v1749
    %v1762 = vmul.f32 %v1750, 1.442695
    %v1763 = vpow.pop %v1762
    %v1764 = vmul.f32 %v1751, 1.442695
    %v1765 = vpow.pop %v1764
    %v1766 = vmul.f32 %v1752, 1.442695
    %v1767 = vpow.pop %v1766
    %v1768 = vmul.f32 %v1753, 1.442695
    %v1769 = vpow.pop %v1768
    %v1770 = vmul.f32 %v1754, 1.442695
    %v1771 = vpow.pop %v1770
    %v1772 = vmul.f32 %v1755, 1.442695
    %v1773 = vpow.pop %v1772
    %v1774 = vmul.f32 %v1756, 1.442695
    %v1775 = vpow.pop %v1774
    %v1776 = vmul.f32 %v1757, 1.442695
    %v1777 = vpow.pop %v1776
    %v1778 = vmul.f32 %v1758, 1.442695
    %v1779 = vpow.pop %v1778
    %v1780 = vmul.f32 %v1759, 1.442695
    %v1781 = vpow.pop %v1780
    %v1782 = vmul.f32 %v1760, 1.442695
    %v1783 = vpow.pop %v1782
    %v1784 = vmul.f32 %v1761, 1.442695
    %v1785 = vpow.pop %v1784
    %v1786 = vsel %vm1713, %v1763, 0.0
    %1787 = vadd.xlane.f32.xlu0 %v1786
    %v1788 = vpop.xlane.xlu0 %1787
    %v1789 = vsel %vm1713, %v1765, 0.0
    %1790 = vadd.xlane.f32.xlu0 %v1789
    %v1791 = vpop.xlane.xlu0 %1790
    %v1792 = vsel %vm1713, %v1767, 0.0
    %1793 = vadd.xlane.f32.xlu0 %v1792
    %v1794 = vpop.xlane.xlu0 %1793
    %v1795 = vsel %vm1713, %v1769, 0.0
    %1796 = vadd.xlane.f32.xlu0 %v1795
    %v1797 = vpop.xlane.xlu0 %1796
    %v1798 = vsel %vm1713, %v1771, 0.0
    %1799 = vadd.xlane.f32.xlu0 %v1798
    %v1800 = vpop.xlane.xlu0 %1799
    %v1801 = vsel %vm1713, %v1773, 0.0
    %1802 = vadd.xlane.f32.xlu0 %v1801
    %v1803 = vpop.xlane.xlu0 %1802
    %v1804 = vsel %vm1713, %v1775, 0.0
    %1805 = vadd.xlane.f32.xlu0 %v1804
    %v1806 = vpop.xlane.xlu0 %1805
    %v1807 = vsel %vm1713, %v1777, 0.0
    %1808 = vadd.xlane.f32.xlu0 %v1807
    %v1809 = vpop.xlane.xlu0 %1808
    %v1810 = vsel %vm1713, %v1779, 0.0
    %1811 = vadd.xlane.f32.xlu0 %v1810
    %v1812 = vpop.xlane.xlu0 %1811
    %v1813 = vsel %vm1713, %v1781, 0.0
    %1814 = vadd.xlane.f32.xlu0 %v1813
    %v1815 = vpop.xlane.xlu0 %1814
    %v1816 = vsel %vm1713, %v1783, 0.0
    %1817 = vadd.xlane.f32.xlu0 %v1816
    %v1818 = vpop.xlane.xlu0 %1817
    %v1819 = vsel %vm1713, %v1785, 0.0
    %1820 = vadd.xlane.f32.xlu0 %v1819
    %v1821 = vpop.xlane.xlu0 %1820
    %v1822 = vrcp.pop %v1788
    %v1823 = vrcp.pop %v1791
    %v1824 = vrcp.pop %v1794
    %v1825 = vrcp.pop %v1797
    %v1826 = vrcp.pop %v1800
    %v1827 = vrcp.pop %v1803
    %v1828 = vrcp.pop %v1806
    %v1829 = vrcp.pop %v1809
    %v1830 = vrcp.pop %v1812
    %v1831 = vrcp.pop %v1815
    %v1832 = vrcp.pop %v1818
    %v1833 = vrcp.pop %v1821
    %v1834 = vmul.f32 %v1763, %v1822
    %v1835 = vmul.f32 %v1765, %v1823
    %v1836 = vmul.f32 %v1767, %v1824
    %v1837 = vmul.f32 %v1769, %v1825
    %v1838 = vmul.f32 %v1771, %v1826
    %v1839 = vmul.f32 %v1773, %v1827
    %v1840 = vmul.f32 %v1775, %v1828
    %v1841 = vmul.f32 %v1777, %v1829
    %v1842 = vmul.f32 %v1779, %v1830
    %v1843 = vmul.f32 %v1781, %v1831
    %v1844 = vmul.f32 %v1783, %v1832
    %v1845 = vmul.f32 %v1785, %v1833
    %v1846 = vpack.c.bf16 %v1835, %v1834
    %v1847 = vpack.c.bf16 %v1837, %v1836
    %v1848 = vpack.c.bf16 %v1839, %v1838
    %v1849 = vpack.c.bf16 %v1841, %v1840
    %v1850 = vpack.c.bf16 %v1843, %v1842
    %v1851 = vpack.c.bf16 %v1845, %v1844
    %v1853 = vsel %vm1713, %v1846, 0
    %v1856 = vsel %vm1713, %v1847, 0
    %v1859 = vsel %vm1713, %v1848, 0
    %v1862 = vsel %vm1713, %v1849, 0
    %v1865 = vsel %vm1713, %v1850, 0
    %v1868 = vsel %vm1713, %v1851, 0
    %v1871 = vsel %vm646, %v1626, 0
    %1873 = vmatpush.bf16.msra.mxu0 0
    %1874 = vmatpush.bf16.msra.mxu0 0
    %1875 = vmatpush.bf16.msra.mxu0 0
    %1876 = vmatpush.bf16.msra.mxu0 0
    %1877 = vmatpush.bf16.msra.mxu0 0
    %1878 = vmatpush.bf16.msra.mxu0 0
    %1879 = vmatpush.bf16.msra.mxu0 %v1871
    %1880 = vmatpush.bf16.msra.mxu0 %v1625
    %1881 = vmatmul.bf16.gmra.mxu0 %v1853
    %v1882 = vpop.f32.mrf.mxu0
    %v1883 = vadd.f32 0.0, %v1882
    %v1884 = vpop.f32.mrf.mxu0
    %v1885 = vadd.f32 0.0, %v1884
    %1886 = vmatmul.bf16.gmra.mxu0 %v1856
    %v1887 = vpop.f32.mrf.mxu0
    %v1888 = vadd.f32 0.0, %v1887
    %v1889 = vpop.f32.mrf.mxu0
    %v1890 = vadd.f32 0.0, %v1889
    %1891 = vmatmul.bf16.gmra.mxu0 %v1859
    %v1892 = vpop.f32.mrf.mxu0
    %v1893 = vadd.f32 0.0, %v1892
    %v1894 = vpop.f32.mrf.mxu0
    %v1895 = vadd.f32 0.0, %v1894
    %1896 = vmatmul.bf16.gmra.mxu0 %v1862
    %v1897 = vpop.f32.mrf.mxu0
    %v1898 = vadd.f32 0.0, %v1897
    %v1899 = vpop.f32.mrf.mxu0
    %v1900 = vadd.f32 0.0, %v1899
    %1901 = vmatmul.bf16.gmra.mxu0 %v1865
    %v1902 = vpop.f32.mrf.mxu0
    %v1903 = vadd.f32 0.0, %v1902
    %v1904 = vpop.f32.mrf.mxu0
    %v1905 = vadd.f32 0.0, %v1904
    %1906 = vmatmul.bf16.gmra.mxu0 %v1868
    %v1907 = vpop.f32.mrf.mxu0
    %v1908 = vadd.f32 0.0, %v1907
    %v1909 = vpop.f32.mrf.mxu0
    %v1910 = vadd.f32 0.0, %v1909
    %1911 = vdwg.mxu0
    %v1912 = vmul.f32 %v1883, %v1627
    %v1913 = vmul.f32 %v1885, %v1627
    %v1914 = vmul.f32 %v1888, %v1627
    %v1915 = vmul.f32 %v1890, %v1631
    %v1916 = vmul.f32 %v1893, %v1631
    %v1917 = vmul.f32 %v1895, %v1631
    %v1918 = vadd.f32 %v1912, %v1915
    %v1919 = vadd.f32 %v1913, %v1916
    %v1920 = vadd.f32 %v1914, %v1917
    %v1921 = vmul.f32 %v1898, %v1635
    %v1922 = vmul.f32 %v1900, %v1635
    %v1923 = vmul.f32 %v1903, %v1635
    %v1924 = vadd.f32 %v1918, %v1921
    %v1925 = vadd.f32 %v1919, %v1922
    %v1926 = vadd.f32 %v1920, %v1923
    %v1927 = vmul.f32 %v1905, %v1639
    %v1928 = vmul.f32 %v1908, %v1639
    %v1929 = vmul.f32 %v1910, %v1639
    %v1930 = vadd.f32 %v1924, %v1927
    %v1931 = vadd.f32 %v1925, %v1928
    %v1932 = vadd.f32 %v1926, %v1929
    %v1933 = vpack.c.bf16 %v1577, %v1574
    %v1934 = vpack.c.bf16 %v1579, %v1579
    %v1935 = vpack.c.bf16 %v1619, %v1616
    %v1936 = vpack.c.bf16 %v1621, %v1621
    %v1937 = vmul.f32 %v1532, %v1627
    %v1938 = vmul.f32 %v1535, %v1627
    %v1939 = vmul.f32 %v1537, %v1627
    %v1940 = vmul.f32 %v1532, %v1631
    %v1941 = vmul.f32 %v1535, %v1631
    %v1942 = vmul.f32 %v1537, %v1631
    %v1943 = vmul.f32 %v1532, %v1635
    %v1944 = vmul.f32 %v1535, %v1635
    %v1945 = vmul.f32 %v1537, %v1635
    %v1946 = vmul.f32 %v1532, %v1639
    %v1947 = vmul.f32 %v1535, %v1639
    %v1948 = vmul.f32 %v1537, %v1639
    %v1949 = vpack.c.bf16 %v1938, %v1937
    %v1950 = vpack.c.bf16 %v1940, %v1939
    %v1951 = vpack.c.bf16 %v1942, %v1941
    %v1952 = vpack.c.bf16 %v1944, %v1943
    %v1953 = vpack.c.bf16 %v1946, %v1945
    %v1954 = vpack.c.bf16 %v1948, %v1947
    %v1955 = vperm.slane %v1480, 0
    %v1957 = vsel %vm1458, %v1949, 0
    %v1960 = vsel %vm1458, %v1950, 0
    %v1963 = vsel %vm1458, %v1951, 0
    %v1966 = vsel %vm1458, %v1952, 0
    %v1969 = vsel %vm1458, %v1953, 0
    %v1972 = vsel %vm1458, %v1954, 0
    %v1975 = vsel %vm1458, %v1933, 0
    %v1978 = vsel %vm1458, %v1934, 0
    %1980 = vmatpush.bf16.xpose.msra.mxu0 0
    %1981 = vmatpush.bf16.xpose.msra.mxu0 0
    %1982 = vmatpush.bf16.xpose.msra.mxu0 0
    %1983 = vmatpush.bf16.xpose.msra.mxu0 0
    %1984 = vmatpush.bf16.xpose.msra.mxu0 0
    %1985 = vmatpush.bf16.xpose.msra.mxu0 0
    %1986 = vmatpush.bf16.xpose.msra.mxu0 %v1978
    %1987 = vmatpush.bf16.xpose.msra.mxu0 %v1975
    %1988 = vmatmul.bf16.gmra.mxu0 %v1957
    %v1989 = vpop.f32.mrf.mxu0
    %v1990 = vadd.f32 %v1955, %v1989
    %v1991 = vpop.f32.mrf.mxu0
    %v1992 = vadd.f32 %v1955, %v1991
    %1993 = vmatmul.bf16.gmra.mxu0 %v1960
    %v1994 = vpop.f32.mrf.mxu0
    %v1995 = vadd.f32 %v1955, %v1994
    %v1996 = vpop.f32.mrf.mxu0
    %v1997 = vadd.f32 %v1955, %v1996
    %1998 = vmatmul.bf16.gmra.mxu0 %v1963
    %v1999 = vpop.f32.mrf.mxu0
    %v2000 = vadd.f32 %v1955, %v1999
    %v2001 = vpop.f32.mrf.mxu0
    %v2002 = vadd.f32 %v1955, %v2001
    %2003 = vmatmul.bf16.gmra.mxu0 %v1966
    %v2004 = vpop.f32.mrf.mxu0
    %v2005 = vadd.f32 %v1955, %v2004
    %v2006 = vpop.f32.mrf.mxu0
    %v2007 = vadd.f32 %v1955, %v2006
    %2008 = vmatmul.bf16.gmra.mxu0 %v1969
    %v2009 = vpop.f32.mrf.mxu0
    %v2010 = vadd.f32 %v1955, %v2009
    %v2011 = vpop.f32.mrf.mxu0
    %v2012 = vadd.f32 %v1955, %v2011
    %2013 = vmatmul.bf16.gmra.mxu0 %v1972
    %v2014 = vpop.f32.mrf.mxu0
    %v2015 = vadd.f32 %v1955, %v2014
    %v2016 = vpop.f32.mrf.mxu0
    %v2017 = vadd.f32 %v1955, %v2016
    %2018 = vdwg.mxu0
    %v2019 = vsel %vm1713, %v1990, -inf
    %2020 = vmax.xlane.f32.xlu0 %v2019
    %v2021 = vpop.xlane.xlu0 %2020
    %v2022 = vsel %vm1713, %v1992, -inf
    %2023 = vmax.xlane.f32.xlu0 %v2022
    %v2024 = vpop.xlane.xlu0 %2023
    %v2025 = vsel %vm1713, %v1995, -inf
    %2026 = vmax.xlane.f32.xlu0 %v2025
    %v2027 = vpop.xlane.xlu0 %2026
    %v2028 = vsel %vm1713, %v1997, -inf
    %2029 = vmax.xlane.f32.xlu0 %v2028
    %v2030 = vpop.xlane.xlu0 %2029
    %v2031 = vsel %vm1713, %v2000, -inf
    %2032 = vmax.xlane.f32.xlu0 %v2031
    %v2033 = vpop.xlane.xlu0 %2032
    %v2034 = vsel %vm1713, %v2002, -inf
    %2035 = vmax.xlane.f32.xlu0 %v2034
    %v2036 = vpop.xlane.xlu0 %2035
    %v2037 = vsel %vm1713, %v2005, -inf
    %2038 = vmax.xlane.f32.xlu0 %v2037
    %v2039 = vpop.xlane.xlu0 %2038
    %v2040 = vsel %vm1713, %v2007, -inf
    %2041 = vmax.xlane.f32.xlu0 %v2040
    %v2042 = vpop.xlane.xlu0 %2041
    %v2043 = vsel %vm1713, %v2010, -inf
    %2044 = vmax.xlane.f32.xlu0 %v2043
    %v2045 = vpop.xlane.xlu0 %2044
    %v2046 = vsel %vm1713, %v2012, -inf
    %2047 = vmax.xlane.f32.xlu0 %v2046
    %v2048 = vpop.xlane.xlu0 %2047
    %v2049 = vsel %vm1713, %v2015, -inf
    %2050 = vmax.xlane.f32.xlu0 %v2049
    %v2051 = vpop.xlane.xlu0 %2050
    %v2052 = vsel %vm1713, %v2017, -inf
    %2053 = vmax.xlane.f32.xlu0 %v2052
    %v2054 = vpop.xlane.xlu0 %2053
    %v2055 = vsub.f32 %v1990, %v2021
    %v2056 = vsub.f32 %v1992, %v2024
    %v2057 = vsub.f32 %v1995, %v2027
    %v2058 = vsub.f32 %v1997, %v2030
    %v2059 = vsub.f32 %v2000, %v2033
    %v2060 = vsub.f32 %v2002, %v2036
    %v2061 = vsub.f32 %v2005, %v2039
    %v2062 = vsub.f32 %v2007, %v2042
    %v2063 = vsub.f32 %v2010, %v2045
    %v2064 = vsub.f32 %v2012, %v2048
    %v2065 = vsub.f32 %v2015, %v2051
    %v2066 = vsub.f32 %v2017, %v2054
    %v2067 = vmul.f32 %v2055, 1.442695
    %v2068 = vpow.pop %v2067
    %v2069 = vmul.f32 %v2056, 1.442695
    %v2070 = vpow.pop %v2069
    %v2071 = vmul.f32 %v2057, 1.442695
    %v2072 = vpow.pop %v2071
    %v2073 = vmul.f32 %v2058, 1.442695
    %v2074 = vpow.pop %v2073
    %v2075 = vmul.f32 %v2059, 1.442695
    %v2076 = vpow.pop %v2075
    %v2077 = vmul.f32 %v2060, 1.442695
    %v2078 = vpow.pop %v2077
    %v2079 = vmul.f32 %v2061, 1.442695
    %v2080 = vpow.pop %v2079
    %v2081 = vmul.f32 %v2062, 1.442695
    %v2082 = vpow.pop %v2081
    %v2083 = vmul.f32 %v2063, 1.442695
    %v2084 = vpow.pop %v2083
    %v2085 = vmul.f32 %v2064, 1.442695
    %v2086 = vpow.pop %v2085
    %v2087 = vmul.f32 %v2065, 1.442695
    %v2088 = vpow.pop %v2087
    %v2089 = vmul.f32 %v2066, 1.442695
    %v2090 = vpow.pop %v2089
    %v2091 = vsel %vm1713, %v2068, 0.0
    %2092 = vadd.xlane.f32.xlu0 %v2091
    %v2093 = vpop.xlane.xlu0 %2092
    %v2094 = vsel %vm1713, %v2070, 0.0
    %2095 = vadd.xlane.f32.xlu0 %v2094
    %v2096 = vpop.xlane.xlu0 %2095
    %v2097 = vsel %vm1713, %v2072, 0.0
    %2098 = vadd.xlane.f32.xlu0 %v2097
    %v2099 = vpop.xlane.xlu0 %2098
    %v2100 = vsel %vm1713, %v2074, 0.0
    %2101 = vadd.xlane.f32.xlu0 %v2100
    %v2102 = vpop.xlane.xlu0 %2101
    %v2103 = vsel %vm1713, %v2076, 0.0
    %2104 = vadd.xlane.f32.xlu0 %v2103
    %v2105 = vpop.xlane.xlu0 %2104
    %v2106 = vsel %vm1713, %v2078, 0.0
    %2107 = vadd.xlane.f32.xlu0 %v2106
    %v2108 = vpop.xlane.xlu0 %2107
    %v2109 = vsel %vm1713, %v2080, 0.0
    %2110 = vadd.xlane.f32.xlu0 %v2109
    %v2111 = vpop.xlane.xlu0 %2110
    %v2112 = vsel %vm1713, %v2082, 0.0
    %2113 = vadd.xlane.f32.xlu0 %v2112
    %v2114 = vpop.xlane.xlu0 %2113
    %v2115 = vsel %vm1713, %v2084, 0.0
    %2116 = vadd.xlane.f32.xlu0 %v2115
    %v2117 = vpop.xlane.xlu0 %2116
    %v2118 = vsel %vm1713, %v2086, 0.0
    %2119 = vadd.xlane.f32.xlu0 %v2118
    %v2120 = vpop.xlane.xlu0 %2119
    %v2121 = vsel %vm1713, %v2088, 0.0
    %2122 = vadd.xlane.f32.xlu0 %v2121
    %v2123 = vpop.xlane.xlu0 %2122
    %v2124 = vsel %vm1713, %v2090, 0.0
    %2125 = vadd.xlane.f32.xlu0 %v2124
    %v2126 = vpop.xlane.xlu0 %2125
    %v2127 = vrcp.pop %v2093
    %v2128 = vrcp.pop %v2096
    %v2129 = vrcp.pop %v2099
    %v2130 = vrcp.pop %v2102
    %v2131 = vrcp.pop %v2105
    %v2132 = vrcp.pop %v2108
    %v2133 = vrcp.pop %v2111
    %v2134 = vrcp.pop %v2114
    %v2135 = vrcp.pop %v2117
    %v2136 = vrcp.pop %v2120
    %v2137 = vrcp.pop %v2123
    %v2138 = vrcp.pop %v2126
    %v2139 = vmul.f32 %v2068, %v2127
    %v2140 = vmul.f32 %v2070, %v2128
    %v2141 = vmul.f32 %v2072, %v2129
    %v2142 = vmul.f32 %v2074, %v2130
    %v2143 = vmul.f32 %v2076, %v2131
    %v2144 = vmul.f32 %v2078, %v2132
    %v2145 = vmul.f32 %v2080, %v2133
    %v2146 = vmul.f32 %v2082, %v2134
    %v2147 = vmul.f32 %v2084, %v2135
    %v2148 = vmul.f32 %v2086, %v2136
    %v2149 = vmul.f32 %v2088, %v2137
    %v2150 = vmul.f32 %v2090, %v2138
    %v2151 = vpack.c.bf16 %v2140, %v2139
    %v2152 = vpack.c.bf16 %v2142, %v2141
    %v2153 = vpack.c.bf16 %v2144, %v2143
    %v2154 = vpack.c.bf16 %v2146, %v2145
    %v2155 = vpack.c.bf16 %v2148, %v2147
    %v2156 = vpack.c.bf16 %v2150, %v2149
    %v2158 = vsel %vm1713, %v2151, 0
    %v2161 = vsel %vm1713, %v2152, 0
    %v2164 = vsel %vm1713, %v2153, 0
    %v2167 = vsel %vm1713, %v2154, 0
    %v2170 = vsel %vm1713, %v2155, 0
    %v2173 = vsel %vm1713, %v2156, 0
    %v2176 = vsel %vm646, %v1936, 0
    %2178 = vmatpush.bf16.msra.mxu0 0
    %2179 = vmatpush.bf16.msra.mxu0 0
    %2180 = vmatpush.bf16.msra.mxu0 0
    %2181 = vmatpush.bf16.msra.mxu0 0
    %2182 = vmatpush.bf16.msra.mxu0 0
    %2183 = vmatpush.bf16.msra.mxu0 0
    %2184 = vmatpush.bf16.msra.mxu0 %v2176
    %2185 = vmatpush.bf16.msra.mxu0 %v1935
    %2186 = vmatmul.bf16.gmra.mxu0 %v2158
    %v2187 = vpop.f32.mrf.mxu0
    %v2188 = vadd.f32 0.0, %v2187
    %v2189 = vpop.f32.mrf.mxu0
    %v2190 = vadd.f32 0.0, %v2189
    %2191 = vmatmul.bf16.gmra.mxu0 %v2161
    %v2192 = vpop.f32.mrf.mxu0
    %v2193 = vadd.f32 0.0, %v2192
    %v2194 = vpop.f32.mrf.mxu0
    %v2195 = vadd.f32 0.0, %v2194
    %2196 = vmatmul.bf16.gmra.mxu0 %v2164
    %v2197 = vpop.f32.mrf.mxu0
    %v2198 = vadd.f32 0.0, %v2197
    %v2199 = vpop.f32.mrf.mxu0
    %v2200 = vadd.f32 0.0, %v2199
    %2201 = vmatmul.bf16.gmra.mxu0 %v2167
    %v2202 = vpop.f32.mrf.mxu0
    %v2203 = vadd.f32 0.0, %v2202
    %v2204 = vpop.f32.mrf.mxu0
    %v2205 = vadd.f32 0.0, %v2204
    %2206 = vmatmul.bf16.gmra.mxu0 %v2170
    %v2207 = vpop.f32.mrf.mxu0
    %v2208 = vadd.f32 0.0, %v2207
    %v2209 = vpop.f32.mrf.mxu0
    %v2210 = vadd.f32 0.0, %v2209
    %2211 = vmatmul.bf16.gmra.mxu0 %v2173
    %v2212 = vpop.f32.mrf.mxu0
    %v2213 = vadd.f32 0.0, %v2212
    %v2214 = vpop.f32.mrf.mxu0
    %v2215 = vadd.f32 0.0, %v2214
    %2216 = vdwg.mxu0
    %v2217 = vmul.f32 %v2188, %v1627
    %v2218 = vmul.f32 %v2190, %v1627
    %v2219 = vmul.f32 %v2193, %v1627
    %v2220 = vmul.f32 %v2195, %v1631
    %v2221 = vmul.f32 %v2198, %v1631
    %v2222 = vmul.f32 %v2200, %v1631
    %v2223 = vadd.f32 %v2217, %v2220
    %v2224 = vadd.f32 %v2218, %v2221
    %v2225 = vadd.f32 %v2219, %v2222
    %v2226 = vmul.f32 %v2203, %v1635
    %v2227 = vmul.f32 %v2205, %v1635
    %v2228 = vmul.f32 %v2208, %v1635
    %v2229 = vadd.f32 %v2223, %v2226
    %v2230 = vadd.f32 %v2224, %v2227
    %v2231 = vadd.f32 %v2225, %v2228
    %v2232 = vmul.f32 %v2210, %v1639
    %v2233 = vmul.f32 %v2213, %v1639
    %v2234 = vmul.f32 %v2215, %v1639
    %v2235 = vadd.f32 %v2229, %v2232
    %v2236 = vadd.f32 %v2230, %v2233
    %v2237 = vadd.f32 %v2231, %v2234
    %v2238 = vpack.c.bf16 %v1931, %v1930
    %v2239 = vpack.c.bf16 %v2235, %v1932
    %v2240 = vpack.c.bf16 %v2237, %v2236
    %v2241 = vld [vmem:[%s1 + $0x50] sm:$0xf]
    %v2242 = vld [vmem:[%s1 + $0x54] sm:$0xf]
    %v2243 = vld [vmem:[%s1 + $0x58] sm:$0xf]
    %v2244 = vld [vmem:[%s1 + $0x5c] sm:$0xf]
    %v2245 = vld [vmem:[%s2 + $0xa] sm:$0x1]
    %v2246 = vperm.slane %v2245, 0
    %v2251 = vunpack.c.l.b16 %v2241
    %v2252 = vunpack.c.l.b16 %v2242
    %v2253 = vunpack.c.l.b16 %v2243
    %v2254 = vunpack.c.l.b16 %v2244
    %v2255 = vpack.c.b16 %v2252, %v2251
    %v2256 = vpack.c.b16 %v2254, %v2253
    %v2260 = vsel %vm1458, %v2238, 0
    %v2263 = vsel %vm1458, %v2239, 0
    %v2266 = vsel %vm1458, %v2240, 0
    %2268 = vmatpush.bf16.msra.mxu0 0
    %2269 = vmatpush.bf16.msra.mxu0 0
    %2270 = vmatpush.bf16.msra.mxu0 0
    %2271 = vmatpush.bf16.msra.mxu0 0
    %2272 = vmatpush.bf16.msra.mxu0 0
    %2273 = vmatpush.bf16.msra.mxu0 0
    %2274 = vmatpush.bf16.msra.mxu0 %v2256
    %2275 = vmatpush.bf16.msra.mxu0 %v2255
    %2276 = vmatmul.bf16.gmra.mxu0 %v2260
    %v2277 = vpop.f32.mrf.mxu0
    %v2278 = vadd.f32 %v2246, %v2277
    %v2279 = vpop.f32.mrf.mxu0
    %v2280 = vadd.f32 %v2246, %v2279
    %2281 = vmatmul.bf16.gmra.mxu0 %v2263
    %v2282 = vpop.f32.mrf.mxu0
    %v2283 = vadd.f32 %v2246, %v2282
    %v2284 = vpop.f32.mrf.mxu0
    %v2285 = vadd.f32 %v2246, %v2284
    %2286 = vmatmul.bf16.gmra.mxu0 %v2266
    %v2287 = vpop.f32.mrf.mxu0
    %v2288 = vadd.f32 %v2246, %v2287
    %v2289 = vpop.f32.mrf.mxu0
    %v2290 = vadd.f32 %v2246, %v2289
    %2291 = vdwg.mxu0
    %v2292 = vadd.f32 %v1473, %v2278
    %v2293 = vadd.f32 %v1474, %v2280
    %v2294 = vadd.f32 %v1475, %v2283
    %v2295 = vadd.f32 %v1476, %v2285
    %v2296 = vadd.f32 %v1477, %v2288
    %v2297 = vadd.f32 %v1478, %v2290
    %v2298 = vld [vmem:[%s2 + $0xd] sm:$0x1]
    %v2299 = vld [vmem:[%s2 + $0xe] sm:$0x1]
    %v2300 = vsel %vm1458, %v2292, 0.0
    %2301 = vadd.xlane.f32.xlu0 %v2300
    %v2302 = vpop.xlane.xlu0 %2301
    %v2303 = vsel %vm1458, %v2293, 0.0
    %2304 = vadd.xlane.f32.xlu0 %v2303
    %v2305 = vpop.xlane.xlu0 %2304
    %v2306 = vsel %vm1458, %v2294, 0.0
    %2307 = vadd.xlane.f32.xlu0 %v2306
    %v2308 = vpop.xlane.xlu0 %2307
    %v2309 = vsel %vm1458, %v2295, 0.0
    %2310 = vadd.xlane.f32.xlu0 %v2309
    %v2311 = vpop.xlane.xlu0 %2310
    %v2312 = vsel %vm1458, %v2296, 0.0
    %2313 = vadd.xlane.f32.xlu0 %v2312
    %v2314 = vpop.xlane.xlu0 %2313
    %v2315 = vsel %vm1458, %v2297, 0.0
    %2316 = vadd.xlane.f32.xlu0 %v2315
    %v2317 = vpop.xlane.xlu0 %2316
    %v2318 = vrcp.pop 32.0
    %v2319 = vmul.f32 32.0, %v2318
    %v2320 = vsub.f32 1.0, %v2319
    %v2321 = vmul.f32 %v2318, %v2320
    %v2322 = vadd.f32 %v2318, %v2321
    %vm2323 = vweird.f32 %v2318
    %v2324 = vsel %vm2323, %v2318, %v2322
    %v2325 = vmul.f32 %v2302, %v2324
    %v2326 = vmul.f32 %v2305, %v2324
    %v2327 = vmul.f32 %v2308, %v2324
    %v2328 = vmul.f32 %v2311, %v2324
    %v2329 = vmul.f32 %v2314, %v2324
    %v2330 = vmul.f32 %v2317, %v2324
    %v2331 = vmul.f32 %v2292, %v2292
    %v2332 = vmul.f32 %v2293, %v2293
    %v2333 = vmul.f32 %v2294, %v2294
    %v2334 = vmul.f32 %v2295, %v2295
    %v2335 = vmul.f32 %v2296, %v2296
    %v2336 = vmul.f32 %v2297, %v2297
    %v2337 = vsel %vm1458, %v2331, 0.0
    %2338 = vadd.xlane.f32.xlu0 %v2337
    %v2339 = vpop.xlane.xlu0 %2338
    %v2340 = vsel %vm1458, %v2332, 0.0
    %2341 = vadd.xlane.f32.xlu0 %v2340
    %v2342 = vpop.xlane.xlu0 %2341
    %v2343 = vsel %vm1458, %v2333, 0.0
    %2344 = vadd.xlane.f32.xlu0 %v2343
    %v2345 = vpop.xlane.xlu0 %2344
    %v2346 = vsel %vm1458, %v2334, 0.0
    %2347 = vadd.xlane.f32.xlu0 %v2346
    %v2348 = vpop.xlane.xlu0 %2347
    %v2349 = vsel %vm1458, %v2335, 0.0
    %2350 = vadd.xlane.f32.xlu0 %v2349
    %v2351 = vpop.xlane.xlu0 %2350
    %v2352 = vsel %vm1458, %v2336, 0.0
    %2353 = vadd.xlane.f32.xlu0 %v2352
    %v2354 = vpop.xlane.xlu0 %2353
    %v2355 = vmul.f32 %v2339, %v2324
    %v2356 = vmul.f32 %v2342, %v2324
    %v2357 = vmul.f32 %v2345, %v2324
    %v2358 = vmul.f32 %v2348, %v2324
    %v2359 = vmul.f32 %v2351, %v2324
    %v2360 = vmul.f32 %v2354, %v2324
    %v2361 = vmul.f32 %v2325, %v2325
    %v2362 = vmul.f32 %v2326, %v2326
    %v2363 = vmul.f32 %v2327, %v2327
    %v2364 = vmul.f32 %v2328, %v2328
    %v2365 = vmul.f32 %v2329, %v2329
    %v2366 = vmul.f32 %v2330, %v2330
    %v2367 = vsub.f32 %v2355, %v2361
    %v2368 = vsub.f32 %v2356, %v2362
    %v2369 = vsub.f32 %v2357, %v2363
    %v2370 = vsub.f32 %v2358, %v2364
    %v2371 = vsub.f32 %v2359, %v2365
    %v2372 = vsub.f32 %v2360, %v2366
    %v2373 = vmax.f32 %v2367, 0.0
    %v2374 = vmax.f32 %v2368, 0.0
    %v2375 = vmax.f32 %v2369, 0.0
    %v2376 = vmax.f32 %v2370, 0.0
    %v2377 = vmax.f32 %v2371, 0.0
    %v2378 = vmax.f32 %v2372, 0.0
    %v2379 = vsub.f32 %v2292, %v2325
    %v2380 = vsub.f32 %v2293, %v2326
    %v2381 = vsub.f32 %v2294, %v2327
    %v2382 = vsub.f32 %v2295, %v2328
    %v2383 = vsub.f32 %v2296, %v2329
    %v2384 = vsub.f32 %v2297, %v2330
    %v2385 = vadd.f32 %v2373, 1e-05
    %v2386 = vadd.f32 %v2374, 1e-05
    %v2387 = vadd.f32 %v2375, 1e-05
    %v2388 = vadd.f32 %v2376, 1e-05
    %v2389 = vadd.f32 %v2377, 1e-05
    %v2390 = vadd.f32 %v2378, 1e-05
    %v2391 = vrsqrt.pop %v2385
    %v2392 = vmul.f32 %v2391, %v2385
    %v2393 = vmul.f32 %v2392, %v2391
    %v2394 = vmul.f32 0.5, %v2393
    %v2395 = vsub.f32 1.5, %v2394
    %v2396 = vmul.f32 %v2391, %v2395
    %vm2397 = vweird.f32 %v2385
    %vm2398 = vweird.f32 %v2391
    %vm2399 = vmor %vm2397, %vm2398
    %v2400 = vsel %vm2399, %v2391, %v2396
    %v2401 = vrsqrt.pop %v2386
    %v2402 = vmul.f32 %v2401, %v2386
    %v2403 = vmul.f32 %v2402, %v2401
    %v2404 = vmul.f32 0.5, %v2403
    %v2405 = vsub.f32 1.5, %v2404
    %v2406 = vmul.f32 %v2401, %v2405
    %vm2407 = vweird.f32 %v2386
    %vm2408 = vweird.f32 %v2401
    %vm2409 = vmor %vm2407, %vm2408
    %v2410 = vsel %vm2409, %v2401, %v2406
    %v2411 = vrsqrt.pop %v2387
    %v2412 = vmul.f32 %v2411, %v2387
    %v2413 = vmul.f32 %v2412, %v2411
    %v2414 = vmul.f32 0.5, %v2413
    %v2415 = vsub.f32 1.5, %v2414
    %v2416 = vmul.f32 %v2411, %v2415
    %vm2417 = vweird.f32 %v2387
    %vm2418 = vweird.f32 %v2411
    %vm2419 = vmor %vm2417, %vm2418
    %v2420 = vsel %vm2419, %v2411, %v2416
    %v2421 = vrsqrt.pop %v2388
    %v2422 = vmul.f32 %v2421, %v2388
    %v2423 = vmul.f32 %v2422, %v2421
    %v2424 = vmul.f32 0.5, %v2423
    %v2425 = vsub.f32 1.5, %v2424
    %v2426 = vmul.f32 %v2421, %v2425
    %vm2427 = vweird.f32 %v2388
    %vm2428 = vweird.f32 %v2421
    %vm2429 = vmor %vm2427, %vm2428
    %v2430 = vsel %vm2429, %v2421, %v2426
    %v2431 = vrsqrt.pop %v2389
    %v2432 = vmul.f32 %v2431, %v2389
    %v2433 = vmul.f32 %v2432, %v2431
    %v2434 = vmul.f32 0.5, %v2433
    %v2435 = vsub.f32 1.5, %v2434
    %v2436 = vmul.f32 %v2431, %v2435
    %vm2437 = vweird.f32 %v2389
    %vm2438 = vweird.f32 %v2431
    %vm2439 = vmor %vm2437, %vm2438
    %v2440 = vsel %vm2439, %v2431, %v2436
    %v2441 = vrsqrt.pop %v2390
    %v2442 = vmul.f32 %v2441, %v2390
    %v2443 = vmul.f32 %v2442, %v2441
    %v2444 = vmul.f32 0.5, %v2443
    %v2445 = vsub.f32 1.5, %v2444
    %v2446 = vmul.f32 %v2441, %v2445
    %vm2447 = vweird.f32 %v2390
    %vm2448 = vweird.f32 %v2441
    %vm2449 = vmor %vm2447, %vm2448
    %v2450 = vsel %vm2449, %v2441, %v2446
    %v2451 = vmul.f32 %v2379, %v2400
    %v2452 = vmul.f32 %v2380, %v2410
    %v2453 = vmul.f32 %v2381, %v2420
    %v2454 = vmul.f32 %v2382, %v2430
    %v2455 = vmul.f32 %v2383, %v2440
    %v2456 = vmul.f32 %v2384, %v2450
    %v2457 = vperm.slane %v2298, 0
    %v2458 = vmul.f32 %v2451, %v2457
    %v2459 = vmul.f32 %v2452, %v2457
    %v2460 = vmul.f32 %v2453, %v2457
    %v2461 = vmul.f32 %v2454, %v2457
    %v2462 = vmul.f32 %v2455, %v2457
    %v2463 = vmul.f32 %v2456, %v2457
    %v2464 = vperm.slane %v2299, 0
    %v2465 = vadd.f32 %v2458, %v2464
    %v2466 = vadd.f32 %v2459, %v2464
    %v2467 = vadd.f32 %v2460, %v2464
    %v2468 = vadd.f32 %v2461, %v2464
    %v2469 = vadd.f32 %v2462, %v2464
    %v2470 = vadd.f32 %v2463, %v2464
    %v2471 = vpack.c.bf16 %v2466, %v2465
    %v2472 = vpack.c.bf16 %v2468, %v2467
    %v2473 = vpack.c.bf16 %v2470, %v2469
    %v2474 = vld [vmem:[%s1 + $0x60] sm:$0xf]
    %v2475 = vld [vmem:[%s1 + $0x64] sm:$0xf]
    %v2476 = vld [vmem:[%s1 + $0x68] sm:$0xf]
    %v2477 = vld [vmem:[%s1 + $0x6c] sm:$0xf]
    %v2478 = vld [vmem:[%s2 + $0xb] sm:$0x1]
    %v2479 = vperm.slane %v2478, 0
    %v2484 = vunpack.c.l.b16 %v2474
    %v2485 = vunpack.c.l.b16 %v2475
    %v2486 = vunpack.c.l.b16 %v2476
    %v2487 = vunpack.c.l.b16 %v2477
    %v2488 = vpack.c.b16 %v2485, %v2484
    %v2489 = vpack.c.b16 %v2487, %v2486
    %v2493 = vsel %vm1458, %v2471, 0
    %v2496 = vsel %vm1458, %v2472, 0
    %v2499 = vsel %vm1458, %v2473, 0
    %2501 = vmatpush.bf16.msra.mxu0 0
    %2502 = vmatpush.bf16.msra.mxu0 0
    %2503 = vmatpush.bf16.msra.mxu0 0
    %2504 = vmatpush.bf16.msra.mxu0 0
    %2505 = vmatpush.bf16.msra.mxu0 0
    %2506 = vmatpush.bf16.msra.mxu0 0
    %2507 = vmatpush.bf16.msra.mxu0 %v2489
    %2508 = vmatpush.bf16.msra.mxu0 %v2488
    %2509 = vmatmul.bf16.gmra.mxu0 %v2493
    %v2510 = vpop.f32.mrf.mxu0
    %v2511 = vadd.f32 %v2479, %v2510
    %v2512 = vpop.f32.mrf.mxu0
    %v2513 = vadd.f32 %v2479, %v2512
    %2514 = vmatmul.bf16.gmra.mxu0 %v2496
    %v2515 = vpop.f32.mrf.mxu0
    %v2516 = vadd.f32 %v2479, %v2515
    %v2517 = vpop.f32.mrf.mxu0
    %v2518 = vadd.f32 %v2479, %v2517
    %2519 = vmatmul.bf16.gmra.mxu0 %v2499
    %v2520 = vpop.f32.mrf.mxu0
    %v2521 = vadd.f32 %v2479, %v2520
    %v2522 = vpop.f32.mrf.mxu0
    %v2523 = vadd.f32 %v2479, %v2522
    %2524 = vdwg.mxu0
    %v2525 = vmax.f32 %v2511, 0.0
    %v2526 = vmax.f32 %v2513, 0.0
    %v2527 = vmax.f32 %v2516, 0.0
    %v2528 = vmax.f32 %v2518, 0.0
    %v2529 = vmax.f32 %v2521, 0.0
    %v2530 = vmax.f32 %v2523, 0.0
    %v2531 = vpack.c.bf16 %v2526, %v2525
    %v2532 = vpack.c.bf16 %v2528, %v2527
    %v2533 = vpack.c.bf16 %v2530, %v2529
    %v2534 = vld [vmem:[%s1 + $0x70] sm:$0xf]
    %v2535 = vld [vmem:[%s1 + $0x74] sm:$0xf]
    %v2536 = vld [vmem:[%s1 + $0x78] sm:$0xf]
    %v2537 = vld [vmem:[%s1 + $0x7c] sm:$0xf]
    %v2538 = vld [vmem:[%s1 + $0x80] sm:$0xf]
    %v2539 = vld [vmem:[%s1 + $0x84] sm:$0xf]
    %v2540 = vld [vmem:[%s1 + $0x88] sm:$0xf]
    %v2541 = vld [vmem:[%s1 + $0x8c] sm:$0xf]
    %v2542 = vld [vmem:[%s2 + $0xc] sm:$0x1]
    %v2543 = vperm.slane %v2542, 0
    %v2552 = vunpack.c.l.b16 %v2534
    %v2553 = vunpack.c.l.b16 %v2535
    %v2554 = vunpack.c.l.b16 %v2536
    %v2555 = vunpack.c.l.b16 %v2537
    %v2556 = vunpack.c.l.b16 %v2538
    %v2557 = vunpack.c.l.b16 %v2539
    %v2558 = vunpack.c.l.b16 %v2540
    %v2559 = vunpack.c.l.b16 %v2541
    %v2560 = vpack.c.b16 %v2553, %v2552
    %v2561 = vpack.c.b16 %v2555, %v2554
    %v2562 = vpack.c.b16 %v2557, %v2556
    %v2563 = vpack.c.b16 %v2559, %v2558
    %vm2568 = vcmask 523264
    %v2570 = vsel %vm2568, %v2531, 0
    %v2573 = vsel %vm2568, %v2532, 0
    %v2576 = vsel %vm2568, %v2533, 0
    %2578 = vmatpush.bf16.msra.mxu0 0
    %2579 = vmatpush.bf16.msra.mxu0 0
    %2580 = vmatpush.bf16.msra.mxu0 0
    %2581 = vmatpush.bf16.msra.mxu0 0
    %2582 = vmatpush.bf16.msra.mxu0 %v2563
    %2583 = vmatpush.bf16.msra.mxu0 %v2562
    %2584 = vmatpush.bf16.msra.mxu0 %v2561
    %2585 = vmatpush.bf16.msra.mxu0 %v2560
    %2586 = vmatmul.bf16.gmra.mxu0 %v2570
    %v2587 = vpop.f32.mrf.mxu0
    %v2588 = vadd.f32 %v2543, %v2587
    %v2589 = vpop.f32.mrf.mxu0
    %v2590 = vadd.f32 %v2543, %v2589
    %2591 = vmatmul.bf16.gmra.mxu0 %v2573
    %v2592 = vpop.f32.mrf.mxu0
    %v2593 = vadd.f32 %v2543, %v2592
    %v2594 = vpop.f32.mrf.mxu0
    %v2595 = vadd.f32 %v2543, %v2594
    %2596 = vmatmul.bf16.gmra.mxu0 %v2576
    %v2597 = vpop.f32.mrf.mxu0
    %v2598 = vadd.f32 %v2543, %v2597
    %v2599 = vpop.f32.mrf.mxu0
    %v2600 = vadd.f32 %v2543, %v2599
    %2601 = vdwg.mxu0
    %v2602 = vadd.f32 %v2465, %v2588
    %v2603 = vadd.f32 %v2466, %v2590
    %v2604 = vadd.f32 %v2467, %v2593
    %v2605 = vadd.f32 %v2468, %v2595
    %v2606 = vadd.f32 %v2469, %v2598
    %v2607 = vadd.f32 %v2470, %v2600
    %v2608 = vld [vmem:[%s2 + $0xf] sm:$0x1]
    %v2609 = vld [vmem:[%s2 + $0x10] sm:$0x1]
    %v2610 = vsel %vm1458, %v2602, 0.0
    %2611 = vadd.xlane.f32.xlu0 %v2610
    %v2612 = vpop.xlane.xlu0 %2611
    %v2613 = vsel %vm1458, %v2603, 0.0
    %2614 = vadd.xlane.f32.xlu0 %v2613
    %v2615 = vpop.xlane.xlu0 %2614
    %v2616 = vsel %vm1458, %v2604, 0.0
    %2617 = vadd.xlane.f32.xlu0 %v2616
    %v2618 = vpop.xlane.xlu0 %2617
    %v2619 = vsel %vm1458, %v2605, 0.0
    %2620 = vadd.xlane.f32.xlu0 %v2619
    %v2621 = vpop.xlane.xlu0 %2620
    %v2622 = vsel %vm1458, %v2606, 0.0
    %2623 = vadd.xlane.f32.xlu0 %v2622
    %v2624 = vpop.xlane.xlu0 %2623
    %v2625 = vsel %vm1458, %v2607, 0.0
    %2626 = vadd.xlane.f32.xlu0 %v2625
    %v2627 = vpop.xlane.xlu0 %2626
    %v2628 = vmul.f32 %v2612, %v2324
    %v2629 = vmul.f32 %v2615, %v2324
    %v2630 = vmul.f32 %v2618, %v2324
    %v2631 = vmul.f32 %v2621, %v2324
    %v2632 = vmul.f32 %v2624, %v2324
    %v2633 = vmul.f32 %v2627, %v2324
    %v2634 = vmul.f32 %v2602, %v2602
    %v2635 = vmul.f32 %v2603, %v2603
    %v2636 = vmul.f32 %v2604, %v2604
    %v2637 = vmul.f32 %v2605, %v2605
    %v2638 = vmul.f32 %v2606, %v2606
    %v2639 = vmul.f32 %v2607, %v2607
    %v2640 = vsel %vm1458, %v2634, 0.0
    %2641 = vadd.xlane.f32.xlu0 %v2640
    %v2642 = vpop.xlane.xlu0 %2641
    %v2643 = vsel %vm1458, %v2635, 0.0
    %2644 = vadd.xlane.f32.xlu0 %v2643
    %v2645 = vpop.xlane.xlu0 %2644
    %v2646 = vsel %vm1458, %v2636, 0.0
    %2647 = vadd.xlane.f32.xlu0 %v2646
    %v2648 = vpop.xlane.xlu0 %2647
    %v2649 = vsel %vm1458, %v2637, 0.0
    %2650 = vadd.xlane.f32.xlu0 %v2649
    %v2651 = vpop.xlane.xlu0 %2650
    %v2652 = vsel %vm1458, %v2638, 0.0
    %2653 = vadd.xlane.f32.xlu0 %v2652
    %v2654 = vpop.xlane.xlu0 %2653
    %v2655 = vsel %vm1458, %v2639, 0.0
    %2656 = vadd.xlane.f32.xlu0 %v2655
    %v2657 = vpop.xlane.xlu0 %2656
    %v2658 = vmul.f32 %v2642, %v2324
    %v2659 = vmul.f32 %v2645, %v2324
    %v2660 = vmul.f32 %v2648, %v2324
    %v2661 = vmul.f32 %v2651, %v2324
    %v2662 = vmul.f32 %v2654, %v2324
    %v2663 = vmul.f32 %v2657, %v2324
    %v2664 = vmul.f32 %v2628, %v2628
    %v2665 = vmul.f32 %v2629, %v2629
    %v2666 = vmul.f32 %v2630, %v2630
    %v2667 = vmul.f32 %v2631, %v2631
    %v2668 = vmul.f32 %v2632, %v2632
    %v2669 = vmul.f32 %v2633, %v2633
    %v2670 = vsub.f32 %v2658, %v2664
    %v2671 = vsub.f32 %v2659, %v2665
    %v2672 = vsub.f32 %v2660, %v2666
    %v2673 = vsub.f32 %v2661, %v2667
    %v2674 = vsub.f32 %v2662, %v2668
    %v2675 = vsub.f32 %v2663, %v2669
    %v2676 = vmax.f32 %v2670, 0.0
    %v2677 = vmax.f32 %v2671, 0.0
    %v2678 = vmax.f32 %v2672, 0.0
    %v2679 = vmax.f32 %v2673, 0.0
    %v2680 = vmax.f32 %v2674, 0.0
    %v2681 = vmax.f32 %v2675, 0.0
    %v2682 = vsub.f32 %v2602, %v2628
    %v2683 = vsub.f32 %v2603, %v2629
    %v2684 = vsub.f32 %v2604, %v2630
    %v2685 = vsub.f32 %v2605, %v2631
    %v2686 = vsub.f32 %v2606, %v2632
    %v2687 = vsub.f32 %v2607, %v2633
    %v2688 = vadd.f32 %v2676, 1e-05
    %v2689 = vadd.f32 %v2677, 1e-05
    %v2690 = vadd.f32 %v2678, 1e-05
    %v2691 = vadd.f32 %v2679, 1e-05
    %v2692 = vadd.f32 %v2680, 1e-05
    %v2693 = vadd.f32 %v2681, 1e-05
    %v2694 = vrsqrt.pop %v2688
    %v2695 = vmul.f32 %v2694, %v2688
    %v2696 = vmul.f32 %v2695, %v2694
    %v2697 = vmul.f32 0.5, %v2696
    %v2698 = vsub.f32 1.5, %v2697
    %v2699 = vmul.f32 %v2694, %v2698
    %vm2700 = vweird.f32 %v2688
    %vm2701 = vweird.f32 %v2694
    %vm2702 = vmor %vm2700, %vm2701
    %v2703 = vsel %vm2702, %v2694, %v2699
    %v2704 = vrsqrt.pop %v2689
    %v2705 = vmul.f32 %v2704, %v2689
    %v2706 = vmul.f32 %v2705, %v2704
    %v2707 = vmul.f32 0.5, %v2706
    %v2708 = vsub.f32 1.5, %v2707
    %v2709 = vmul.f32 %v2704, %v2708
    %vm2710 = vweird.f32 %v2689
    %vm2711 = vweird.f32 %v2704
    %vm2712 = vmor %vm2710, %vm2711
    %v2713 = vsel %vm2712, %v2704, %v2709
    %v2714 = vrsqrt.pop %v2690
    %v2715 = vmul.f32 %v2714, %v2690
    %v2716 = vmul.f32 %v2715, %v2714
    %v2717 = vmul.f32 0.5, %v2716
    %v2718 = vsub.f32 1.5, %v2717
    %v2719 = vmul.f32 %v2714, %v2718
    %vm2720 = vweird.f32 %v2690
    %vm2721 = vweird.f32 %v2714
    %vm2722 = vmor %vm2720, %vm2721
    %v2723 = vsel %vm2722, %v2714, %v2719
    %v2724 = vrsqrt.pop %v2691
    %v2725 = vmul.f32 %v2724, %v2691
    %v2726 = vmul.f32 %v2725, %v2724
    %v2727 = vmul.f32 0.5, %v2726
    %v2728 = vsub.f32 1.5, %v2727
    %v2729 = vmul.f32 %v2724, %v2728
    %vm2730 = vweird.f32 %v2691
    %vm2731 = vweird.f32 %v2724
    %vm2732 = vmor %vm2730, %vm2731
    %v2733 = vsel %vm2732, %v2724, %v2729
    %v2734 = vrsqrt.pop %v2692
    %v2735 = vmul.f32 %v2734, %v2692
    %v2736 = vmul.f32 %v2735, %v2734
    %v2737 = vmul.f32 0.5, %v2736
    %v2738 = vsub.f32 1.5, %v2737
    %v2739 = vmul.f32 %v2734, %v2738
    %vm2740 = vweird.f32 %v2692
    %vm2741 = vweird.f32 %v2734
    %vm2742 = vmor %vm2740, %vm2741
    %v2743 = vsel %vm2742, %v2734, %v2739
    %v2744 = vrsqrt.pop %v2693
    %v2745 = vmul.f32 %v2744, %v2693
    %v2746 = vmul.f32 %v2745, %v2744
    %v2747 = vmul.f32 0.5, %v2746
    %v2748 = vsub.f32 1.5, %v2747
    %v2749 = vmul.f32 %v2744, %v2748
    %vm2750 = vweird.f32 %v2693
    %vm2751 = vweird.f32 %v2744
    %vm2752 = vmor %vm2750, %vm2751
    %v2753 = vsel %vm2752, %v2744, %v2749
    %v2754 = vmul.f32 %v2682, %v2703
    %v2755 = vmul.f32 %v2683, %v2713
    %v2756 = vmul.f32 %v2684, %v2723
    %v2757 = vmul.f32 %v2685, %v2733
    %v2758 = vmul.f32 %v2686, %v2743
    %v2759 = vmul.f32 %v2687, %v2753
    %v2760 = vperm.slane %v2608, 0
    %v2761 = vmul.f32 %v2754, %v2760
    %v2762 = vmul.f32 %v2755, %v2760
    %v2763 = vmul.f32 %v2756, %v2760
    %v2764 = vmul.f32 %v2757, %v2760
    %v2765 = vmul.f32 %v2758, %v2760
    %v2766 = vmul.f32 %v2759, %v2760
    %v2767 = vperm.slane %v2609, 0
    %v2768 = vadd.f32 %v2761, %v2767
    %v2769 = vadd.f32 %v2762, %v2767
    %v2770 = vadd.f32 %v2763, %v2767
    %v2771 = vadd.f32 %v2764, %v2767
    %v2772 = vadd.f32 %v2765, %v2767
    %v2773 = vadd.f32 %v2766, %v2767
    %v2774 = vpack.c.bf16 %v2769, %v2768
    %v2775 = vpack.c.bf16 %v2771, %v2770
    %v2776 = vpack.c.bf16 %v2773, %v2772
    %v2777 = vld [vmem:[%s1 + $0x90] sm:$0xf]
    %v2778 = vld [vmem:[%s1 + $0x94] sm:$0xf]
    %v2779 = vld [vmem:[%s1 + $0x98] sm:$0xf]
    %v2780 = vld [vmem:[%s1 + $0x9c] sm:$0xf]
    %v2781 = vld [vmem:[%s2 + $0x11] sm:$0x1]
    %v2782 = vperm.slane %v2781, 0
    %v2787 = vunpack.c.l.b16 %v2777
    %v2788 = vunpack.c.l.b16 %v2778
    %v2789 = vunpack.c.l.b16 %v2779
    %v2790 = vunpack.c.l.b16 %v2780
    %v2791 = vpack.c.b16 %v2788, %v2787
    %v2792 = vpack.c.b16 %v2790, %v2789
    %v2796 = vsel %vm1458, %v2774, 0
    %v2799 = vsel %vm1458, %v2775, 0
    %v2802 = vsel %vm1458, %v2776, 0
    %2804 = vmatpush.bf16.msra.mxu0 0
    %2805 = vmatpush.bf16.msra.mxu0 0
    %2806 = vmatpush.bf16.msra.mxu0 0
    %2807 = vmatpush.bf16.msra.mxu0 0
    %2808 = vmatpush.bf16.msra.mxu0 0
    %2809 = vmatpush.bf16.msra.mxu0 0
    %2810 = vmatpush.bf16.msra.mxu0 %v2792
    %2811 = vmatpush.bf16.msra.mxu0 %v2791
    %2812 = vmatmul.bf16.gmra.mxu0 %v2796
    %v2813 = vpop.f32.mrf.mxu0
    %v2814 = vadd.f32 %v2782, %v2813
    %v2815 = vpop.f32.mrf.mxu0
    %v2816 = vadd.f32 %v2782, %v2815
    %2817 = vmatmul.bf16.gmra.mxu0 %v2799
    %v2818 = vpop.f32.mrf.mxu0
    %v2819 = vadd.f32 %v2782, %v2818
    %v2820 = vpop.f32.mrf.mxu0
    %v2821 = vadd.f32 %v2782, %v2820
    %2822 = vmatmul.bf16.gmra.mxu0 %v2802
    %v2823 = vpop.f32.mrf.mxu0
    %v2824 = vadd.f32 %v2782, %v2823
    %v2825 = vpop.f32.mrf.mxu0
    %v2826 = vadd.f32 %v2782, %v2825
    %2827 = vdwg.mxu0
    %v2828 = vld [vmem:[%s1 + $0xa0] sm:$0xf]
    %v2829 = vld [vmem:[%s1 + $0xa4] sm:$0xf]
    %v2830 = vld [vmem:[%s1 + $0xa8] sm:$0xf]
    %v2831 = vld [vmem:[%s1 + $0xac] sm:$0xf]
    %v2832 = vld [vmem:[%s2 + $0x12] sm:$0x1]
    %v2833 = vperm.slane %v2832, 0
    %v2838 = vunpack.c.l.b16 %v2828
    %v2839 = vunpack.c.l.b16 %v2829
    %v2840 = vunpack.c.l.b16 %v2830
    %v2841 = vunpack.c.l.b16 %v2831
    %v2842 = vpack.c.b16 %v2839, %v2838
    %v2843 = vpack.c.b16 %v2841, %v2840
    %2846 = vmatpush.bf16.msra.mxu0 0
    %2847 = vmatpush.bf16.msra.mxu0 0
    %2848 = vmatpush.bf16.msra.mxu0 0
    %2849 = vmatpush.bf16.msra.mxu0 0
    %2850 = vmatpush.bf16.msra.mxu0 0
    %2851 = vmatpush.bf16.msra.mxu0 0
    %2852 = vmatpush.bf16.msra.mxu0 %v2843
    %2853 = vmatpush.bf16.msra.mxu0 %v2842
    %2854 = vmatmul.bf16.gmra.mxu0 %v2796
    %v2855 = vpop.f32.mrf.mxu0
    %v2856 = vadd.f32 %v2833, %v2855
    %v2857 = vpop.f32.mrf.mxu0
    %v2858 = vadd.f32 %v2833, %v2857
    %2859 = vmatmul.bf16.gmra.mxu0 %v2799
    %v2860 = vpop.f32.mrf.mxu0
    %v2861 = vadd.f32 %v2833, %v2860
    %v2862 = vpop.f32.mrf.mxu0
    %v2863 = vadd.f32 %v2833, %v2862
    %2864 = vmatmul.bf16.gmra.mxu0 %v2802
    %v2865 = vpop.f32.mrf.mxu0
    %v2866 = vadd.f32 %v2833, %v2865
    %v2867 = vpop.f32.mrf.mxu0
    %v2868 = vadd.f32 %v2833, %v2867
    %2869 = vdwg.mxu0
    %v2870 = vld [vmem:[%s1 + $0xb0] sm:$0xf]
    %v2871 = vld [vmem:[%s1 + $0xb4] sm:$0xf]
    %v2872 = vld [vmem:[%s1 + $0xb8] sm:$0xf]
    %v2873 = vld [vmem:[%s1 + $0xbc] sm:$0xf]
    %v2874 = vld [vmem:[%s2 + $0x13] sm:$0x1]
    %v2875 = vperm.slane %v2874, 0
    %v2880 = vunpack.c.l.b16 %v2870
    %v2881 = vunpack.c.l.b16 %v2871
    %v2882 = vunpack.c.l.b16 %v2872
    %v2883 = vunpack.c.l.b16 %v2873
    %v2884 = vpack.c.b16 %v2881, %v2880
    %v2885 = vpack.c.b16 %v2883, %v2882
    %2888 = vmatpush.bf16.msra.mxu0 0
    %2889 = vmatpush.bf16.msra.mxu0 0
    %2890 = vmatpush.bf16.msra.mxu0 0
    %2891 = vmatpush.bf16.msra.mxu0 0
    %2892 = vmatpush.bf16.msra.mxu0 0
    %2893 = vmatpush.bf16.msra.mxu0 0
    %2894 = vmatpush.bf16.msra.mxu0 %v2885
    %2895 = vmatpush.bf16.msra.mxu0 %v2884
    %2896 = vmatmul.bf16.gmra.mxu0 %v2796
    %v2897 = vpop.f32.mrf.mxu0
    %v2898 = vadd.f32 %v2875, %v2897
    %v2899 = vpop.f32.mrf.mxu0
    %v2900 = vadd.f32 %v2875, %v2899
    %2901 = vmatmul.bf16.gmra.mxu0 %v2799
    %v2902 = vpop.f32.mrf.mxu0
    %v2903 = vadd.f32 %v2875, %v2902
    %v2904 = vpop.f32.mrf.mxu0
    %v2905 = vadd.f32 %v2875, %v2904
    %2906 = vmatmul.bf16.gmra.mxu0 %v2802
    %v2907 = vpop.f32.mrf.mxu0
    %v2908 = vadd.f32 %v2875, %v2907
    %v2909 = vpop.f32.mrf.mxu0
    %v2910 = vadd.f32 %v2875, %v2909
    %2911 = vdwg.mxu0
    %v2912 = vpack.c.bf16 %v2858, %v2856
    %v2913 = vpack.c.bf16 %v2861, %v2861
    %v2914 = vpack.c.bf16 %v2900, %v2898
    %v2915 = vpack.c.bf16 %v2903, %v2903
    %v2916 = vmul.f32 %v2814, %v1627
    %v2917 = vmul.f32 %v2816, %v1627
    %v2918 = vmul.f32 %v2819, %v1627
    %v2919 = vmul.f32 %v2814, %v1631
    %v2920 = vmul.f32 %v2816, %v1631
    %v2921 = vmul.f32 %v2819, %v1631
    %v2922 = vmul.f32 %v2814, %v1635
    %v2923 = vmul.f32 %v2816, %v1635
    %v2924 = vmul.f32 %v2819, %v1635
    %v2925 = vmul.f32 %v2814, %v1639
    %v2926 = vmul.f32 %v2816, %v1639
    %v2927 = vmul.f32 %v2819, %v1639
    %v2928 = vpack.c.bf16 %v2917, %v2916
    %v2929 = vpack.c.bf16 %v2919, %v2918
    %v2930 = vpack.c.bf16 %v2921, %v2920
    %v2931 = vpack.c.bf16 %v2923, %v2922
    %v2932 = vpack.c.bf16 %v2925, %v2924
    %v2933 = vpack.c.bf16 %v2927, %v2926
    %v2935 = vsel %vm1458, %v2928, 0
    %v2938 = vsel %vm1458, %v2929, 0
    %v2941 = vsel %vm1458, %v2930, 0
    %v2944 = vsel %vm1458, %v2931, 0
    %v2947 = vsel %vm1458, %v2932, 0
    %v2950 = vsel %vm1458, %v2933, 0
    %v2953 = vsel %vm1458, %v2912, 0
    %v2956 = vsel %vm1458, %v2913, 0
    %2958 = vmatpush.bf16.xpose.msra.mxu0 0
    %2959 = vmatpush.bf16.xpose.msra.mxu0 0
    %2960 = vmatpush.bf16.xpose.msra.mxu0 0
    %2961 = vmatpush.bf16.xpose.msra.mxu0 0
    %2962 = vmatpush.bf16.xpose.msra.mxu0 0
    %2963 = vmatpush.bf16.xpose.msra.mxu0 0
    %2964 = vmatpush.bf16.xpose.msra.mxu0 %v2956
    %2965 = vmatpush.bf16.xpose.msra.mxu0 %v2953
    %2966 = vmatmul.bf16.gmra.mxu0 %v2935
    %v2967 = vpop.f32.mrf.mxu0
    %v2968 = vadd.f32 %v1649, %v2967
    %v2969 = vpop.f32.mrf.mxu0
    %v2970 = vadd.f32 %v1649, %v2969
    %2971 = vmatmul.bf16.gmra.mxu0 %v2938
    %v2972 = vpop.f32.mrf.mxu0
    %v2973 = vadd.f32 %v1649, %v2972
    %v2974 = vpop.f32.mrf.mxu0
    %v2975 = vadd.f32 %v1649, %v2974
    %2976 = vmatmul.bf16.gmra.mxu0 %v2941
    %v2977 = vpop.f32.mrf.mxu0
    %v2978 = vadd.f32 %v1649, %v2977
    %v2979 = vpop.f32.mrf.mxu0
    %v2980 = vadd.f32 %v1649, %v2979
    %2981 = vmatmul.bf16.gmra.mxu0 %v2944
    %v2982 = vpop.f32.mrf.mxu0
    %v2983 = vadd.f32 %v1649, %v2982
    %v2984 = vpop.f32.mrf.mxu0
    %v2985 = vadd.f32 %v1649, %v2984
    %2986 = vmatmul.bf16.gmra.mxu0 %v2947
    %v2987 = vpop.f32.mrf.mxu0
    %v2988 = vadd.f32 %v1649, %v2987
    %v2989 = vpop.f32.mrf.mxu0
    %v2990 = vadd.f32 %v1649, %v2989
    %2991 = vmatmul.bf16.gmra.mxu0 %v2950
    %v2992 = vpop.f32.mrf.mxu0
    %v2993 = vadd.f32 %v1649, %v2992
    %v2994 = vpop.f32.mrf.mxu0
    %v2995 = vadd.f32 %v1649, %v2994
    %2996 = vdwg.mxu0
    %v2997 = vsel %vm1713, %v2968, -inf
    %2998 = vmax.xlane.f32.xlu0 %v2997
    %v2999 = vpop.xlane.xlu0 %2998
    %v3000 = vsel %vm1713, %v2970, -inf
    %3001 = vmax.xlane.f32.xlu0 %v3000
    %v3002 = vpop.xlane.xlu0 %3001
    %v3003 = vsel %vm1713, %v2973, -inf
    %3004 = vmax.xlane.f32.xlu0 %v3003
    %v3005 = vpop.xlane.xlu0 %3004
    %v3006 = vsel %vm1713, %v2975, -inf
    %3007 = vmax.xlane.f32.xlu0 %v3006
    %v3008 = vpop.xlane.xlu0 %3007
    %v3009 = vsel %vm1713, %v2978, -inf
    %3010 = vmax.xlane.f32.xlu0 %v3009
    %v3011 = vpop.xlane.xlu0 %3010
    %v3012 = vsel %vm1713, %v2980, -inf
    %3013 = vmax.xlane.f32.xlu0 %v3012
    %v3014 = vpop.xlane.xlu0 %3013
    %v3015 = vsel %vm1713, %v2983, -inf
    %3016 = vmax.xlane.f32.xlu0 %v3015
    %v3017 = vpop.xlane.xlu0 %3016
    %v3018 = vsel %vm1713, %v2985, -inf
    %3019 = vmax.xlane.f32.xlu0 %v3018
    %v3020 = vpop.xlane.xlu0 %3019
    %v3021 = vsel %vm1713, %v2988, -inf
    %3022 = vmax.xlane.f32.xlu0 %v3021
    %v3023 = vpop.xlane.xlu0 %3022
    %v3024 = vsel %vm1713, %v2990, -inf
    %3025 = vmax.xlane.f32.xlu0 %v3024
    %v3026 = vpop.xlane.xlu0 %3025
    %v3027 = vsel %vm1713, %v2993, -inf
    %3028 = vmax.xlane.f32.xlu0 %v3027
    %v3029 = vpop.xlane.xlu0 %3028
    %v3030 = vsel %vm1713, %v2995, -inf
    %3031 = vmax.xlane.f32.xlu0 %v3030
    %v3032 = vpop.xlane.xlu0 %3031
    %v3033 = vsub.f32 %v2968, %v2999
    %v3034 = vsub.f32 %v2970, %v3002
    %v3035 = vsub.f32 %v2973, %v3005
    %v3036 = vsub.f32 %v2975, %v3008
    %v3037 = vsub.f32 %v2978, %v3011
    %v3038 = vsub.f32 %v2980, %v3014
    %v3039 = vsub.f32 %v2983, %v3017
    %v3040 = vsub.f32 %v2985, %v3020
    %v3041 = vsub.f32 %v2988, %v3023
    %v3042 = vsub.f32 %v2990, %v3026
    %v3043 = vsub.f32 %v2993, %v3029
    %v3044 = vsub.f32 %v2995, %v3032
    %v3045 = vmul.f32 %v3033, 1.442695
    %v3046 = vpow.pop %v3045
    %v3047 = vmul.f32 %v3034, 1.442695
    %v3048 = vpow.pop %v3047
    %v3049 = vmul.f32 %v3035, 1.442695
    %v3050 = vpow.pop %v3049
    %v3051 = vmul.f32 %v3036, 1.442695
    %v3052 = vpow.pop %v3051
    %v3053 = vmul.f32 %v3037, 1.442695
    %v3054 = vpow.pop %v3053
    %v3055 = vmul.f32 %v3038, 1.442695
    %v3056 = vpow.pop %v3055
    %v3057 = vmul.f32 %v3039, 1.442695
    %v3058 = vpow.pop %v3057
    %v3059 = vmul.f32 %v3040, 1.442695
    %v3060 = vpow.pop %v3059
    %v3061 = vmul.f32 %v3041, 1.442695
    %v3062 = vpow.pop %v3061
    %v3063 = vmul.f32 %v3042, 1.442695
    %v3064 = vpow.pop %v3063
    %v3065 = vmul.f32 %v3043, 1.442695
    %v3066 = vpow.pop %v3065
    %v3067 = vmul.f32 %v3044, 1.442695
    %v3068 = vpow.pop %v3067
    %v3069 = vsel %vm1713, %v3046, 0.0
    %3070 = vadd.xlane.f32.xlu0 %v3069
    %v3071 = vpop.xlane.xlu0 %3070
    %v3072 = vsel %vm1713, %v3048, 0.0
    %3073 = vadd.xlane.f32.xlu0 %v3072
    %v3074 = vpop.xlane.xlu0 %3073
    %v3075 = vsel %vm1713, %v3050, 0.0
    %3076 = vadd.xlane.f32.xlu0 %v3075
    %v3077 = vpop.xlane.xlu0 %3076
    %v3078 = vsel %vm1713, %v3052, 0.0
    %3079 = vadd.xlane.f32.xlu0 %v3078
    %v3080 = vpop.xlane.xlu0 %3079
    %v3081 = vsel %vm1713, %v3054, 0.0
    %3082 = vadd.xlane.f32.xlu0 %v3081
    %v3083 = vpop.xlane.xlu0 %3082
    %v3084 = vsel %vm1713, %v3056, 0.0
    %3085 = vadd.xlane.f32.xlu0 %v3084
    %v3086 = vpop.xlane.xlu0 %3085
    %v3087 = vsel %vm1713, %v3058, 0.0
    %3088 = vadd.xlane.f32.xlu0 %v3087
    %v3089 = vpop.xlane.xlu0 %3088
    %v3090 = vsel %vm1713, %v3060, 0.0
    %3091 = vadd.xlane.f32.xlu0 %v3090
    %v3092 = vpop.xlane.xlu0 %3091
    %v3093 = vsel %vm1713, %v3062, 0.0
    %3094 = vadd.xlane.f32.xlu0 %v3093
    %v3095 = vpop.xlane.xlu0 %3094
    %v3096 = vsel %vm1713, %v3064, 0.0
    %3097 = vadd.xlane.f32.xlu0 %v3096
    %v3098 = vpop.xlane.xlu0 %3097
    %v3099 = vsel %vm1713, %v3066, 0.0
    %3100 = vadd.xlane.f32.xlu0 %v3099
    %v3101 = vpop.xlane.xlu0 %3100
    %v3102 = vsel %vm1713, %v3068, 0.0
    %3103 = vadd.xlane.f32.xlu0 %v3102
    %v3104 = vpop.xlane.xlu0 %3103
    %v3105 = vrcp.pop %v3071
    %v3106 = vrcp.pop %v3074
    %v3107 = vrcp.pop %v3077
    %v3108 = vrcp.pop %v3080
    %v3109 = vrcp.pop %v3083
    %v3110 = vrcp.pop %v3086
    %v3111 = vrcp.pop %v3089
    %v3112 = vrcp.pop %v3092
    %v3113 = vrcp.pop %v3095
    %v3114 = vrcp.pop %v3098
    %v3115 = vrcp.pop %v3101
    %v3116 = vrcp.pop %v3104
    %v3117 = vmul.f32 %v3046, %v3105
    %v3118 = vmul.f32 %v3048, %v3106
    %v3119 = vmul.f32 %v3050, %v3107
    %v3120 = vmul.f32 %v3052, %v3108
    %v3121 = vmul.f32 %v3054, %v3109
    %v3122 = vmul.f32 %v3056, %v3110
    %v3123 = vmul.f32 %v3058, %v3111
    %v3124 = vmul.f32 %v3060, %v3112
    %v3125 = vmul.f32 %v3062, %v3113
    %v3126 = vmul.f32 %v3064, %v3114
    %v3127 = vmul.f32 %v3066, %v3115
    %v3128 = vmul.f32 %v3068, %v3116
    %v3129 = vpack.c.bf16 %v3118, %v3117
    %v3130 = vpack.c.bf16 %v3120, %v3119
    %v3131 = vpack.c.bf16 %v3122, %v3121
    %v3132 = vpack.c.bf16 %v3124, %v3123
    %v3133 = vpack.c.bf16 %v3126, %v3125
    %v3134 = vpack.c.bf16 %v3128, %v3127
    %v3136 = vsel %vm1713, %v3129, 0
    %v3139 = vsel %vm1713, %v3130, 0
    %v3142 = vsel %vm1713, %v3131, 0
    %v3145 = vsel %vm1713, %v3132, 0
    %v3148 = vsel %vm1713, %v3133, 0
    %v3151 = vsel %vm1713, %v3134, 0
    %v3154 = vsel %vm646, %v2915, 0
    %3156 = vmatpush.bf16.msra.mxu0 0
    %3157 = vmatpush.bf16.msra.mxu0 0
    %3158 = vmatpush.bf16.msra.mxu0 0
    %3159 = vmatpush.bf16.msra.mxu0 0
    %3160 = vmatpush.bf16.msra.mxu0 0
    %3161 = vmatpush.bf16.msra.mxu0 0
    %3162 = vmatpush.bf16.msra.mxu0 %v3154
    %3163 = vmatpush.bf16.msra.mxu0 %v2914
    %3164 = vmatmul.bf16.gmra.mxu0 %v3136
    %v3165 = vpop.f32.mrf.mxu0
    %v3166 = vadd.f32 0.0, %v3165
    %v3167 = vpop.f32.mrf.mxu0
    %v3168 = vadd.f32 0.0, %v3167
    %3169 = vmatmul.bf16.gmra.mxu0 %v3139
    %v3170 = vpop.f32.mrf.mxu0
    %v3171 = vadd.f32 0.0, %v3170
    %v3172 = vpop.f32.mrf.mxu0
    %v3173 = vadd.f32 0.0, %v3172
    %3174 = vmatmul.bf16.gmra.mxu0 %v3142
    %v3175 = vpop.f32.mrf.mxu0
    %v3176 = vadd.f32 0.0, %v3175
    %v3177 = vpop.f32.mrf.mxu0
    %v3178 = vadd.f32 0.0, %v3177
    %3179 = vmatmul.bf16.gmra.mxu0 %v3145
    %v3180 = vpop.f32.mrf.mxu0
    %v3181 = vadd.f32 0.0, %v3180
    %v3182 = vpop.f32.mrf.mxu0
    %v3183 = vadd.f32 0.0, %v3182
    %3184 = vmatmul.bf16.gmra.mxu0 %v3148
    %v3185 = vpop.f32.mrf.mxu0
    %v3186 = vadd.f32 0.0, %v3185
    %v3187 = vpop.f32.mrf.mxu0
    %v3188 = vadd.f32 0.0, %v3187
    %3189 = vmatmul.bf16.gmra.mxu0 %v3151
    %v3190 = vpop.f32.mrf.mxu0
    %v3191 = vadd.f32 0.0, %v3190
    %v3192 = vpop.f32.mrf.mxu0
    %v3193 = vadd.f32 0.0, %v3192
    %3194 = vdwg.mxu0
    %v3195 = vmul.f32 %v3166, %v1627
    %v3196 = vmul.f32 %v3168, %v1627
    %v3197 = vmul.f32 %v3171, %v1627
    %v3198 = vmul.f32 %v3173, %v1631
    %v3199 = vmul.f32 %v3176, %v1631
    %v3200 = vmul.f32 %v3178, %v1631
    %v3201 = vadd.f32 %v3195, %v3198
    %v3202 = vadd.f32 %v3196, %v3199
    %v3203 = vadd.f32 %v3197, %v3200
    %v3204 = vmul.f32 %v3181, %v1635
    %v3205 = vmul.f32 %v3183, %v1635
    %v3206 = vmul.f32 %v3186, %v1635
    %v3207 = vadd.f32 %v3201, %v3204
    %v3208 = vadd.f32 %v3202, %v3205
    %v3209 = vadd.f32 %v3203, %v3206
    %v3210 = vmul.f32 %v3188, %v1639
    %v3211 = vmul.f32 %v3191, %v1639
    %v3212 = vmul.f32 %v3193, %v1639
    %v3213 = vadd.f32 %v3207, %v3210
    %v3214 = vadd.f32 %v3208, %v3211
    %v3215 = vadd.f32 %v3209, %v3212
    %v3216 = vpack.c.bf16 %v2866, %v2863
    %v3217 = vpack.c.bf16 %v2868, %v2868
    %v3218 = vpack.c.bf16 %v2908, %v2905
    %v3219 = vpack.c.bf16 %v2910, %v2910
    %v3220 = vmul.f32 %v2821, %v1627
    %v3221 = vmul.f32 %v2824, %v1627
    %v3222 = vmul.f32 %v2826, %v1627
    %v3223 = vmul.f32 %v2821, %v1631
    %v3224 = vmul.f32 %v2824, %v1631
    %v3225 = vmul.f32 %v2826, %v1631
    %v3226 = vmul.f32 %v2821, %v1635
    %v3227 = vmul.f32 %v2824, %v1635
    %v3228 = vmul.f32 %v2826, %v1635
    %v3229 = vmul.f32 %v2821, %v1639
    %v3230 = vmul.f32 %v2824, %v1639
    %v3231 = vmul.f32 %v2826, %v1639
    %v3232 = vpack.c.bf16 %v3221, %v3220
    %v3233 = vpack.c.bf16 %v3223, %v3222
    %v3234 = vpack.c.bf16 %v3225, %v3224
    %v3235 = vpack.c.bf16 %v3227, %v3226
    %v3236 = vpack.c.bf16 %v3229, %v3228
    %v3237 = vpack.c.bf16 %v3231, %v3230
    %v3239 = vsel %vm1458, %v3232, 0
    %v3242 = vsel %vm1458, %v3233, 0
    %v3245 = vsel %vm1458, %v3234, 0
    %v3248 = vsel %vm1458, %v3235, 0
    %v3251 = vsel %vm1458, %v3236, 0
    %v3254 = vsel %vm1458, %v3237, 0
    %v3257 = vsel %vm1458, %v3216, 0
    %v3260 = vsel %vm1458, %v3217, 0
    %3262 = vmatpush.bf16.xpose.msra.mxu0 0
    %3263 = vmatpush.bf16.xpose.msra.mxu0 0
    %3264 = vmatpush.bf16.xpose.msra.mxu0 0
    %3265 = vmatpush.bf16.xpose.msra.mxu0 0
    %3266 = vmatpush.bf16.xpose.msra.mxu0 0
    %3267 = vmatpush.bf16.xpose.msra.mxu0 0
    %3268 = vmatpush.bf16.xpose.msra.mxu0 %v3260
    %3269 = vmatpush.bf16.xpose.msra.mxu0 %v3257
    %3270 = vmatmul.bf16.gmra.mxu0 %v3239
    %v3271 = vpop.f32.mrf.mxu0
    %v3272 = vadd.f32 %v1955, %v3271
    %v3273 = vpop.f32.mrf.mxu0
    %v3274 = vadd.f32 %v1955, %v3273
    %3275 = vmatmul.bf16.gmra.mxu0 %v3242
    %v3276 = vpop.f32.mrf.mxu0
    %v3277 = vadd.f32 %v1955, %v3276
    %v3278 = vpop.f32.mrf.mxu0
    %v3279 = vadd.f32 %v1955, %v3278
    %3280 = vmatmul.bf16.gmra.mxu0 %v3245
    %v3281 = vpop.f32.mrf.mxu0
    %v3282 = vadd.f32 %v1955, %v3281
    %v3283 = vpop.f32.mrf.mxu0
    %v3284 = vadd.f32 %v1955, %v3283
    %3285 = vmatmul.bf16.gmra.mxu0 %v3248
    %v3286 = vpop.f32.mrf.mxu0
    %v3287 = vadd.f32 %v1955, %v3286
    %v3288 = vpop.f32.mrf.mxu0
    %v3289 = vadd.f32 %v1955, %v3288
    %3290 = vmatmul.bf16.gmra.mxu0 %v3251
    %v3291 = vpop.f32.mrf.mxu0
    %v3292 = vadd.f32 %v1955, %v3291
    %v3293 = vpop.f32.mrf.mxu0
    %v3294 = vadd.f32 %v1955, %v3293
    %3295 = vmatmul.bf16.gmra.mxu0 %v3254
    %v3296 = vpop.f32.mrf.mxu0
    %v3297 = vadd.f32 %v1955, %v3296
    %v3298 = vpop.f32.mrf.mxu0
    %v3299 = vadd.f32 %v1955, %v3298
    %3300 = vdwg.mxu0
    %v3301 = vsel %vm1713, %v3272, -inf
    %3302 = vmax.xlane.f32.xlu0 %v3301
    %v3303 = vpop.xlane.xlu0 %3302
    %v3304 = vsel %vm1713, %v3274, -inf
    %3305 = vmax.xlane.f32.xlu0 %v3304
    %v3306 = vpop.xlane.xlu0 %3305
    %v3307 = vsel %vm1713, %v3277, -inf
    %3308 = vmax.xlane.f32.xlu0 %v3307
    %v3309 = vpop.xlane.xlu0 %3308
    %v3310 = vsel %vm1713, %v3279, -inf
    %3311 = vmax.xlane.f32.xlu0 %v3310
    %v3312 = vpop.xlane.xlu0 %3311
    %v3313 = vsel %vm1713, %v3282, -inf
    %3314 = vmax.xlane.f32.xlu0 %v3313
    %v3315 = vpop.xlane.xlu0 %3314
    %v3316 = vsel %vm1713, %v3284, -inf
    %3317 = vmax.xlane.f32.xlu0 %v3316
    %v3318 = vpop.xlane.xlu0 %3317
    %v3319 = vsel %vm1713, %v3287, -inf
    %3320 = vmax.xlane.f32.xlu0 %v3319
    %v3321 = vpop.xlane.xlu0 %3320
    %v3322 = vsel %vm1713, %v3289, -inf
    %3323 = vmax.xlane.f32.xlu0 %v3322
    %v3324 = vpop.xlane.xlu0 %3323
    %v3325 = vsel %vm1713, %v3292, -inf
    %3326 = vmax.xlane.f32.xlu0 %v3325
    %v3327 = vpop.xlane.xlu0 %3326
    %v3328 = vsel %vm1713, %v3294, -inf
    %3329 = vmax.xlane.f32.xlu0 %v3328
    %v3330 = vpop.xlane.xlu0 %3329
    %v3331 = vsel %vm1713, %v3297, -inf
    %3332 = vmax.xlane.f32.xlu0 %v3331
    %v3333 = vpop.xlane.xlu0 %3332
    %v3334 = vsel %vm1713, %v3299, -inf
    %3335 = vmax.xlane.f32.xlu0 %v3334
    %v3336 = vpop.xlane.xlu0 %3335
    %v3337 = vsub.f32 %v3272, %v3303
    %v3338 = vsub.f32 %v3274, %v3306
    %v3339 = vsub.f32 %v3277, %v3309
    %v3340 = vsub.f32 %v3279, %v3312
    %v3341 = vsub.f32 %v3282, %v3315
    %v3342 = vsub.f32 %v3284, %v3318
    %v3343 = vsub.f32 %v3287, %v3321
    %v3344 = vsub.f32 %v3289, %v3324
    %v3345 = vsub.f32 %v3292, %v3327
    %v3346 = vsub.f32 %v3294, %v3330
    %v3347 = vsub.f32 %v3297, %v3333
    %v3348 = vsub.f32 %v3299, %v3336
    %v3349 = vmul.f32 %v3337, 1.442695
    %v3350 = vpow.pop %v3349
    %v3351 = vmul.f32 %v3338, 1.442695
    %v3352 = vpow.pop %v3351
    %v3353 = vmul.f32 %v3339, 1.442695
    %v3354 = vpow.pop %v3353
    %v3355 = vmul.f32 %v3340, 1.442695
    %v3356 = vpow.pop %v3355
    %v3357 = vmul.f32 %v3341, 1.442695
    %v3358 = vpow.pop %v3357
    %v3359 = vmul.f32 %v3342, 1.442695
    %v3360 = vpow.pop %v3359
    %v3361 = vmul.f32 %v3343, 1.442695
    %v3362 = vpow.pop %v3361
    %v3363 = vmul.f32 %v3344, 1.442695
    %v3364 = vpow.pop %v3363
    %v3365 = vmul.f32 %v3345, 1.442695
    %v3366 = vpow.pop %v3365
    %v3367 = vmul.f32 %v3346, 1.442695
    %v3368 = vpow.pop %v3367
    %v3369 = vmul.f32 %v3347, 1.442695
    %v3370 = vpow.pop %v3369
    %v3371 = vmul.f32 %v3348, 1.442695
    %v3372 = vpow.pop %v3371
    %v3373 = vsel %vm1713, %v3350, 0.0
    %3374 = vadd.xlane.f32.xlu0 %v3373
    %v3375 = vpop.xlane.xlu0 %3374
    %v3376 = vsel %vm1713, %v3352, 0.0
    %3377 = vadd.xlane.f32.xlu0 %v3376
    %v3378 = vpop.xlane.xlu0 %3377
    %v3379 = vsel %vm1713, %v3354, 0.0
    %3380 = vadd.xlane.f32.xlu0 %v3379
    %v3381 = vpop.xlane.xlu0 %3380
    %v3382 = vsel %vm1713, %v3356, 0.0
    %3383 = vadd.xlane.f32.xlu0 %v3382
    %v3384 = vpop.xlane.xlu0 %3383
    %v3385 = vsel %vm1713, %v3358, 0.0
    %3386 = vadd.xlane.f32.xlu0 %v3385
    %v3387 = vpop.xlane.xlu0 %3386
    %v3388 = vsel %vm1713, %v3360, 0.0
    %3389 = vadd.xlane.f32.xlu0 %v3388
    %v3390 = vpop.xlane.xlu0 %3389
    %v3391 = vsel %vm1713, %v3362, 0.0
    %3392 = vadd.xlane.f32.xlu0 %v3391
    %v3393 = vpop.xlane.xlu0 %3392
    %v3394 = vsel %vm1713, %v3364, 0.0
    %3395 = vadd.xlane.f32.xlu0 %v3394
    %v3396 = vpop.xlane.xlu0 %3395
    %v3397 = vsel %vm1713, %v3366, 0.0
    %3398 = vadd.xlane.f32.xlu0 %v3397
    %v3399 = vpop.xlane.xlu0 %3398
    %v3400 = vsel %vm1713, %v3368, 0.0
    %3401 = vadd.xlane.f32.xlu0 %v3400
    %v3402 = vpop.xlane.xlu0 %3401
    %v3403 = vsel %vm1713, %v3370, 0.0
    %3404 = vadd.xlane.f32.xlu0 %v3403
    %v3405 = vpop.xlane.xlu0 %3404
    %v3406 = vsel %vm1713, %v3372, 0.0
    %3407 = vadd.xlane.f32.xlu0 %v3406
    %v3408 = vpop.xlane.xlu0 %3407
    %v3409 = vrcp.pop %v3375
    %v3410 = vrcp.pop %v3378
    %v3411 = vrcp.pop %v3381
    %v3412 = vrcp.pop %v3384
    %v3413 = vrcp.pop %v3387
    %v3414 = vrcp.pop %v3390
    %v3415 = vrcp.pop %v3393
    %v3416 = vrcp.pop %v3396
    %v3417 = vrcp.pop %v3399
    %v3418 = vrcp.pop %v3402
    %v3419 = vrcp.pop %v3405
    %v3420 = vrcp.pop %v3408
    %v3421 = vmul.f32 %v3350, %v3409
    %v3422 = vmul.f32 %v3352, %v3410
    %v3423 = vmul.f32 %v3354, %v3411
    %v3424 = vmul.f32 %v3356, %v3412
    %v3425 = vmul.f32 %v3358, %v3413
    %v3426 = vmul.f32 %v3360, %v3414
    %v3427 = vmul.f32 %v3362, %v3415
    %v3428 = vmul.f32 %v3364, %v3416
    %v3429 = vmul.f32 %v3366, %v3417
    %v3430 = vmul.f32 %v3368, %v3418
    %v3431 = vmul.f32 %v3370, %v3419
    %v3432 = vmul.f32 %v3372, %v3420
    %v3433 = vpack.c.bf16 %v3422, %v3421
    %v3434 = vpack.c.bf16 %v3424, %v3423
    %v3435 = vpack.c.bf16 %v3426, %v3425
    %v3436 = vpack.c.bf16 %v3428, %v3427
    %v3437 = vpack.c.bf16 %v3430, %v3429
    %v3438 = vpack.c.bf16 %v3432, %v3431
    %v3440 = vsel %vm1713, %v3433, 0
    %v3443 = vsel %vm1713, %v3434, 0
    %v3446 = vsel %vm1713, %v3435, 0
    %v3449 = vsel %vm1713, %v3436, 0
    %v3452 = vsel %vm1713, %v3437, 0
    %v3455 = vsel %vm1713, %v3438, 0
    %v3458 = vsel %vm646, %v3219, 0
    %3460 = vmatpush.bf16.msra.mxu0 0
    %3461 = vmatpush.bf16.msra.mxu0 0
    %3462 = vmatpush.bf16.msra.mxu0 0
    %3463 = vmatpush.bf16.msra.mxu0 0
    %3464 = vmatpush.bf16.msra.mxu0 0
    %3465 = vmatpush.bf16.msra.mxu0 0
    %3466 = vmatpush.bf16.msra.mxu0 %v3458
    %3467 = vmatpush.bf16.msra.mxu0 %v3218
    %3468 = vmatmul.bf16.gmra.mxu0 %v3440
    %v3469 = vpop.f32.mrf.mxu0
    %v3470 = vadd.f32 0.0, %v3469
    %v3471 = vpop.f32.mrf.mxu0
    %v3472 = vadd.f32 0.0, %v3471
    %3473 = vmatmul.bf16.gmra.mxu0 %v3443
    %v3474 = vpop.f32.mrf.mxu0
    %v3475 = vadd.f32 0.0, %v3474
    %v3476 = vpop.f32.mrf.mxu0
    %v3477 = vadd.f32 0.0, %v3476
    %3478 = vmatmul.bf16.gmra.mxu0 %v3446
    %v3479 = vpop.f32.mrf.mxu0
    %v3480 = vadd.f32 0.0, %v3479
    %v3481 = vpop.f32.mrf.mxu0
    %v3482 = vadd.f32 0.0, %v3481
    %3483 = vmatmul.bf16.gmra.mxu0 %v3449
    %v3484 = vpop.f32.mrf.mxu0
    %v3485 = vadd.f32 0.0, %v3484
    %v3486 = vpop.f32.mrf.mxu0
    %v3487 = vadd.f32 0.0, %v3486
    %3488 = vmatmul.bf16.gmra.mxu0 %v3452
    %v3489 = vpop.f32.mrf.mxu0
    %v3490 = vadd.f32 0.0, %v3489
    %v3491 = vpop.f32.mrf.mxu0
    %v3492 = vadd.f32 0.0, %v3491
    %3493 = vmatmul.bf16.gmra.mxu0 %v3455
    %v3494 = vpop.f32.mrf.mxu0
    %v3495 = vadd.f32 0.0, %v3494
    %v3496 = vpop.f32.mrf.mxu0
    %v3497 = vadd.f32 0.0, %v3496
    %3498 = vdwg.mxu0
    %v3499 = vmul.f32 %v3470, %v1627
    %v3500 = vmul.f32 %v3472, %v1627
    %v3501 = vmul.f32 %v3475, %v1627
    %v3502 = vmul.f32 %v3477, %v1631
    %v3503 = vmul.f32 %v3480, %v1631
    %v3504 = vmul.f32 %v3482, %v1631
    %v3505 = vadd.f32 %v3499, %v3502
    %v3506 = vadd.f32 %v3500, %v3503
    %v3507 = vadd.f32 %v3501, %v3504
    %v3508 = vmul.f32 %v3485, %v1635
    %v3509 = vmul.f32 %v3487, %v1635
    %v3510 = vmul.f32 %v3490, %v1635
    %v3511 = vadd.f32 %v3505, %v3508
    %v3512 = vadd.f32 %v3506, %v3509
    %v3513 = vadd.f32 %v3507, %v3510
    %v3514 = vmul.f32 %v3492, %v1639
    %v3515 = vmul.f32 %v3495, %v1639
    %v3516 = vmul.f32 %v3497, %v1639
    %v3517 = vadd.f32 %v3511, %v3514
    %v3518 = vadd.f32 %v3512, %v3515
    %v3519 = vadd.f32 %v3513, %v3516
    %v3520 = vpack.c.bf16 %v3214, %v3213
    %v3521 = vpack.c.bf16 %v3517, %v3215
    %v3522 = vpack.c.bf16 %v3519, %v3518
    %v3523 = vld [vmem:[%s1 + $0xc0] sm:$0xf]
    %v3524 = vld [vmem:[%s1 + $0xc4] sm:$0xf]
    %v3525 = vld [vmem:[%s1 + $0xc8] sm:$0xf]
    %v3526 = vld [vmem:[%s1 + $0xcc] sm:$0xf]
    %v3527 = vld [vmem:[%s2 + $0x14] sm:$0x1]
    %v3528 = vperm.slane %v3527, 0
    %v3533 = vunpack.c.l.b16 %v3523
    %v3534 = vunpack.c.l.b16 %v3524
    %v3535 = vunpack.c.l.b16 %v3525
    %v3536 = vunpack.c.l.b16 %v3526
    %v3537 = vpack.c.b16 %v3534, %v3533
    %v3538 = vpack.c.b16 %v3536, %v3535
    %v3542 = vsel %vm1458, %v3520, 0
    %v3545 = vsel %vm1458, %v3521, 0
    %v3548 = vsel %vm1458, %v3522, 0
    %3550 = vmatpush.bf16.msra.mxu0 0
    %3551 = vmatpush.bf16.msra.mxu0 0
    %3552 = vmatpush.bf16.msra.mxu0 0
    %3553 = vmatpush.bf16.msra.mxu0 0
    %3554 = vmatpush.bf16.msra.mxu0 0
    %3555 = vmatpush.bf16.msra.mxu0 0
    %3556 = vmatpush.bf16.msra.mxu0 %v3538
    %3557 = vmatpush.bf16.msra.mxu0 %v3537
    %3558 = vmatmul.bf16.gmra.mxu0 %v3542
    %v3559 = vpop.f32.mrf.mxu0
    %v3560 = vadd.f32 %v3528, %v3559
    %v3561 = vpop.f32.mrf.mxu0
    %v3562 = vadd.f32 %v3528, %v3561
    %3563 = vmatmul.bf16.gmra.mxu0 %v3545
    %v3564 = vpop.f32.mrf.mxu0
    %v3565 = vadd.f32 %v3528, %v3564
    %v3566 = vpop.f32.mrf.mxu0
    %v3567 = vadd.f32 %v3528, %v3566
    %3568 = vmatmul.bf16.gmra.mxu0 %v3548
    %v3569 = vpop.f32.mrf.mxu0
    %v3570 = vadd.f32 %v3528, %v3569
    %v3571 = vpop.f32.mrf.mxu0
    %v3572 = vadd.f32 %v3528, %v3571
    %3573 = vdwg.mxu0
    %v3574 = vadd.f32 %v2768, %v3560
    %v3575 = vadd.f32 %v2769, %v3562
    %v3576 = vadd.f32 %v2770, %v3565
    %v3577 = vadd.f32 %v2771, %v3567
    %v3578 = vadd.f32 %v2772, %v3570
    %v3579 = vadd.f32 %v2773, %v3572
    %v3580 = vld [vmem:[%s2 + $0x17] sm:$0x1]
    %v3581 = vld [vmem:[%s2 + $0x18] sm:$0x1]
    %v3582 = vsel %vm1458, %v3574, 0.0
    %3583 = vadd.xlane.f32.xlu0 %v3582
    %v3584 = vpop.xlane.xlu0 %3583
    %v3585 = vsel %vm1458, %v3575, 0.0
    %3586 = vadd.xlane.f32.xlu0 %v3585
    %v3587 = vpop.xlane.xlu0 %3586
    %v3588 = vsel %vm1458, %v3576, 0.0
    %3589 = vadd.xlane.f32.xlu0 %v3588
    %v3590 = vpop.xlane.xlu0 %3589
    %v3591 = vsel %vm1458, %v3577, 0.0
    %3592 = vadd.xlane.f32.xlu0 %v3591
    %v3593 = vpop.xlane.xlu0 %3592
    %v3594 = vsel %vm1458, %v3578, 0.0
    %3595 = vadd.xlane.f32.xlu0 %v3594
    %v3596 = vpop.xlane.xlu0 %3595
    %v3597 = vsel %vm1458, %v3579, 0.0
    %3598 = vadd.xlane.f32.xlu0 %v3597
    %v3599 = vpop.xlane.xlu0 %3598
    %v3600 = vmul.f32 %v3584, %v2324
    %v3601 = vmul.f32 %v3587, %v2324
    %v3602 = vmul.f32 %v3590, %v2324
    %v3603 = vmul.f32 %v3593, %v2324
    %v3604 = vmul.f32 %v3596, %v2324
    %v3605 = vmul.f32 %v3599, %v2324
    %v3606 = vmul.f32 %v3574, %v3574
    %v3607 = vmul.f32 %v3575, %v3575
    %v3608 = vmul.f32 %v3576, %v3576
    %v3609 = vmul.f32 %v3577, %v3577
    %v3610 = vmul.f32 %v3578, %v3578
    %v3611 = vmul.f32 %v3579, %v3579
    %v3612 = vsel %vm1458, %v3606, 0.0
    %3613 = vadd.xlane.f32.xlu0 %v3612
    %v3614 = vpop.xlane.xlu0 %3613
    %v3615 = vsel %vm1458, %v3607, 0.0
    %3616 = vadd.xlane.f32.xlu0 %v3615
    %v3617 = vpop.xlane.xlu0 %3616
    %v3618 = vsel %vm1458, %v3608, 0.0
    %3619 = vadd.xlane.f32.xlu0 %v3618
    %v3620 = vpop.xlane.xlu0 %3619
    %v3621 = vsel %vm1458, %v3609, 0.0
    %3622 = vadd.xlane.f32.xlu0 %v3621
    %v3623 = vpop.xlane.xlu0 %3622
    %v3624 = vsel %vm1458, %v3610, 0.0
    %3625 = vadd.xlane.f32.xlu0 %v3624
    %v3626 = vpop.xlane.xlu0 %3625
    %v3627 = vsel %vm1458, %v3611, 0.0
    %3628 = vadd.xlane.f32.xlu0 %v3627
    %v3629 = vpop.xlane.xlu0 %3628
    %v3630 = vmul.f32 %v3614, %v2324
    %v3631 = vmul.f32 %v3617, %v2324
    %v3632 = vmul.f32 %v3620, %v2324
    %v3633 = vmul.f32 %v3623, %v2324
    %v3634 = vmul.f32 %v3626, %v2324
    %v3635 = vmul.f32 %v3629, %v2324
    %v3636 = vmul.f32 %v3600, %v3600
    %v3637 = vmul.f32 %v3601, %v3601
    %v3638 = vmul.f32 %v3602, %v3602
    %v3639 = vmul.f32 %v3603, %v3603
    %v3640 = vmul.f32 %v3604, %v3604
    %v3641 = vmul.f32 %v3605, %v3605
    %v3642 = vsub.f32 %v3630, %v3636
    %v3643 = vsub.f32 %v3631, %v3637
    %v3644 = vsub.f32 %v3632, %v3638
    %v3645 = vsub.f32 %v3633, %v3639
    %v3646 = vsub.f32 %v3634, %v3640
    %v3647 = vsub.f32 %v3635, %v3641
    %v3648 = vmax.f32 %v3642, 0.0
    %v3649 = vmax.f32 %v3643, 0.0
    %v3650 = vmax.f32 %v3644, 0.0
    %v3651 = vmax.f32 %v3645, 0.0
    %v3652 = vmax.f32 %v3646, 0.0
    %v3653 = vmax.f32 %v3647, 0.0
    %v3654 = vsub.f32 %v3574, %v3600
    %v3655 = vsub.f32 %v3575, %v3601
    %v3656 = vsub.f32 %v3576, %v3602
    %v3657 = vsub.f32 %v3577, %v3603
    %v3658 = vsub.f32 %v3578, %v3604
    %v3659 = vsub.f32 %v3579, %v3605
    %v3660 = vadd.f32 %v3648, 1e-05
    %v3661 = vadd.f32 %v3649, 1e-05
    %v3662 = vadd.f32 %v3650, 1e-05
    %v3663 = vadd.f32 %v3651, 1e-05
    %v3664 = vadd.f32 %v3652, 1e-05
    %v3665 = vadd.f32 %v3653, 1e-05
    %v3666 = vrsqrt.pop %v3660
    %v3667 = vmul.f32 %v3666, %v3660
    %v3668 = vmul.f32 %v3667, %v3666
    %v3669 = vmul.f32 0.5, %v3668
    %v3670 = vsub.f32 1.5, %v3669
    %v3671 = vmul.f32 %v3666, %v3670
    %vm3672 = vweird.f32 %v3660
    %vm3673 = vweird.f32 %v3666
    %vm3674 = vmor %vm3672, %vm3673
    %v3675 = vsel %vm3674, %v3666, %v3671
    %v3676 = vrsqrt.pop %v3661
    %v3677 = vmul.f32 %v3676, %v3661
    %v3678 = vmul.f32 %v3677, %v3676
    %v3679 = vmul.f32 0.5, %v3678
    %v3680 = vsub.f32 1.5, %v3679
    %v3681 = vmul.f32 %v3676, %v3680
    %vm3682 = vweird.f32 %v3661
    %vm3683 = vweird.f32 %v3676
    %vm3684 = vmor %vm3682, %vm3683
    %v3685 = vsel %vm3684, %v3676, %v3681
    %v3686 = vrsqrt.pop %v3662
    %v3687 = vmul.f32 %v3686, %v3662
    %v3688 = vmul.f32 %v3687, %v3686
    %v3689 = vmul.f32 0.5, %v3688
    %v3690 = vsub.f32 1.5, %v3689
    %v3691 = vmul.f32 %v3686, %v3690
    %vm3692 = vweird.f32 %v3662
    %vm3693 = vweird.f32 %v3686
    %vm3694 = vmor %vm3692, %vm3693
    %v3695 = vsel %vm3694, %v3686, %v3691
    %v3696 = vrsqrt.pop %v3663
    %v3697 = vmul.f32 %v3696, %v3663
    %v3698 = vmul.f32 %v3697, %v3696
    %v3699 = vmul.f32 0.5, %v3698
    %v3700 = vsub.f32 1.5, %v3699
    %v3701 = vmul.f32 %v3696, %v3700
    %vm3702 = vweird.f32 %v3663
    %vm3703 = vweird.f32 %v3696
    %vm3704 = vmor %vm3702, %vm3703
    %v3705 = vsel %vm3704, %v3696, %v3701
    %v3706 = vrsqrt.pop %v3664
    %v3707 = vmul.f32 %v3706, %v3664
    %v3708 = vmul.f32 %v3707, %v3706
    %v3709 = vmul.f32 0.5, %v3708
    %v3710 = vsub.f32 1.5, %v3709
    %v3711 = vmul.f32 %v3706, %v3710
    %vm3712 = vweird.f32 %v3664
    %vm3713 = vweird.f32 %v3706
    %vm3714 = vmor %vm3712, %vm3713
    %v3715 = vsel %vm3714, %v3706, %v3711
    %v3716 = vrsqrt.pop %v3665
    %v3717 = vmul.f32 %v3716, %v3665
    %v3718 = vmul.f32 %v3717, %v3716
    %v3719 = vmul.f32 0.5, %v3718
    %v3720 = vsub.f32 1.5, %v3719
    %v3721 = vmul.f32 %v3716, %v3720
    %vm3722 = vweird.f32 %v3665
    %vm3723 = vweird.f32 %v3716
    %vm3724 = vmor %vm3722, %vm3723
    %v3725 = vsel %vm3724, %v3716, %v3721
    %v3726 = vmul.f32 %v3654, %v3675
    %v3727 = vmul.f32 %v3655, %v3685
    %v3728 = vmul.f32 %v3656, %v3695
    %v3729 = vmul.f32 %v3657, %v3705
    %v3730 = vmul.f32 %v3658, %v3715
    %v3731 = vmul.f32 %v3659, %v3725
    %v3732 = vperm.slane %v3580, 0
    %v3733 = vmul.f32 %v3726, %v3732
    %v3734 = vmul.f32 %v3727, %v3732
    %v3735 = vmul.f32 %v3728, %v3732
    %v3736 = vmul.f32 %v3729, %v3732
    %v3737 = vmul.f32 %v3730, %v3732
    %v3738 = vmul.f32 %v3731, %v3732
    %v3739 = vperm.slane %v3581, 0
    %v3740 = vadd.f32 %v3733, %v3739
    %v3741 = vadd.f32 %v3734, %v3739
    %v3742 = vadd.f32 %v3735, %v3739
    %v3743 = vadd.f32 %v3736, %v3739
    %v3744 = vadd.f32 %v3737, %v3739
    %v3745 = vadd.f32 %v3738, %v3739
    %v3746 = vpack.c.bf16 %v3741, %v3740
    %v3747 = vpack.c.bf16 %v3743, %v3742
    %v3748 = vpack.c.bf16 %v3745, %v3744
    %v3749 = vld [vmem:[%s1 + $0xd0] sm:$0xf]
    %v3750 = vld [vmem:[%s1 + $0xd4] sm:$0xf]
    %v3751 = vld [vmem:[%s1 + $0xd8] sm:$0xf]
    %v3752 = vld [vmem:[%s1 + $0xdc] sm:$0xf]
    %v3753 = vld [vmem:[%s2 + $0x15] sm:$0x1]
    %v3754 = vperm.slane %v3753, 0
    %v3759 = vunpack.c.l.b16 %v3749
    %v3760 = vunpack.c.l.b16 %v3750
    %v3761 = vunpack.c.l.b16 %v3751
    %v3762 = vunpack.c.l.b16 %v3752
    %v3763 = vpack.c.b16 %v3760, %v3759
    %v3764 = vpack.c.b16 %v3762, %v3761
    %v3768 = vsel %vm1458, %v3746, 0
    %v3771 = vsel %vm1458, %v3747, 0
    %v3774 = vsel %vm1458, %v3748, 0
    %3776 = vmatpush.bf16.msra.mxu0 0
    %3777 = vmatpush.bf16.msra.mxu0 0
    %3778 = vmatpush.bf16.msra.mxu0 0
    %3779 = vmatpush.bf16.msra.mxu0 0
    %3780 = vmatpush.bf16.msra.mxu0 0
    %3781 = vmatpush.bf16.msra.mxu0 0
    %3782 = vmatpush.bf16.msra.mxu0 %v3764
    %3783 = vmatpush.bf16.msra.mxu0 %v3763
    %3784 = vmatmul.bf16.gmra.mxu0 %v3768
    %v3785 = vpop.f32.mrf.mxu0
    %v3786 = vadd.f32 %v3754, %v3785
    %v3787 = vpop.f32.mrf.mxu0
    %v3788 = vadd.f32 %v3754, %v3787
    %3789 = vmatmul.bf16.gmra.mxu0 %v3771
    %v3790 = vpop.f32.mrf.mxu0
    %v3791 = vadd.f32 %v3754, %v3790
    %v3792 = vpop.f32.mrf.mxu0
    %v3793 = vadd.f32 %v3754, %v3792
    %3794 = vmatmul.bf16.gmra.mxu0 %v3774
    %v3795 = vpop.f32.mrf.mxu0
    %v3796 = vadd.f32 %v3754, %v3795
    %v3797 = vpop.f32.mrf.mxu0
    %v3798 = vadd.f32 %v3754, %v3797
    %3799 = vdwg.mxu0
    %v3800 = vmax.f32 %v3786, 0.0
    %v3801 = vmax.f32 %v3788, 0.0
    %v3802 = vmax.f32 %v3791, 0.0
    %v3803 = vmax.f32 %v3793, 0.0
    %v3804 = vmax.f32 %v3796, 0.0
    %v3805 = vmax.f32 %v3798, 0.0
    %v3806 = vpack.c.bf16 %v3801, %v3800
    %v3807 = vpack.c.bf16 %v3803, %v3802
    %v3808 = vpack.c.bf16 %v3805, %v3804
    %v3809 = vld [vmem:[%s1 + $0xe0] sm:$0xf]
    %v3810 = vld [vmem:[%s1 + $0xe4] sm:$0xf]
    %v3811 = vld [vmem:[%s1 + $0xe8] sm:$0xf]
    %v3812 = vld [vmem:[%s1 + $0xec] sm:$0xf]
    %v3813 = vld [vmem:[%s1 + $0xf0] sm:$0xf]
    %v3814 = vld [vmem:[%s1 + $0xf4] sm:$0xf]
    %v3815 = vld [vmem:[%s1 + $0xf8] sm:$0xf]
    %v3816 = vld [vmem:[%s1 + $0xfc] sm:$0xf]
    %v3817 = vld [vmem:[%s2 + $0x16] sm:$0x1]
    %v3818 = vperm.slane %v3817, 0
    %v3827 = vunpack.c.l.b16 %v3809
    %v3828 = vunpack.c.l.b16 %v3810
    %v3829 = vunpack.c.l.b16 %v3811
    %v3830 = vunpack.c.l.b16 %v3812
    %v3831 = vunpack.c.l.b16 %v3813
    %v3832 = vunpack.c.l.b16 %v3814
    %v3833 = vunpack.c.l.b16 %v3815
    %v3834 = vunpack.c.l.b16 %v3816
    %v3835 = vpack.c.b16 %v3828, %v3827
    %v3836 = vpack.c.b16 %v3830, %v3829
    %v3837 = vpack.c.b16 %v3832, %v3831
    %v3838 = vpack.c.b16 %v3834, %v3833
    %v3844 = vsel %vm2568, %v3806, 0
    %v3847 = vsel %vm2568, %v3807, 0
    %v3850 = vsel %vm2568, %v3808, 0
    %3852 = vmatpush.bf16.msra.mxu0 0
    %3853 = vmatpush.bf16.msra.mxu0 0
    %3854 = vmatpush.bf16.msra.mxu0 0
    %3855 = vmatpush.bf16.msra.mxu0 0
    %3856 = vmatpush.bf16.msra.mxu0 %v3838
    %3857 = vmatpush.bf16.msra.mxu0 %v3837
    %3858 = vmatpush.bf16.msra.mxu0 %v3836
    %3859 = vmatpush.bf16.msra.mxu0 %v3835
    %3860 = vmatmul.bf16.gmra.mxu0 %v3844
    %v3861 = vpop.f32.mrf.mxu0
    %v3862 = vadd.f32 %v3818, %v3861
    %v3863 = vpop.f32.mrf.mxu0
    %3864 = vmatmul.bf16.gmra.mxu0 %v3847
    %v3865 = vpop.f32.mrf.mxu0
    %v3866 = vpop.f32.mrf.mxu0
    %v3867 = vadd.f32 %v3818, %v3866
    %3868 = vmatmul.bf16.gmra.mxu0 %v3850
    %v3869 = vpop.f32.mrf.mxu0
    %v3870 = vpop.f32.mrf.mxu0
    %3871 = vdwg.mxu0
    %v3872 = vadd.f32 %v3740, %v3862
    %v3873 = vadd.f32 %v3743, %v3867
    %v3874 = vld [vmem:[%s2 + $0x19] sm:$0x1]
    %v3875 = vld [vmem:[%s2 + $0x1a] sm:$0x1]
    %v3876 = vsel %vm1458, %v3872, 0.0
    %3877 = vadd.xlane.f32.xlu0 %v3876
    %v3878 = vpop.xlane.xlu0 %3877
    %v3879 = vsel %vm1458, %v3873, 0.0
    %3880 = vadd.xlane.f32.xlu0 %v3879
    %v3881 = vpop.xlane.xlu0 %3880
    %v3882 = vmul.f32 %v3878, %v2324
    %v3883 = vmul.f32 %v3881, %v2324
    %v3884 = vmul.f32 %v3872, %v3872
    %v3885 = vmul.f32 %v3873, %v3873
    %v3886 = vsel %vm1458, %v3884, 0.0
    %3887 = vadd.xlane.f32.xlu0 %v3886
    %v3888 = vpop.xlane.xlu0 %3887
    %v3889 = vsel %vm1458, %v3885, 0.0
    %3890 = vadd.xlane.f32.xlu0 %v3889
    %v3891 = vpop.xlane.xlu0 %3890
    %v3892 = vmul.f32 %v3888, %v2324
    %v3893 = vmul.f32 %v3891, %v2324
    %v3894 = vmul.f32 %v3882, %v3882
    %v3895 = vmul.f32 %v3883, %v3883
    %v3896 = vsub.f32 %v3892, %v3894
    %v3897 = vsub.f32 %v3893, %v3895
    %v3898 = vmax.f32 %v3896, 0.0
    %v3899 = vmax.f32 %v3897, 0.0
    %v3900 = vsub.f32 %v3872, %v3882
    %v3901 = vsub.f32 %v3873, %v3883
    %v3902 = vadd.f32 %v3898, 1e-05
    %v3903 = vadd.f32 %v3899, 1e-05
    %v3904 = vrsqrt.pop %v3902
    %v3905 = vmul.f32 %v3904, %v3902
    %v3906 = vmul.f32 %v3905, %v3904
    %v3907 = vmul.f32 0.5, %v3906
    %v3908 = vsub.f32 1.5, %v3907
    %v3909 = vmul.f32 %v3904, %v3908
    %vm3910 = vweird.f32 %v3902
    %vm3911 = vweird.f32 %v3904
    %vm3912 = vmor %vm3910, %vm3911
    %v3913 = vsel %vm3912, %v3904, %v3909
    %v3914 = vrsqrt.pop %v3903
    %v3915 = vmul.f32 %v3914, %v3903
    %v3916 = vmul.f32 %v3915, %v3914
    %v3917 = vmul.f32 0.5, %v3916
    %v3918 = vsub.f32 1.5, %v3917
    %v3919 = vmul.f32 %v3914, %v3918
    %vm3920 = vweird.f32 %v3903
    %vm3921 = vweird.f32 %v3914
    %vm3922 = vmor %vm3920, %vm3921
    %v3923 = vsel %vm3922, %v3914, %v3919
    %v3924 = vmul.f32 %v3900, %v3913
    %v3925 = vmul.f32 %v3901, %v3923
    %v3926 = vperm.slane %v3874, 0
    %v3927 = vmul.f32 %v3924, %v3926
    %v3928 = vmul.f32 %v3925, %v3926
    %v3929 = vperm.slane %v3875, 0
    %v3930 = vadd.f32 %v3927, %v3929
    %v3931 = vadd.f32 %v3928, %v3929
    %3932 = vst.msk [vmem:[#allocation3] sm:$0x1] %vm1466, %v3930
    %3933 = vst.msk [vmem:[#allocation3 + $0x1] sm:$0x1] %vm1466, %v3931
    // Predicated region
    $region14: #{light_curve_transformer_forward.1} parent=1 // pred_check
      _
    $region15: #{light_curve_transformer_forward.1} parent=1 // pred_check_branch
      %3935 = sbr.rel (0) target = $region17
    $region16: #{light_curve_transformer_forward.1} parent=1 // pred_region
      %3937 = vsyncadd [#allocation4], 0
      %s3939 = sshll.u32 [#allocation3], 4
      %s3940 = int_to_ptr.vmem [resolvable:$true] %s3939
      %s3941 = sshll.u32 %s3, 4
      %s3942 = int_to_ptr.hbm [resolvable:$true] %s3941
      %3944 = dma.vmem_to_hbm [thread:$0]  %s3940, 32, %s3942, [#allocation4]
    $region17: #{light_curve_transformer_forward.1} parent=1 // pred_fallthru
      _
    // Predicated region
    $region18: #{light_curve_transformer_forward.1} parent=1 // pred_check
      _
    $region19: #{light_curve_transformer_forward.1} parent=1 // pred_check_branch
      %3946 = sbr.rel (0) target = $region21
    $region20: #{light_curve_transformer_forward.1} parent=1 // pred_region
      %3948 = dma.done [#allocation4], 32
    $region21: #{light_curve_transformer_forward.1} parent=1 // pred_fallthru
      _
    %3949 = vsyncpa [#allocation4], 1

</llo_original>
